<compile_context>
chip_gen: v6e
topology: v6e:2x2x1
jax: 0.10.0
libtpu: 0.0.40
codegen_flags: <defaults>
</compile_context>

<pallas_src>
import math

import jax
import jax.numpy as jnp
from jax.experimental import pallas as pl
from jax.experimental.pallas import tpu as pltpu

# ----------------------------- config (small, BERT-like) -----------------------------
BATCH = 2
SEQ = 8
HIDDEN = 32
NUM_HEADS = 4
HEAD_DIM = HIDDEN // NUM_HEADS
INTERMEDIATE = 64
NUM_LAYERS = 2
VOCAB = 50
OUTPUT_DIM = 16            # TextEncoder(output_dim=...) — small synthetic value
OUT_PAD = 128              # lane-padded projection width (sliced back to OUTPUT_DIM outside)
LN_EPS = 1e-12             # BERT layer-norm eps

# lane-packed per-layer weight block: [wqkv (96) | pad | wo (32) | pad | w1 (64) | pad]
WPACK_W = 3 * 128
WO_OFF = 128
W1_OFF = 256


# ----------------------------- fused Pallas kernel -----------------------------
def _semges_fused_kernel(emb_ref, wpack_ref, w2_ref, projw_ref, vpack_ref, epack_ref, out_ref):
    """One grid step = one full encoder (embedding LN -> NUM_LAYERS layers -> CLS proj)."""
    H, I, HD, NH = HIDDEN, INTERMEDIATE, HEAD_DIM, NUM_HEADS
    scale = 1.0 / math.sqrt(HD)
    gelu_c = math.sqrt(2.0 / math.pi)

    def layernorm(y, g, b):
        mu = jnp.mean(y, axis=-1, keepdims=True)
        d = y - mu
        var = jnp.mean(d * d, axis=-1, keepdims=True)
        return d * jax.lax.rsqrt(var + LN_EPS) * g + b

    # ---- embedding LayerNorm (per-encoder vector params are rows of epack) ----
    evec = epack_ref[...]                                        # (8, 128) f32
    x = layernorm(emb_ref[...], evec[0:1, :H], evec[1:2, :H])    # (B*S, H) f32, lives in vregs

    # ---- transformer layers: static unroll, no scratch round-trips ----
    for l in range(NUM_LAYERS):
        wpack = wpack_ref[l]                                     # (H, 384) bf16
        vec = vpack_ref[l]                                       # (8, 128) f32 bias/LN rows
        bqkv, bo = vec[0:1, :3 * H], vec[1:2, :H]
        b1, b2 = vec[2:3, :I], vec[3:4, :H]
        ln1g, ln1b = vec[4:5, :H], vec[5:6, :H]
        ln2g, ln2b = vec[6:7, :H], vec[7:8, :H]

        xb = x.astype(jnp.bfloat16)
        # fused QKV projection: one (B*S, H) @ (H, 3H) matmul
        qkv = jnp.dot(xb, wpack[:, 0:3 * H], preferred_element_type=jnp.float32) + bqkv

        # multi-head self-attention; output projection folded into the head loop
        wo = wpack[:, WO_OFF:WO_OFF + H]                         # (H, H) bf16
        attn = None
        for h in range(NH):                                      # static unroll, NH = 4
            qh = qkv[:, h * HD:(h + 1) * HD].reshape(BATCH, SEQ, HD)
            kh = qkv[:, H + h * HD:H + (h + 1) * HD].reshape(BATCH, SEQ, HD)
            vh = qkv[:, 2 * H + h * HD:2 * H + (h + 1) * HD].reshape(BATCH, SEQ, HD)
            s = jnp.einsum("bqd,bkd->bqk", qh.astype(jnp.bfloat16), kh.astype(jnp.bfloat16),
                           preferred_element_type=jnp.float32) * scale
            s = s - jnp.max(s, axis=-1, keepdims=True)           # f32 softmax math
            p = jnp.exp(s)
            p = p * pl.reciprocal(jnp.sum(p, axis=-1, keepdims=True), approx=True)
            ch = jnp.einsum("bqk,bkd->bqd", p.astype(jnp.bfloat16), vh.astype(jnp.bfloat16),
                            preferred_element_type=jnp.float32).reshape(BATCH * SEQ, HD)
            contrib = jnp.dot(ch.astype(jnp.bfloat16), wo[h * HD:(h + 1) * HD, :],
                              preferred_element_type=jnp.float32)
            attn = contrib if attn is None else attn + contrib

        x1 = layernorm(x + attn + bo, ln1g, ln1b)

        # feed-forward (tanh-approx GELU in f32) + fused residual LayerNorm
        h1 = jnp.dot(x1.astype(jnp.bfloat16), wpack[:, W1_OFF:W1_OFF + I],
                     preferred_element_type=jnp.float32) + b1
        h1 = 0.5 * h1 * (1.0 + jnp.tanh(gelu_c * (h1 + 0.044715 * h1 * h1 * h1)))
        ff = jnp.dot(h1.astype(jnp.bfloat16), w2_ref[l], preferred_element_type=jnp.float32) + b2
        x = layernorm(x1 + ff, ln2g, ln2b)

    # ---- epilogue: project only the CLS rows, store one lane-dense (8, 128) block ----
    cls_rows = [x[b * SEQ:b * SEQ + 1, :] for b in range(BATCH)]
    cls8 = jnp.concatenate(cls_rows + [jnp.zeros((8 - BATCH, H), jnp.float32)], axis=0)
    feats = jnp.dot(cls8.astype(jnp.bfloat16), projw_ref[...],
                    preferred_element_type=jnp.float32) + evec[2:3, :]
    out_ref[...] = feats.astype(out_ref.dtype)


# ----------------------------- wrapper (single pallas_call, grid=(2,)) -----------------------------
def semges_dis_forward(packed, token_ids):
    """token_ids: (B, S) int32. Returns (body, hand), each (B, 1, OUTPUT_DIM)."""
    B, S = token_ids.shape
    assert (B, S) == (BATCH, SEQ)
    L = NUM_LAYERS

    # token + position embedding gather (plain-JAX glue; no Pallas gather needed)
    emb = jnp.take(packed["tok_emb"], token_ids, axis=1) + packed["pos_emb"][:, None, :, :]
    emb = emb.reshape(2, B * S, HIDDEN).astype(jnp.float32)

    out = pl.pallas_call(
        _semges_fused_kernel,
        out_shape=jax.ShapeDtypeStruct((2, 8, OUT_PAD), jnp.float32),
        grid=(2,),
        in_specs=[
            pl.BlockSpec((None, B * S, HIDDEN), lambda e: (e, 0, 0)),            # emb
            pl.BlockSpec((None, L, HIDDEN, WPACK_W), lambda e: (e, 0, 0, 0)),    # [wqkv|wo|w1]
            pl.BlockSpec((None, L, INTERMEDIATE, HIDDEN), lambda e: (e, 0, 0, 0)),  # w2
            pl.BlockSpec((None, HIDDEN, OUT_PAD), lambda e: (e, 0, 0)),          # proj_w (padded)
            pl.BlockSpec((None, L, 8, OUT_PAD), lambda e: (e, 0, 0, 0)),         # per-layer bias/LN rows
            pl.BlockSpec((None, 8, OUT_PAD), lambda e: (e, 0, 0)),               # per-encoder vec rows
        ],
        out_specs=pl.BlockSpec((None, 8, OUT_PAD), lambda e: (e, 0, 0)),
        compiler_params=pltpu.CompilerParams(dimension_semantics=("parallel",)),
    )(emb, packed["wpack"], packed["w2"], packed["projw"], packed["vpack"], packed["epack"])

    feats = out[:, :B, :OUTPUT_DIM]            # CLS projections: un-pad rows / lanes
    return feats[0][:, None, :], feats[1][:, None, :]      # .unsqueeze(1) for body / hand


# ----------------------------- parameter init + packing (deterministic, synthetic) -----------------------------
def _init_single_encoder(key):
    ks = jax.random.split(key, 18)
    std = 0.02
    L, H, I = NUM_LAYERS, HIDDEN, INTERMEDIATE

    def nrm(k, shape):
        # round to bf16 so the kernel's bf16 MXU operands match the f32 reference weights exactly
        return (std * jax.random.normal(k, shape)).astype(jnp.bfloat16).astype(jnp.float32)

    return {
        "tok_emb": nrm(ks[0], (VOCAB, H)),
        "pos_emb": nrm(ks[1], (SEQ, H)),
        "emb_ln_g": 1.0 + nrm(ks[2], (H,)),
        "emb_ln_b": nrm(ks[3], (H,)),
        "wqkv": nrm(ks[4], (L, H, 3 * H)),
        "bqkv": nrm(ks[5], (L, 3 * H)),
        "wo": nrm(ks[6], (L, H, H)),
        "bo": nrm(ks[7], (L, H)),
        "ln1_g": 1.0 + nrm(ks[8], (L, H)),
        "ln1_b": nrm(ks[9], (L, H)),
        "w1": nrm(ks[10], (L, H, I)),
        "b1": nrm(ks[11], (L, I)),
        "w2": nrm(ks[12], (L, I, H)),
        "b2": nrm(ks[13], (L, H)),
        "ln2_g": 1.0 + nrm(ks[14], (L, H)),
        "ln2_b": nrm(ks[15], (L, H)),
        "proj_w": nrm(ks[16], (H, OUTPUT_DIM)),
        "proj_b": nrm(ks[17], (OUTPUT_DIM,)),
    }


def init_semges_params(key):
    k_body, k_hand = jax.random.split(key)
    body, hand = _init_single_encoder(k_body), _init_single_encoder(k_hand)
    # stack the two encoders on a leading axis -> one "parallel" grid axis, one kernel launch
    return jax.tree_util.tree_map(lambda a, b: jnp.stack([a, b], axis=0), body, hand)


def pack_semges_params(p):
    """DMA consolidation: pack per-layer weights / vectors into a few lane-dense blocks."""
    def pad_lanes(v, width=OUT_PAD):
        pad = [(0, 0)] * (v.ndim - 1) + [(0, width - v.shape[-1])]
        return jnp.pad(v, pad)

    wpack = jnp.concatenate([pad_lanes(p["wqkv"]), pad_lanes(p["wo"]), pad_lanes(p["w1"])],
                            axis=-1).astype(jnp.bfloat16)                        # (2, L, H, 384)
    vpack = jnp.stack([pad_lanes(p["bqkv"]), pad_lanes(p["bo"]), pad_lanes(p["b1"]),
                       pad_lanes(p["b2"]), pad_lanes(p["ln1_g"]), pad_lanes(p["ln1_b"]),
                       pad_lanes(p["ln2_g"]), pad_lanes(p["ln2_b"])], axis=-2)    # (2, L, 8, 128)
    zero_row = jnp.zeros((2, OUT_PAD), jnp.float32)
    epack = jnp.stack([pad_lanes(p["emb_ln_g"]), pad_lanes(p["emb_ln_b"]), pad_lanes(p["proj_b"]),
                       zero_row, zero_row, zero_row, zero_row, zero_row], axis=-2)  # (2, 8, 128)
    return {
        "tok_emb": p["tok_emb"],
        "pos_emb": p["pos_emb"],
        "wpack": wpack,
        "w2": p["w2"].astype(jnp.bfloat16),
        "projw": pad_lanes(p["proj_w"]).astype(jnp.bfloat16),                     # (2, H, 128)
        "vpack": vpack.astype(jnp.float32),
        "epack": epack.astype(jnp.float32),
    }


# ----------------------------- pure-JAX reference (correctness cross-check) -----------------------------
def _reference_forward(params, token_ids):
    B, S = token_ids.shape

    def ln(x, g, b):
        mu = x.mean(-1, keepdims=True)
        var = ((x - mu) ** 2).mean(-1, keepdims=True)
        return (x - mu) / jnp.sqrt(var + LN_EPS) * g + b

    outs = []
    for e in range(2):
        x = jnp.take(params["tok_emb"][e], token_ids, axis=0) + params["pos_emb"][e][None]
        x = x.reshape(B * S, HIDDEN).astype(jnp.float32)
        x = ln(x, params["emb_ln_g"][e], params["emb_ln_b"][e])
        for l in range(NUM_LAYERS):
            qkv = x @ params["wqkv"][e, l] + params["bqkv"][e, l]
            q, k, v = jnp.split(qkv, 3, axis=-1)

            def heads(t):
                return t.reshape(B, S, NUM_HEADS, HEAD_DIM).transpose(0, 2, 1, 3)

            qh, kh, vh = heads(q), heads(k), heads(v)
            s = jnp.einsum("bhqd,bhkd->bhqk", qh, kh) / math.sqrt(HEAD_DIM)
            p = jax.nn.softmax(s, axis=-1)
            ctx = jnp.einsum("bhqk,bhkd->bhqd", p, vh).transpose(0, 2, 1, 3).reshape(B * S, HIDDEN)
            attn = ctx @ params["wo"][e, l] + params["bo"][e, l]
            x = ln(x + attn, params["ln1_g"][e, l], params["ln1_b"][e, l])
            h = x @ params["w1"][e, l] + params["b1"][e, l]
            c = math.sqrt(2.0 / math.pi)
            h = 0.5 * h * (1.0 + jnp.tanh(c * (h + 0.044715 * h * h * h)))
            ff = h @ params["w2"][e, l] + params["b2"][e, l]
            x = ln(x + ff, params["ln2_g"][e, l], params["ln2_b"][e, l])
        cls = x.reshape(B, S, HIDDEN)[:, 0, :]
        feats = cls @ params["proj_w"][e] + params["proj_b"][e]
        outs.append(feats)
    return outs[0][:, None, :], outs[1][:, None, :]


if __name__ == "__main__":
    root = jax.random.PRNGKey(0)
    k_params, k_ids = jax.random.split(root)

    params = init_semges_params(k_params)
    packed = pack_semges_params(params)
    # deterministic synthetic "tokenized text" (stand-in for the HF tokenizer output)
    token_ids = jax.random.randint(k_ids, (BATCH, SEQ), 0, VOCAB, dtype=jnp.int32)

    fwd = jax.jit(semges_dis_forward)
    out_body, out_hand = fwd(packed, token_ids)
    jax.block_until_ready((out_body, out_hand))

    assert out_body.shape == (BATCH, 1, OUTPUT_DIM), out_body.shape
    assert out_hand.shape == (BATCH, 1, OUTPUT_DIM), out_hand.shape
    assert out_body.dtype == jnp.float32 and out_hand.dtype == jnp.float32

    # loose numerical cross-check vs the f32 reference (kernel uses bf16 MXU operands + approx recip)
    ref_body, ref_hand = _reference_forward(params, token_ids)
    err = max(float(jnp.max(jnp.abs(out_body - ref_body))),
              float(jnp.max(jnp.abs(out_hand - ref_hand))))
    assert err < 2e-2, f"mismatch vs reference: {err}"

    print("KERNEL_OK")
</pallas_src>

<mosaic_0001>
module attributes {stable_mosaic.version = 11 : i64} {
  func.func @_semges_fused_kernel(%arg0: i32, %arg1: memref<1x16x32xf32, #tpu.memory_space<vmem>>, %arg2: memref<1x2x32x384xbf16, #tpu.memory_space<vmem>>, %arg3: memref<1x2x64x32xbf16, #tpu.memory_space<vmem>>, %arg4: memref<1x32x128xbf16, #tpu.memory_space<vmem>>, %arg5: memref<1x2x8x128xf32, #tpu.memory_space<vmem>>, %arg6: memref<1x8x128xf32, #tpu.memory_space<vmem>>, %arg7: memref<1x8x128xf32, #tpu.memory_space<vmem>>) attributes {dimension_semantics = [#tpu.dimension_semantics<parallel>], iteration_bounds = array<i64: 2>, scalar_prefetch = 0 : i64, scratch_operands = 0 : i64, tpu.core_type = #tpu.core_type<tc>, window_params = [{transform_indices = @transform_0, window_bounds = array<i64: 1, 16, 32>}, {transform_indices = @transform_1, window_bounds = array<i64: 1, 2, 32, 384>}, {transform_indices = @transform_2, window_bounds = array<i64: 1, 2, 64, 32>}, {transform_indices = @transform_3, window_bounds = array<i64: 1, 32, 128>}, {transform_indices = @transform_4, window_bounds = array<i64: 1, 2, 8, 128>}, {transform_indices = @transform_5, window_bounds = array<i64: 1, 8, 128>}, {transform_indices = @transform_6, window_bounds = array<i64: 1, 8, 128>}]} {
    %c0 = arith.constant 0 : index
    %c0_0 = arith.constant 0 : index
    %c0_1 = arith.constant 0 : index
    %0 = vector.load %arg6[%c0, %c0_0, %c0_1] : memref<1x8x128xf32, #tpu.memory_space<vmem>>, vector<1x8x128xf32>
    %1 = vector.shape_cast %0 : vector<1x8x128xf32> to vector<8x128xf32>
    %c0_2 = arith.constant 0 : index
    %c0_3 = arith.constant 0 : index
    %c0_4 = arith.constant 0 : index
    %2 = vector.load %arg1[%c0_2, %c0_3, %c0_4] : memref<1x16x32xf32, #tpu.memory_space<vmem>>, vector<1x16x32xf32>
    %3 = vector.shape_cast %2 : vector<1x16x32xf32> to vector<16x32xf32>
    %4 = vector.extract_strided_slice %1 {offsets = [0, 0], sizes = [1, 32], strides = [1, 1]} : vector<8x128xf32> to vector<1x32xf32>
    %5 = vector.extract_strided_slice %1 {offsets = [1, 0], sizes = [1, 32], strides = [1, 1]} : vector<8x128xf32> to vector<1x32xf32>
    %cst = arith.constant dense<0.000000e+00> : vector<16xf32>
    %6 = vector.multi_reduction <add>, %3, %cst [1] : vector<16x32xf32> to vector<16xf32>
    %7 = vector.shape_cast %6 : vector<16xf32> to vector<16x1xf32>
    %cst_5 = arith.constant 3.200000e+01 : f32
    %8 = vector.broadcast %cst_5 : f32 to vector<16x1xf32>
    %9 = arith.divf %7, %8 : vector<16x1xf32>
    %10 = vector.broadcast %9 : vector<16x1xf32> to vector<16x32xf32>
    %11 = arith.subf %3, %10 : vector<16x32xf32>
    %12 = arith.mulf %11, %11 : vector<16x32xf32>
    %cst_6 = arith.constant dense<0.000000e+00> : vector<16xf32>
    %13 = vector.multi_reduction <add>, %12, %cst_6 [1] : vector<16x32xf32> to vector<16xf32>
    %14 = vector.shape_cast %13 : vector<16xf32> to vector<16x1xf32>
    %cst_7 = arith.constant 3.200000e+01 : f32
    %15 = vector.broadcast %cst_7 : f32 to vector<16x1xf32>
    %16 = arith.divf %14, %15 : vector<16x1xf32>
    %cst_8 = arith.constant 9.99999996E-13 : f32
    %17 = vector.broadcast %cst_8 : f32 to vector<16x1xf32>
    %18 = arith.addf %16, %17 : vector<16x1xf32>
    %19 = math.rsqrt %18 : vector<16x1xf32>
    %20 = vector.broadcast %19 : vector<16x1xf32> to vector<16x32xf32>
    %21 = arith.mulf %11, %20 : vector<16x32xf32>
    %22 = vector.broadcast %4 : vector<1x32xf32> to vector<16x32xf32>
    %23 = arith.mulf %21, %22 : vector<16x32xf32>
    %24 = vector.broadcast %5 : vector<1x32xf32> to vector<16x32xf32>
    %25 = arith.addf %23, %24 : vector<16x32xf32>
    %c0_9 = arith.constant 0 : index
    %c0_10 = arith.constant 0 : index
    %c0_11 = arith.constant 0 : index
    %c0_12 = arith.constant 0 : index
    %26 = vector.load %arg2[%c0_9, %c0_10, %c0_11, %c0_12] : memref<1x2x32x384xbf16, #tpu.memory_space<vmem>>, vector<1x1x32x384xbf16>
    %27 = vector.shape_cast %26 : vector<1x1x32x384xbf16> to vector<32x384xbf16>
    %c0_13 = arith.constant 0 : index
    %c0_14 = arith.constant 0 : index
    %c0_15 = arith.constant 0 : index
    %c0_16 = arith.constant 0 : index
    %28 = vector.load %arg5[%c0_13, %c0_14, %c0_15, %c0_16] : memref<1x2x8x128xf32, #tpu.memory_space<vmem>>, vector<1x1x8x128xf32>
    %29 = vector.shape_cast %28 : vector<1x1x8x128xf32> to vector<8x128xf32>
    %30 = vector.extract_strided_slice %29 {offsets = [0, 0], sizes = [1, 96], strides = [1, 1]} : vector<8x128xf32> to vector<1x96xf32>
    %31 = vector.extract_strided_slice %29 {offsets = [1, 0], sizes = [1, 32], strides = [1, 1]} : vector<8x128xf32> to vector<1x32xf32>
    %32 = vector.extract_strided_slice %29 {offsets = [2, 0], sizes = [1, 64], strides = [1, 1]} : vector<8x128xf32> to vector<1x64xf32>
    %33 = vector.extract_strided_slice %29 {offsets = [3, 0], sizes = [1, 32], strides = [1, 1]} : vector<8x128xf32> to vector<1x32xf32>
    %34 = vector.extract_strided_slice %29 {offsets = [4, 0], sizes = [1, 32], strides = [1, 1]} : vector<8x128xf32> to vector<1x32xf32>
    %35 = vector.extract_strided_slice %29 {offsets = [5, 0], sizes = [1, 32], strides = [1, 1]} : vector<8x128xf32> to vector<1x32xf32>
    %36 = vector.extract_strided_slice %29 {offsets = [6, 0], sizes = [1, 32], strides = [1, 1]} : vector<8x128xf32> to vector<1x32xf32>
    %37 = vector.extract_strided_slice %29 {offsets = [7, 0], sizes = [1, 32], strides = [1, 1]} : vector<8x128xf32> to vector<1x32xf32>
    %38 = arith.truncf %25 : vector<16x32xf32> to vector<16x32xbf16>
    %39 = vector.extract_strided_slice %27 {offsets = [0, 0], sizes = [32, 96], strides = [1, 1]} : vector<32x384xbf16> to vector<32x96xbf16>
    %cst_17 = arith.constant dense<0.000000e+00> : vector<16x96xf32>
    %40 = tpu.matmul %38, %39, %cst_17 {dimension_numbers = #tpu.dot_dimension_numbers<[1], [0], [0], [1], [0, 0, 1, 1], [], []>} : vector<16x32xbf16>, vector<32x96xbf16>, vector<16x96xf32> -> vector<16x96xf32>
    %41 = vector.broadcast %30 : vector<1x96xf32> to vector<16x96xf32>
    %42 = arith.addf %40, %41 : vector<16x96xf32>
    %43 = vector.extract_strided_slice %27 {offsets = [0, 128], sizes = [32, 32], strides = [1, 1]} : vector<32x384xbf16> to vector<32x32xbf16>
    %44 = vector.extract_strided_slice %42 {offsets = [0, 0], sizes = [16, 8], strides = [1, 1]} : vector<16x96xf32> to vector<16x8xf32>
    %45 = vector.shape_cast %44 : vector<16x8xf32> to vector<2x8x8xf32>
    %46 = vector.extract_strided_slice %42 {offsets = [0, 32], sizes = [16, 8], strides = [1, 1]} : vector<16x96xf32> to vector<16x8xf32>
    %47 = vector.shape_cast %46 : vector<16x8xf32> to vector<2x8x8xf32>
    %48 = vector.extract_strided_slice %42 {offsets = [0, 64], sizes = [16, 8], strides = [1, 1]} : vector<16x96xf32> to vector<16x8xf32>
    %49 = vector.shape_cast %48 : vector<16x8xf32> to vector<2x8x8xf32>
    %50 = arith.truncf %45 : vector<2x8x8xf32> to vector<2x8x8xbf16>
    %51 = arith.truncf %47 : vector<2x8x8xf32> to vector<2x8x8xbf16>
    "tpu.trace_start"() <{level = 10 : i32, message = "bqd,bkd->bqk"}> : () -> ()
    %cst_18 = arith.constant dense<0.000000e+00> : vector<2x8x8xf32>
    %52 = tpu.matmul %50, %51, %cst_18 {dimension_numbers = #tpu.dot_dimension_numbers<[2], [2], [1], [1], [0, 0, 0, 1, 1, 1], [0], [0]>} : vector<2x8x8xbf16>, vector<2x8x8xbf16>, vector<2x8x8xf32> -> vector<2x8x8xf32>
    "tpu.trace_stop"() : () -> ()
    %cst_19 = arith.constant 0.353553385 : f32
    %53 = vector.broadcast %cst_19 : f32 to vector<2x8x8xf32>
    %54 = arith.mulf %52, %53 : vector<2x8x8xf32>
    %cst_20 = arith.constant dense<0xFF800000> : vector<2x8xf32>
    %55 = vector.multi_reduction <maximumf>, %54, %cst_20 [2] : vector<2x8x8xf32> to vector<2x8xf32>
    %56 = vector.shape_cast %55 : vector<2x8xf32> to vector<2x8x1xf32>
    %57 = vector.broadcast %56 : vector<2x8x1xf32> to vector<2x8x8xf32>
    %58 = arith.subf %54, %57 : vector<2x8x8xf32>
    %59 = math.exp %58 : vector<2x8x8xf32>
    %cst_21 = arith.constant dense<0.000000e+00> : vector<2x8xf32>
    %60 = vector.multi_reduction <add>, %59, %cst_21 [2] : vector<2x8x8xf32> to vector<2x8xf32>
    %61 = vector.shape_cast %60 : vector<2x8xf32> to vector<2x8x1xf32>
    %62 = tpu.reciprocal %61 {approx = true} : vector<2x8x1xf32> -> vector<2x8x1xf32>
    %63 = vector.broadcast %62 : vector<2x8x1xf32> to vector<2x8x8xf32>
    %64 = arith.mulf %59, %63 : vector<2x8x8xf32>
    %65 = arith.truncf %64 : vector<2x8x8xf32> to vector<2x8x8xbf16>
    %66 = arith.truncf %49 : vector<2x8x8xf32> to vector<2x8x8xbf16>
    "tpu.trace_start"() <{level = 10 : i32, message = "bqk,bkd->bqd"}> : () -> ()
    %cst_22 = arith.constant dense<0.000000e+00> : vector<2x8x8xf32>
    %67 = tpu.matmul %65, %66, %cst_22 {dimension_numbers = #tpu.dot_dimension_numbers<[2], [1], [1], [2], [0, 0, 0, 1, 1, 2], [0], [0]>} : vector<2x8x8xbf16>, vector<2x8x8xbf16>, vector<2x8x8xf32> -> vector<2x8x8xf32>
    "tpu.trace_stop"() : () -> ()
    %68 = vector.shape_cast %67 : vector<2x8x8xf32> to vector<16x8xf32>
    %69 = arith.truncf %68 : vector<16x8xf32> to vector<16x8xbf16>
    %70 = vector.extract_strided_slice %43 {offsets = [0, 0], sizes = [8, 32], strides = [1, 1]} : vector<32x32xbf16> to vector<8x32xbf16>
    %cst_23 = arith.constant dense<0.000000e+00> : vector<16x32xf32>
    %71 = tpu.matmul %69, %70, %cst_23 {dimension_numbers = #tpu.dot_dimension_numbers<[1], [0], [0], [1], [0, 0, 1, 1], [], []>} : vector<16x8xbf16>, vector<8x32xbf16>, vector<16x32xf32> -> vector<16x32xf32>
    %72 = vector.extract_strided_slice %42 {offsets = [0, 8], sizes = [16, 8], strides = [1, 1]} : vector<16x96xf32> to vector<16x8xf32>
    %73 = vector.shape_cast %72 : vector<16x8xf32> to vector<2x8x8xf32>
    %74 = vector.extract_strided_slice %42 {offsets = [0, 40], sizes = [16, 8], strides = [1, 1]} : vector<16x96xf32> to vector<16x8xf32>
    %75 = vector.shape_cast %74 : vector<16x8xf32> to vector<2x8x8xf32>
    %76 = vector.extract_strided_slice %42 {offsets = [0, 72], sizes = [16, 8], strides = [1, 1]} : vector<16x96xf32> to vector<16x8xf32>
    %77 = vector.shape_cast %76 : vector<16x8xf32> to vector<2x8x8xf32>
    %78 = arith.truncf %73 : vector<2x8x8xf32> to vector<2x8x8xbf16>
    %79 = arith.truncf %75 : vector<2x8x8xf32> to vector<2x8x8xbf16>
    "tpu.trace_start"() <{level = 10 : i32, message = "bqd,bkd->bqk"}> : () -> ()
    %cst_24 = arith.constant dense<0.000000e+00> : vector<2x8x8xf32>
    %80 = tpu.matmul %78, %79, %cst_24 {dimension_numbers = #tpu.dot_dimension_numbers<[2], [2], [1], [1], [0, 0, 0, 1, 1, 1], [0], [0]>} : vector<2x8x8xbf16>, vector<2x8x8xbf16>, vector<2x8x8xf32> -> vector<2x8x8xf32>
    "tpu.trace_stop"() : () -> ()
    %cst_25 = arith.constant 0.353553385 : f32
    %81 = vector.broadcast %cst_25 : f32 to vector<2x8x8xf32>
    %82 = arith.mulf %80, %81 : vector<2x8x8xf32>
    %cst_26 = arith.constant dense<0xFF800000> : vector<2x8xf32>
    %83 = vector.multi_reduction <maximumf>, %82, %cst_26 [2] : vector<2x8x8xf32> to vector<2x8xf32>
    %84 = vector.shape_cast %83 : vector<2x8xf32> to vector<2x8x1xf32>
    %85 = vector.broadcast %84 : vector<2x8x1xf32> to vector<2x8x8xf32>
    %86 = arith.subf %82, %85 : vector<2x8x8xf32>
    %87 = math.exp %86 : vector<2x8x8xf32>
    %cst_27 = arith.constant dense<0.000000e+00> : vector<2x8xf32>
    %88 = vector.multi_reduction <add>, %87, %cst_27 [2] : vector<2x8x8xf32> to vector<2x8xf32>
    %89 = vector.shape_cast %88 : vector<2x8xf32> to vector<2x8x1xf32>
    %90 = tpu.reciprocal %89 {approx = true} : vector<2x8x1xf32> -> vector<2x8x1xf32>
    %91 = vector.broadcast %90 : vector<2x8x1xf32> to vector<2x8x8xf32>
    %92 = arith.mulf %87, %91 : vector<2x8x8xf32>
    %93 = arith.truncf %92 : vector<2x8x8xf32> to vector<2x8x8xbf16>
    %94 = arith.truncf %77 : vector<2x8x8xf32> to vector<2x8x8xbf16>
    "tpu.trace_start"() <{level = 10 : i32, message = "bqk,bkd->bqd"}> : () -> ()
    %cst_28 = arith.constant dense<0.000000e+00> : vector<2x8x8xf32>
    %95 = tpu.matmul %93, %94, %cst_28 {dimension_numbers = #tpu.dot_dimension_numbers<[2], [1], [1], [2], [0, 0, 0, 1, 1, 2], [0], [0]>} : vector<2x8x8xbf16>, vector<2x8x8xbf16>, vector<2x8x8xf32> -> vector<2x8x8xf32>
    "tpu.trace_stop"() : () -> ()
    %96 = vector.shape_cast %95 : vector<2x8x8xf32> to vector<16x8xf32>
    %97 = arith.truncf %96 : vector<16x8xf32> to vector<16x8xbf16>
    %98 = vector.extract_strided_slice %43 {offsets = [8, 0], sizes = [8, 32], strides = [1, 1]} : vector<32x32xbf16> to vector<8x32xbf16>
    %cst_29 = arith.constant dense<0.000000e+00> : vector<16x32xf32>
    %99 = tpu.matmul %97, %98, %cst_29 {dimension_numbers = #tpu.dot_dimension_numbers<[1], [0], [0], [1], [0, 0, 1, 1], [], []>} : vector<16x8xbf16>, vector<8x32xbf16>, vector<16x32xf32> -> vector<16x32xf32>
    %100 = arith.addf %71, %99 : vector<16x32xf32>
    %101 = vector.extract_strided_slice %42 {offsets = [0, 16], sizes = [16, 8], strides = [1, 1]} : vector<16x96xf32> to vector<16x8xf32>
    %102 = vector.shape_cast %101 : vector<16x8xf32> to vector<2x8x8xf32>
    %103 = vector.extract_strided_slice %42 {offsets = [0, 48], sizes = [16, 8], strides = [1, 1]} : vector<16x96xf32> to vector<16x8xf32>
    %104 = vector.shape_cast %103 : vector<16x8xf32> to vector<2x8x8xf32>
    %105 = vector.extract_strided_slice %42 {offsets = [0, 80], sizes = [16, 8], strides = [1, 1]} : vector<16x96xf32> to vector<16x8xf32>
    %106 = vector.shape_cast %105 : vector<16x8xf32> to vector<2x8x8xf32>
    %107 = arith.truncf %102 : vector<2x8x8xf32> to vector<2x8x8xbf16>
    %108 = arith.truncf %104 : vector<2x8x8xf32> to vector<2x8x8xbf16>
    "tpu.trace_start"() <{level = 10 : i32, message = "bqd,bkd->bqk"}> : () -> ()
    %cst_30 = arith.constant dense<0.000000e+00> : vector<2x8x8xf32>
    %109 = tpu.matmul %107, %108, %cst_30 {dimension_numbers = #tpu.dot_dimension_numbers<[2], [2], [1], [1], [0, 0, 0, 1, 1, 1], [0], [0]>} : vector<2x8x8xbf16>, vector<2x8x8xbf16>, vector<2x8x8xf32> -> vector<2x8x8xf32>
    "tpu.trace_stop"() : () -> ()
    %cst_31 = arith.constant 0.353553385 : f32
    %110 = vector.broadcast %cst_31 : f32 to vector<2x8x8xf32>
    %111 = arith.mulf %109, %110 : vector<2x8x8xf32>
    %cst_32 = arith.constant dense<0xFF800000> : vector<2x8xf32>
    %112 = vector.multi_reduction <maximumf>, %111, %cst_32 [2] : vector<2x8x8xf32> to vector<2x8xf32>
    %113 = vector.shape_cast %112 : vector<2x8xf32> to vector<2x8x1xf32>
    %114 = vector.broadcast %113 : vector<2x8x1xf32> to vector<2x8x8xf32>
    %115 = arith.subf %111, %114 : vector<2x8x8xf32>
    %116 = math.exp %115 : vector<2x8x8xf32>
    %cst_33 = arith.constant dense<0.000000e+00> : vector<2x8xf32>
    %117 = vector.multi_reduction <add>, %116, %cst_33 [2] : vector<2x8x8xf32> to vector<2x8xf32>
    %118 = vector.shape_cast %117 : vector<2x8xf32> to vector<2x8x1xf32>
    %119 = tpu.reciprocal %118 {approx = true} : vector<2x8x1xf32> -> vector<2x8x1xf32>
    %120 = vector.broadcast %119 : vector<2x8x1xf32> to vector<2x8x8xf32>
    %121 = arith.mulf %116, %120 : vector<2x8x8xf32>
    %122 = arith.truncf %121 : vector<2x8x8xf32> to vector<2x8x8xbf16>
    %123 = arith.truncf %106 : vector<2x8x8xf32> to vector<2x8x8xbf16>
    "tpu.trace_start"() <{level = 10 : i32, message = "bqk,bkd->bqd"}> : () -> ()
    %cst_34 = arith.constant dense<0.000000e+00> : vector<2x8x8xf32>
    %124 = tpu.matmul %122, %123, %cst_34 {dimension_numbers = #tpu.dot_dimension_numbers<[2], [1], [1], [2], [0, 0, 0, 1, 1, 2], [0], [0]>} : vector<2x8x8xbf16>, vector<2x8x8xbf16>, vector<2x8x8xf32> -> vector<2x8x8xf32>
    "tpu.trace_stop"() : () -> ()
    %125 = vector.shape_cast %124 : vector<2x8x8xf32> to vector<16x8xf32>
    %126 = arith.truncf %125 : vector<16x8xf32> to vector<16x8xbf16>
    %127 = vector.extract_strided_slice %43 {offsets = [16, 0], sizes = [8, 32], strides = [1, 1]} : vector<32x32xbf16> to vector<8x32xbf16>
    %cst_35 = arith.constant dense<0.000000e+00> : vector<16x32xf32>
    %128 = tpu.matmul %126, %127, %cst_35 {dimension_numbers = #tpu.dot_dimension_numbers<[1], [0], [0], [1], [0, 0, 1, 1], [], []>} : vector<16x8xbf16>, vector<8x32xbf16>, vector<16x32xf32> -> vector<16x32xf32>
    %129 = arith.addf %100, %128 : vector<16x32xf32>
    %130 = vector.extract_strided_slice %42 {offsets = [0, 24], sizes = [16, 8], strides = [1, 1]} : vector<16x96xf32> to vector<16x8xf32>
    %131 = vector.shape_cast %130 : vector<16x8xf32> to vector<2x8x8xf32>
    %132 = vector.extract_strided_slice %42 {offsets = [0, 56], sizes = [16, 8], strides = [1, 1]} : vector<16x96xf32> to vector<16x8xf32>
    %133 = vector.shape_cast %132 : vector<16x8xf32> to vector<2x8x8xf32>
    %134 = vector.extract_strided_slice %42 {offsets = [0, 88], sizes = [16, 8], strides = [1, 1]} : vector<16x96xf32> to vector<16x8xf32>
    %135 = vector.shape_cast %134 : vector<16x8xf32> to vector<2x8x8xf32>
    %136 = arith.truncf %131 : vector<2x8x8xf32> to vector<2x8x8xbf16>
    %137 = arith.truncf %133 : vector<2x8x8xf32> to vector<2x8x8xbf16>
    "tpu.trace_start"() <{level = 10 : i32, message = "bqd,bkd->bqk"}> : () -> ()
    %cst_36 = arith.constant dense<0.000000e+00> : vector<2x8x8xf32>
    %138 = tpu.matmul %136, %137, %cst_36 {dimension_numbers = #tpu.dot_dimension_numbers<[2], [2], [1], [1], [0, 0, 0, 1, 1, 1], [0], [0]>} : vector<2x8x8xbf16>, vector<2x8x8xbf16>, vector<2x8x8xf32> -> vector<2x8x8xf32>
    "tpu.trace_stop"() : () -> ()
    %cst_37 = arith.constant 0.353553385 : f32
    %139 = vector.broadcast %cst_37 : f32 to vector<2x8x8xf32>
    %140 = arith.mulf %138, %139 : vector<2x8x8xf32>
    %cst_38 = arith.constant dense<0xFF800000> : vector<2x8xf32>
    %141 = vector.multi_reduction <maximumf>, %140, %cst_38 [2] : vector<2x8x8xf32> to vector<2x8xf32>
    %142 = vector.shape_cast %141 : vector<2x8xf32> to vector<2x8x1xf32>
    %143 = vector.broadcast %142 : vector<2x8x1xf32> to vector<2x8x8xf32>
    %144 = arith.subf %140, %143 : vector<2x8x8xf32>
    %145 = math.exp %144 : vector<2x8x8xf32>
    %cst_39 = arith.constant dense<0.000000e+00> : vector<2x8xf32>
    %146 = vector.multi_reduction <add>, %145, %cst_39 [2] : vector<2x8x8xf32> to vector<2x8xf32>
    %147 = vector.shape_cast %146 : vector<2x8xf32> to vector<2x8x1xf32>
    %148 = tpu.reciprocal %147 {approx = true} : vector<2x8x1xf32> -> vector<2x8x1xf32>
    %149 = vector.broadcast %148 : vector<2x8x1xf32> to vector<2x8x8xf32>
    %150 = arith.mulf %145, %149 : vector<2x8x8xf32>
    %151 = arith.truncf %150 : vector<2x8x8xf32> to vector<2x8x8xbf16>
    %152 = arith.truncf %135 : vector<2x8x8xf32> to vector<2x8x8xbf16>
    "tpu.trace_start"() <{level = 10 : i32, message = "bqk,bkd->bqd"}> : () -> ()
    %cst_40 = arith.constant dense<0.000000e+00> : vector<2x8x8xf32>
    %153 = tpu.matmul %151, %152, %cst_40 {dimension_numbers = #tpu.dot_dimension_numbers<[2], [1], [1], [2], [0, 0, 0, 1, 1, 2], [0], [0]>} : vector<2x8x8xbf16>, vector<2x8x8xbf16>, vector<2x8x8xf32> -> vector<2x8x8xf32>
    "tpu.trace_stop"() : () -> ()
    %154 = vector.shape_cast %153 : vector<2x8x8xf32> to vector<16x8xf32>
    %155 = arith.truncf %154 : vector<16x8xf32> to vector<16x8xbf16>
    %156 = vector.extract_strided_slice %43 {offsets = [24, 0], sizes = [8, 32], strides = [1, 1]} : vector<32x32xbf16> to vector<8x32xbf16>
    %cst_41 = arith.constant dense<0.000000e+00> : vector<16x32xf32>
    %157 = tpu.matmul %155, %156, %cst_41 {dimension_numbers = #tpu.dot_dimension_numbers<[1], [0], [0], [1], [0, 0, 1, 1], [], []>} : vector<16x8xbf16>, vector<8x32xbf16>, vector<16x32xf32> -> vector<16x32xf32>
    %158 = arith.addf %129, %157 : vector<16x32xf32>
    %159 = arith.addf %25, %158 : vector<16x32xf32>
    %160 = vector.broadcast %31 : vector<1x32xf32> to vector<16x32xf32>
    %161 = arith.addf %159, %160 : vector<16x32xf32>
    %cst_42 = arith.constant dense<0.000000e+00> : vector<16xf32>
    %162 = vector.multi_reduction <add>, %161, %cst_42 [1] : vector<16x32xf32> to vector<16xf32>
    %163 = vector.shape_cast %162 : vector<16xf32> to vector<16x1xf32>
    %cst_43 = arith.constant 3.200000e+01 : f32
    %164 = vector.broadcast %cst_43 : f32 to vector<16x1xf32>
    %165 = arith.divf %163, %164 : vector<16x1xf32>
    %166 = vector.broadcast %165 : vector<16x1xf32> to vector<16x32xf32>
    %167 = arith.subf %161, %166 : vector<16x32xf32>
    %168 = arith.mulf %167, %167 : vector<16x32xf32>
    %cst_44 = arith.constant dense<0.000000e+00> : vector<16xf32>
    %169 = vector.multi_reduction <add>, %168, %cst_44 [1] : vector<16x32xf32> to vector<16xf32>
    %170 = vector.shape_cast %169 : vector<16xf32> to vector<16x1xf32>
    %cst_45 = arith.constant 3.200000e+01 : f32
    %171 = vector.broadcast %cst_45 : f32 to vector<16x1xf32>
    %172 = arith.divf %170, %171 : vector<16x1xf32>
    %cst_46 = arith.constant 9.99999996E-13 : f32
    %173 = vector.broadcast %cst_46 : f32 to vector<16x1xf32>
    %174 = arith.addf %172, %173 : vector<16x1xf32>
    %175 = math.rsqrt %174 : vector<16x1xf32>
    %176 = vector.broadcast %175 : vector<16x1xf32> to vector<16x32xf32>
    %177 = arith.mulf %167, %176 : vector<16x32xf32>
    %178 = vector.broadcast %34 : vector<1x32xf32> to vector<16x32xf32>
    %179 = arith.mulf %177, %178 : vector<16x32xf32>
    %180 = vector.broadcast %35 : vector<1x32xf32> to vector<16x32xf32>
    %181 = arith.addf %179, %180 : vector<16x32xf32>
    %182 = arith.truncf %181 : vector<16x32xf32> to vector<16x32xbf16>
    %183 = vector.extract_strided_slice %27 {offsets = [0, 256], sizes = [32, 64], strides = [1, 1]} : vector<32x384xbf16> to vector<32x64xbf16>
    %cst_47 = arith.constant dense<0.000000e+00> : vector<16x64xf32>
    %184 = tpu.matmul %182, %183, %cst_47 {dimension_numbers = #tpu.dot_dimension_numbers<[1], [0], [0], [1], [0, 0, 1, 1], [], []>} : vector<16x32xbf16>, vector<32x64xbf16>, vector<16x64xf32> -> vector<16x64xf32>
    %185 = vector.broadcast %32 : vector<1x64xf32> to vector<16x64xf32>
    %186 = arith.addf %184, %185 : vector<16x64xf32>
    %cst_48 = arith.constant 5.000000e-01 : f32
    %187 = vector.broadcast %cst_48 : f32 to vector<16x64xf32>
    %188 = arith.mulf %187, %186 : vector<16x64xf32>
    %cst_49 = arith.constant 4.471500e-02 : f32
    %189 = vector.broadcast %cst_49 : f32 to vector<16x64xf32>
    %190 = arith.mulf %189, %186 : vector<16x64xf32>
    %191 = arith.mulf %190, %186 : vector<16x64xf32>
    %192 = arith.mulf %191, %186 : vector<16x64xf32>
    %193 = arith.addf %186, %192 : vector<16x64xf32>
    %cst_50 = arith.constant 0.797884583 : f32
    %194 = vector.broadcast %cst_50 : f32 to vector<16x64xf32>
    %195 = arith.mulf %194, %193 : vector<16x64xf32>
    %196 = math.tanh %195 : vector<16x64xf32>
    %cst_51 = arith.constant 1.000000e+00 : f32
    %197 = vector.broadcast %cst_51 : f32 to vector<16x64xf32>
    %198 = arith.addf %197, %196 : vector<16x64xf32>
    %199 = arith.mulf %188, %198 : vector<16x64xf32>
    %200 = arith.truncf %199 : vector<16x64xf32> to vector<16x64xbf16>
    %c0_52 = arith.constant 0 : index
    %c0_53 = arith.constant 0 : index
    %c0_54 = arith.constant 0 : index
    %c0_55 = arith.constant 0 : index
    %201 = vector.load %arg3[%c0_52, %c0_53, %c0_54, %c0_55] : memref<1x2x64x32xbf16, #tpu.memory_space<vmem>>, vector<1x1x64x32xbf16>
    %202 = vector.shape_cast %201 : vector<1x1x64x32xbf16> to vector<64x32xbf16>
    %cst_56 = arith.constant dense<0.000000e+00> : vector<16x32xf32>
    %203 = tpu.matmul %200, %202, %cst_56 {dimension_numbers = #tpu.dot_dimension_numbers<[1], [0], [0], [1], [0, 0, 1, 1], [], []>} : vector<16x64xbf16>, vector<64x32xbf16>, vector<16x32xf32> -> vector<16x32xf32>
    %204 = vector.broadcast %33 : vector<1x32xf32> to vector<16x32xf32>
    %205 = arith.addf %203, %204 : vector<16x32xf32>
    %206 = arith.addf %181, %205 : vector<16x32xf32>
    %cst_57 = arith.constant dense<0.000000e+00> : vector<16xf32>
    %207 = vector.multi_reduction <add>, %206, %cst_57 [1] : vector<16x32xf32> to vector<16xf32>
    %208 = vector.shape_cast %207 : vector<16xf32> to vector<16x1xf32>
    %cst_58 = arith.constant 3.200000e+01 : f32
    %209 = vector.broadcast %cst_58 : f32 to vector<16x1xf32>
    %210 = arith.divf %208, %209 : vector<16x1xf32>
    %211 = vector.broadcast %210 : vector<16x1xf32> to vector<16x32xf32>
    %212 = arith.subf %206, %211 : vector<16x32xf32>
    %213 = arith.mulf %212, %212 : vector<16x32xf32>
    %cst_59 = arith.constant dense<0.000000e+00> : vector<16xf32>
    %214 = vector.multi_reduction <add>, %213, %cst_59 [1] : vector<16x32xf32> to vector<16xf32>
    %215 = vector.shape_cast %214 : vector<16xf32> to vector<16x1xf32>
    %cst_60 = arith.constant 3.200000e+01 : f32
    %216 = vector.broadcast %cst_60 : f32 to vector<16x1xf32>
    %217 = arith.divf %215, %216 : vector<16x1xf32>
    %cst_61 = arith.constant 9.99999996E-13 : f32
    %218 = vector.broadcast %cst_61 : f32 to vector<16x1xf32>
    %219 = arith.addf %217, %218 : vector<16x1xf32>
    %220 = math.rsqrt %219 : vector<16x1xf32>
    %221 = vector.broadcast %220 : vector<16x1xf32> to vector<16x32xf32>
    %222 = arith.mulf %212, %221 : vector<16x32xf32>
    %223 = vector.broadcast %36 : vector<1x32xf32> to vector<16x32xf32>
    %224 = arith.mulf %222, %223 : vector<16x32xf32>
    %225 = vector.broadcast %37 : vector<1x32xf32> to vector<16x32xf32>
    %226 = arith.addf %224, %225 : vector<16x32xf32>
    %c0_62 = arith.constant 0 : index
    %c1 = arith.constant 1 : index
    %c0_63 = arith.constant 0 : index
    %c0_64 = arith.constant 0 : index
    %227 = vector.load %arg2[%c0_62, %c1, %c0_63, %c0_64] : memref<1x2x32x384xbf16, #tpu.memory_space<vmem>>, vector<1x1x32x384xbf16>
    %228 = vector.shape_cast %227 : vector<1x1x32x384xbf16> to vector<32x384xbf16>
    %c0_65 = arith.constant 0 : index
    %c1_66 = arith.constant 1 : index
    %c0_67 = arith.constant 0 : index
    %c0_68 = arith.constant 0 : index
    %229 = vector.load %arg5[%c0_65, %c1_66, %c0_67, %c0_68] : memref<1x2x8x128xf32, #tpu.memory_space<vmem>>, vector<1x1x8x128xf32>
    %230 = vector.shape_cast %229 : vector<1x1x8x128xf32> to vector<8x128xf32>
    %231 = vector.extract_strided_slice %230 {offsets = [0, 0], sizes = [1, 96], strides = [1, 1]} : vector<8x128xf32> to vector<1x96xf32>
    %232 = vector.extract_strided_slice %230 {offsets = [1, 0], sizes = [1, 32], strides = [1, 1]} : vector<8x128xf32> to vector<1x32xf32>
    %233 = vector.extract_strided_slice %230 {offsets = [2, 0], sizes = [1, 64], strides = [1, 1]} : vector<8x128xf32> to vector<1x64xf32>
    %234 = vector.extract_strided_slice %230 {offsets = [3, 0], sizes = [1, 32], strides = [1, 1]} : vector<8x128xf32> to vector<1x32xf32>
    %235 = vector.extract_strided_slice %230 {offsets = [4, 0], sizes = [1, 32], strides = [1, 1]} : vector<8x128xf32> to vector<1x32xf32>
    %236 = vector.extract_strided_slice %230 {offsets = [5, 0], sizes = [1, 32], strides = [1, 1]} : vector<8x128xf32> to vector<1x32xf32>
    %237 = vector.extract_strided_slice %230 {offsets = [6, 0], sizes = [1, 32], strides = [1, 1]} : vector<8x128xf32> to vector<1x32xf32>
    %238 = vector.extract_strided_slice %230 {offsets = [7, 0], sizes = [1, 32], strides = [1, 1]} : vector<8x128xf32> to vector<1x32xf32>
    %239 = arith.truncf %226 : vector<16x32xf32> to vector<16x32xbf16>
    %240 = vector.extract_strided_slice %228 {offsets = [0, 0], sizes = [32, 96], strides = [1, 1]} : vector<32x384xbf16> to vector<32x96xbf16>
    %cst_69 = arith.constant dense<0.000000e+00> : vector<16x96xf32>
    %241 = tpu.matmul %239, %240, %cst_69 {dimension_numbers = #tpu.dot_dimension_numbers<[1], [0], [0], [1], [0, 0, 1, 1], [], []>} : vector<16x32xbf16>, vector<32x96xbf16>, vector<16x96xf32> -> vector<16x96xf32>
    %242 = vector.broadcast %231 : vector<1x96xf32> to vector<16x96xf32>
    %243 = arith.addf %241, %242 : vector<16x96xf32>
    %244 = vector.extract_strided_slice %228 {offsets = [0, 128], sizes = [32, 32], strides = [1, 1]} : vector<32x384xbf16> to vector<32x32xbf16>
    %245 = vector.extract_strided_slice %243 {offsets = [0, 0], sizes = [16, 8], strides = [1, 1]} : vector<16x96xf32> to vector<16x8xf32>
    %246 = vector.shape_cast %245 : vector<16x8xf32> to vector<2x8x8xf32>
    %247 = vector.extract_strided_slice %243 {offsets = [0, 32], sizes = [16, 8], strides = [1, 1]} : vector<16x96xf32> to vector<16x8xf32>
    %248 = vector.shape_cast %247 : vector<16x8xf32> to vector<2x8x8xf32>
    %249 = vector.extract_strided_slice %243 {offsets = [0, 64], sizes = [16, 8], strides = [1, 1]} : vector<16x96xf32> to vector<16x8xf32>
    %250 = vector.shape_cast %249 : vector<16x8xf32> to vector<2x8x8xf32>
    %251 = arith.truncf %246 : vector<2x8x8xf32> to vector<2x8x8xbf16>
    %252 = arith.truncf %248 : vector<2x8x8xf32> to vector<2x8x8xbf16>
    "tpu.trace_start"() <{level = 10 : i32, message = "bqd,bkd->bqk"}> : () -> ()
    %cst_70 = arith.constant dense<0.000000e+00> : vector<2x8x8xf32>
    %253 = tpu.matmul %251, %252, %cst_70 {dimension_numbers = #tpu.dot_dimension_numbers<[2], [2], [1], [1], [0, 0, 0, 1, 1, 1], [0], [0]>} : vector<2x8x8xbf16>, vector<2x8x8xbf16>, vector<2x8x8xf32> -> vector<2x8x8xf32>
    "tpu.trace_stop"() : () -> ()
    %cst_71 = arith.constant 0.353553385 : f32
    %254 = vector.broadcast %cst_71 : f32 to vector<2x8x8xf32>
    %255 = arith.mulf %253, %254 : vector<2x8x8xf32>
    %cst_72 = arith.constant dense<0xFF800000> : vector<2x8xf32>
    %256 = vector.multi_reduction <maximumf>, %255, %cst_72 [2] : vector<2x8x8xf32> to vector<2x8xf32>
    %257 = vector.shape_cast %256 : vector<2x8xf32> to vector<2x8x1xf32>
    %258 = vector.broadcast %257 : vector<2x8x1xf32> to vector<2x8x8xf32>
    %259 = arith.subf %255, %258 : vector<2x8x8xf32>
    %260 = math.exp %259 : vector<2x8x8xf32>
    %cst_73 = arith.constant dense<0.000000e+00> : vector<2x8xf32>
    %261 = vector.multi_reduction <add>, %260, %cst_73 [2] : vector<2x8x8xf32> to vector<2x8xf32>
    %262 = vector.shape_cast %261 : vector<2x8xf32> to vector<2x8x1xf32>
    %263 = tpu.reciprocal %262 {approx = true} : vector<2x8x1xf32> -> vector<2x8x1xf32>
    %264 = vector.broadcast %263 : vector<2x8x1xf32> to vector<2x8x8xf32>
    %265 = arith.mulf %260, %264 : vector<2x8x8xf32>
    %266 = arith.truncf %265 : vector<2x8x8xf32> to vector<2x8x8xbf16>
    %267 = arith.truncf %250 : vector<2x8x8xf32> to vector<2x8x8xbf16>
    "tpu.trace_start"() <{level = 10 : i32, message = "bqk,bkd->bqd"}> : () -> ()
    %cst_74 = arith.constant dense<0.000000e+00> : vector<2x8x8xf32>
    %268 = tpu.matmul %266, %267, %cst_74 {dimension_numbers = #tpu.dot_dimension_numbers<[2], [1], [1], [2], [0, 0, 0, 1, 1, 2], [0], [0]>} : vector<2x8x8xbf16>, vector<2x8x8xbf16>, vector<2x8x8xf32> -> vector<2x8x8xf32>
    "tpu.trace_stop"() : () -> ()
    %269 = vector.shape_cast %268 : vector<2x8x8xf32> to vector<16x8xf32>
    %270 = arith.truncf %269 : vector<16x8xf32> to vector<16x8xbf16>
    %271 = vector.extract_strided_slice %244 {offsets = [0, 0], sizes = [8, 32], strides = [1, 1]} : vector<32x32xbf16> to vector<8x32xbf16>
    %cst_75 = arith.constant dense<0.000000e+00> : vector<16x32xf32>
    %272 = tpu.matmul %270, %271, %cst_75 {dimension_numbers = #tpu.dot_dimension_numbers<[1], [0], [0], [1], [0, 0, 1, 1], [], []>} : vector<16x8xbf16>, vector<8x32xbf16>, vector<16x32xf32> -> vector<16x32xf32>
    %273 = vector.extract_strided_slice %243 {offsets = [0, 8], sizes = [16, 8], strides = [1, 1]} : vector<16x96xf32> to vector<16x8xf32>
    %274 = vector.shape_cast %273 : vector<16x8xf32> to vector<2x8x8xf32>
    %275 = vector.extract_strided_slice %243 {offsets = [0, 40], sizes = [16, 8], strides = [1, 1]} : vector<16x96xf32> to vector<16x8xf32>
    %276 = vector.shape_cast %275 : vector<16x8xf32> to vector<2x8x8xf32>
    %277 = vector.extract_strided_slice %243 {offsets = [0, 72], sizes = [16, 8], strides = [1, 1]} : vector<16x96xf32> to vector<16x8xf32>
    %278 = vector.shape_cast %277 : vector<16x8xf32> to vector<2x8x8xf32>
    %279 = arith.truncf %274 : vector<2x8x8xf32> to vector<2x8x8xbf16>
    %280 = arith.truncf %276 : vector<2x8x8xf32> to vector<2x8x8xbf16>
    "tpu.trace_start"() <{level = 10 : i32, message = "bqd,bkd->bqk"}> : () -> ()
    %cst_76 = arith.constant dense<0.000000e+00> : vector<2x8x8xf32>
    %281 = tpu.matmul %279, %280, %cst_76 {dimension_numbers = #tpu.dot_dimension_numbers<[2], [2], [1], [1], [0, 0, 0, 1, 1, 1], [0], [0]>} : vector<2x8x8xbf16>, vector<2x8x8xbf16>, vector<2x8x8xf32> -> vector<2x8x8xf32>
    "tpu.trace_stop"() : () -> ()
    %cst_77 = arith.constant 0.353553385 : f32
    %282 = vector.broadcast %cst_77 : f32 to vector<2x8x8xf32>
    %283 = arith.mulf %281, %282 : vector<2x8x8xf32>
    %cst_78 = arith.constant dense<0xFF800000> : vector<2x8xf32>
    %284 = vector.multi_reduction <maximumf>, %283, %cst_78 [2] : vector<2x8x8xf32> to vector<2x8xf32>
    %285 = vector.shape_cast %284 : vector<2x8xf32> to vector<2x8x1xf32>
    %286 = vector.broadcast %285 : vector<2x8x1xf32> to vector<2x8x8xf32>
    %287 = arith.subf %283, %286 : vector<2x8x8xf32>
    %288 = math.exp %287 : vector<2x8x8xf32>
    %cst_79 = arith.constant dense<0.000000e+00> : vector<2x8xf32>
    %289 = vector.multi_reduction <add>, %288, %cst_79 [2] : vector<2x8x8xf32> to vector<2x8xf32>
    %290 = vector.shape_cast %289 : vector<2x8xf32> to vector<2x8x1xf32>
    %291 = tpu.reciprocal %290 {approx = true} : vector<2x8x1xf32> -> vector<2x8x1xf32>
    %292 = vector.broadcast %291 : vector<2x8x1xf32> to vector<2x8x8xf32>
    %293 = arith.mulf %288, %292 : vector<2x8x8xf32>
    %294 = arith.truncf %293 : vector<2x8x8xf32> to vector<2x8x8xbf16>
    %295 = arith.truncf %278 : vector<2x8x8xf32> to vector<2x8x8xbf16>
    "tpu.trace_start"() <{level = 10 : i32, message = "bqk,bkd->bqd"}> : () -> ()
    %cst_80 = arith.constant dense<0.000000e+00> : vector<2x8x8xf32>
    %296 = tpu.matmul %294, %295, %cst_80 {dimension_numbers = #tpu.dot_dimension_numbers<[2], [1], [1], [2], [0, 0, 0, 1, 1, 2], [0], [0]>} : vector<2x8x8xbf16>, vector<2x8x8xbf16>, vector<2x8x8xf32> -> vector<2x8x8xf32>
    "tpu.trace_stop"() : () -> ()
    %297 = vector.shape_cast %296 : vector<2x8x8xf32> to vector<16x8xf32>
    %298 = arith.truncf %297 : vector<16x8xf32> to vector<16x8xbf16>
    %299 = vector.extract_strided_slice %244 {offsets = [8, 0], sizes = [8, 32], strides = [1, 1]} : vector<32x32xbf16> to vector<8x32xbf16>
    %cst_81 = arith.constant dense<0.000000e+00> : vector<16x32xf32>
    %300 = tpu.matmul %298, %299, %cst_81 {dimension_numbers = #tpu.dot_dimension_numbers<[1], [0], [0], [1], [0, 0, 1, 1], [], []>} : vector<16x8xbf16>, vector<8x32xbf16>, vector<16x32xf32> -> vector<16x32xf32>
    %301 = arith.addf %272, %300 : vector<16x32xf32>
    %302 = vector.extract_strided_slice %243 {offsets = [0, 16], sizes = [16, 8], strides = [1, 1]} : vector<16x96xf32> to vector<16x8xf32>
    %303 = vector.shape_cast %302 : vector<16x8xf32> to vector<2x8x8xf32>
    %304 = vector.extract_strided_slice %243 {offsets = [0, 48], sizes = [16, 8], strides = [1, 1]} : vector<16x96xf32> to vector<16x8xf32>
    %305 = vector.shape_cast %304 : vector<16x8xf32> to vector<2x8x8xf32>
    %306 = vector.extract_strided_slice %243 {offsets = [0, 80], sizes = [16, 8], strides = [1, 1]} : vector<16x96xf32> to vector<16x8xf32>
    %307 = vector.shape_cast %306 : vector<16x8xf32> to vector<2x8x8xf32>
    %308 = arith.truncf %303 : vector<2x8x8xf32> to vector<2x8x8xbf16>
    %309 = arith.truncf %305 : vector<2x8x8xf32> to vector<2x8x8xbf16>
    "tpu.trace_start"() <{level = 10 : i32, message = "bqd,bkd->bqk"}> : () -> ()
    %cst_82 = arith.constant dense<0.000000e+00> : vector<2x8x8xf32>
    %310 = tpu.matmul %308, %309, %cst_82 {dimension_numbers = #tpu.dot_dimension_numbers<[2], [2], [1], [1], [0, 0, 0, 1, 1, 1], [0], [0]>} : vector<2x8x8xbf16>, vector<2x8x8xbf16>, vector<2x8x8xf32> -> vector<2x8x8xf32>
    "tpu.trace_stop"() : () -> ()
    %cst_83 = arith.constant 0.353553385 : f32
    %311 = vector.broadcast %cst_83 : f32 to vector<2x8x8xf32>
    %312 = arith.mulf %310, %311 : vector<2x8x8xf32>
    %cst_84 = arith.constant dense<0xFF800000> : vector<2x8xf32>
    %313 = vector.multi_reduction <maximumf>, %312, %cst_84 [2] : vector<2x8x8xf32> to vector<2x8xf32>
    %314 = vector.shape_cast %313 : vector<2x8xf32> to vector<2x8x1xf32>
    %315 = vector.broadcast %314 : vector<2x8x1xf32> to vector<2x8x8xf32>
    %316 = arith.subf %312, %315 : vector<2x8x8xf32>
    %317 = math.exp %316 : vector<2x8x8xf32>
    %cst_85 = arith.constant dense<0.000000e+00> : vector<2x8xf32>
    %318 = vector.multi_reduction <add>, %317, %cst_85 [2] : vector<2x8x8xf32> to vector<2x8xf32>
    %319 = vector.shape_cast %318 : vector<2x8xf32> to vector<2x8x1xf32>
    %320 = tpu.reciprocal %319 {approx = true} : vector<2x8x1xf32> -> vector<2x8x1xf32>
    %321 = vector.broadcast %320 : vector<2x8x1xf32> to vector<2x8x8xf32>
    %322 = arith.mulf %317, %321 : vector<2x8x8xf32>
    %323 = arith.truncf %322 : vector<2x8x8xf32> to vector<2x8x8xbf16>
    %324 = arith.truncf %307 : vector<2x8x8xf32> to vector<2x8x8xbf16>
    "tpu.trace_start"() <{level = 10 : i32, message = "bqk,bkd->bqd"}> : () -> ()
    %cst_86 = arith.constant dense<0.000000e+00> : vector<2x8x8xf32>
    %325 = tpu.matmul %323, %324, %cst_86 {dimension_numbers = #tpu.dot_dimension_numbers<[2], [1], [1], [2], [0, 0, 0, 1, 1, 2], [0], [0]>} : vector<2x8x8xbf16>, vector<2x8x8xbf16>, vector<2x8x8xf32> -> vector<2x8x8xf32>
    "tpu.trace_stop"() : () -> ()
    %326 = vector.shape_cast %325 : vector<2x8x8xf32> to vector<16x8xf32>
    %327 = arith.truncf %326 : vector<16x8xf32> to vector<16x8xbf16>
    %328 = vector.extract_strided_slice %244 {offsets = [16, 0], sizes = [8, 32], strides = [1, 1]} : vector<32x32xbf16> to vector<8x32xbf16>
    %cst_87 = arith.constant dense<0.000000e+00> : vector<16x32xf32>
    %329 = tpu.matmul %327, %328, %cst_87 {dimension_numbers = #tpu.dot_dimension_numbers<[1], [0], [0], [1], [0, 0, 1, 1], [], []>} : vector<16x8xbf16>, vector<8x32xbf16>, vector<16x32xf32> -> vector<16x32xf32>
    %330 = arith.addf %301, %329 : vector<16x32xf32>
    %331 = vector.extract_strided_slice %243 {offsets = [0, 24], sizes = [16, 8], strides = [1, 1]} : vector<16x96xf32> to vector<16x8xf32>
    %332 = vector.shape_cast %331 : vector<16x8xf32> to vector<2x8x8xf32>
    %333 = vector.extract_strided_slice %243 {offsets = [0, 56], sizes = [16, 8], strides = [1, 1]} : vector<16x96xf32> to vector<16x8xf32>
    %334 = vector.shape_cast %333 : vector<16x8xf32> to vector<2x8x8xf32>
    %335 = vector.extract_strided_slice %243 {offsets = [0, 88], sizes = [16, 8], strides = [1, 1]} : vector<16x96xf32> to vector<16x8xf32>
    %336 = vector.shape_cast %335 : vector<16x8xf32> to vector<2x8x8xf32>
    %337 = arith.truncf %332 : vector<2x8x8xf32> to vector<2x8x8xbf16>
    %338 = arith.truncf %334 : vector<2x8x8xf32> to vector<2x8x8xbf16>
    "tpu.trace_start"() <{level = 10 : i32, message = "bqd,bkd->bqk"}> : () -> ()
    %cst_88 = arith.constant dense<0.000000e+00> : vector<2x8x8xf32>
    %339 = tpu.matmul %337, %338, %cst_88 {dimension_numbers = #tpu.dot_dimension_numbers<[2], [2], [1], [1], [0, 0, 0, 1, 1, 1], [0], [0]>} : vector<2x8x8xbf16>, vector<2x8x8xbf16>, vector<2x8x8xf32> -> vector<2x8x8xf32>
    "tpu.trace_stop"() : () -> ()
    %cst_89 = arith.constant 0.353553385 : f32
    %340 = vector.broadcast %cst_89 : f32 to vector<2x8x8xf32>
    %341 = arith.mulf %339, %340 : vector<2x8x8xf32>
    %cst_90 = arith.constant dense<0xFF800000> : vector<2x8xf32>
    %342 = vector.multi_reduction <maximumf>, %341, %cst_90 [2] : vector<2x8x8xf32> to vector<2x8xf32>
    %343 = vector.shape_cast %342 : vector<2x8xf32> to vector<2x8x1xf32>
    %344 = vector.broadcast %343 : vector<2x8x1xf32> to vector<2x8x8xf32>
    %345 = arith.subf %341, %344 : vector<2x8x8xf32>
    %346 = math.exp %345 : vector<2x8x8xf32>
    %cst_91 = arith.constant dense<0.000000e+00> : vector<2x8xf32>
    %347 = vector.multi_reduction <add>, %346, %cst_91 [2] : vector<2x8x8xf32> to vector<2x8xf32>
    %348 = vector.shape_cast %347 : vector<2x8xf32> to vector<2x8x1xf32>
    %349 = tpu.reciprocal %348 {approx = true} : vector<2x8x1xf32> -> vector<2x8x1xf32>
    %350 = vector.broadcast %349 : vector<2x8x1xf32> to vector<2x8x8xf32>
    %351 = arith.mulf %346, %350 : vector<2x8x8xf32>
    %352 = arith.truncf %351 : vector<2x8x8xf32> to vector<2x8x8xbf16>
    %353 = arith.truncf %336 : vector<2x8x8xf32> to vector<2x8x8xbf16>
    "tpu.trace_start"() <{level = 10 : i32, message = "bqk,bkd->bqd"}> : () -> ()
    %cst_92 = arith.constant dense<0.000000e+00> : vector<2x8x8xf32>
    %354 = tpu.matmul %352, %353, %cst_92 {dimension_numbers = #tpu.dot_dimension_numbers<[2], [1], [1], [2], [0, 0, 0, 1, 1, 2], [0], [0]>} : vector<2x8x8xbf16>, vector<2x8x8xbf16>, vector<2x8x8xf32> -> vector<2x8x8xf32>
    "tpu.trace_stop"() : () -> ()
    %355 = vector.shape_cast %354 : vector<2x8x8xf32> to vector<16x8xf32>
    %356 = arith.truncf %355 : vector<16x8xf32> to vector<16x8xbf16>
    %357 = vector.extract_strided_slice %244 {offsets = [24, 0], sizes = [8, 32], strides = [1, 1]} : vector<32x32xbf16> to vector<8x32xbf16>
    %cst_93 = arith.constant dense<0.000000e+00> : vector<16x32xf32>
    %358 = tpu.matmul %356, %357, %cst_93 {dimension_numbers = #tpu.dot_dimension_numbers<[1], [0], [0], [1], [0, 0, 1, 1], [], []>} : vector<16x8xbf16>, vector<8x32xbf16>, vector<16x32xf32> -> vector<16x32xf32>
    %359 = arith.addf %330, %358 : vector<16x32xf32>
    %360 = arith.addf %226, %359 : vector<16x32xf32>
    %361 = vector.broadcast %232 : vector<1x32xf32> to vector<16x32xf32>
    %362 = arith.addf %360, %361 : vector<16x32xf32>
    %cst_94 = arith.constant dense<0.000000e+00> : vector<16xf32>
    %363 = vector.multi_reduction <add>, %362, %cst_94 [1] : vector<16x32xf32> to vector<16xf32>
    %364 = vector.shape_cast %363 : vector<16xf32> to vector<16x1xf32>
    %cst_95 = arith.constant 3.200000e+01 : f32
    %365 = vector.broadcast %cst_95 : f32 to vector<16x1xf32>
    %366 = arith.divf %364, %365 : vector<16x1xf32>
    %367 = vector.broadcast %366 : vector<16x1xf32> to vector<16x32xf32>
    %368 = arith.subf %362, %367 : vector<16x32xf32>
    %369 = arith.mulf %368, %368 : vector<16x32xf32>
    %cst_96 = arith.constant dense<0.000000e+00> : vector<16xf32>
    %370 = vector.multi_reduction <add>, %369, %cst_96 [1] : vector<16x32xf32> to vector<16xf32>
    %371 = vector.shape_cast %370 : vector<16xf32> to vector<16x1xf32>
    %cst_97 = arith.constant 3.200000e+01 : f32
    %372 = vector.broadcast %cst_97 : f32 to vector<16x1xf32>
    %373 = arith.divf %371, %372 : vector<16x1xf32>
    %cst_98 = arith.constant 9.99999996E-13 : f32
    %374 = vector.broadcast %cst_98 : f32 to vector<16x1xf32>
    %375 = arith.addf %373, %374 : vector<16x1xf32>
    %376 = math.rsqrt %375 : vector<16x1xf32>
    %377 = vector.broadcast %376 : vector<16x1xf32> to vector<16x32xf32>
    %378 = arith.mulf %368, %377 : vector<16x32xf32>
    %379 = vector.broadcast %235 : vector<1x32xf32> to vector<16x32xf32>
    %380 = arith.mulf %378, %379 : vector<16x32xf32>
    %381 = vector.broadcast %236 : vector<1x32xf32> to vector<16x32xf32>
    %382 = arith.addf %380, %381 : vector<16x32xf32>
    %383 = arith.truncf %382 : vector<16x32xf32> to vector<16x32xbf16>
    %384 = vector.extract_strided_slice %228 {offsets = [0, 256], sizes = [32, 64], strides = [1, 1]} : vector<32x384xbf16> to vector<32x64xbf16>
    %cst_99 = arith.constant dense<0.000000e+00> : vector<16x64xf32>
    %385 = tpu.matmul %383, %384, %cst_99 {dimension_numbers = #tpu.dot_dimension_numbers<[1], [0], [0], [1], [0, 0, 1, 1], [], []>} : vector<16x32xbf16>, vector<32x64xbf16>, vector<16x64xf32> -> vector<16x64xf32>
    %386 = vector.broadcast %233 : vector<1x64xf32> to vector<16x64xf32>
    %387 = arith.addf %385, %386 : vector<16x64xf32>
    %cst_100 = arith.constant 5.000000e-01 : f32
    %388 = vector.broadcast %cst_100 : f32 to vector<16x64xf32>
    %389 = arith.mulf %388, %387 : vector<16x64xf32>
    %cst_101 = arith.constant 4.471500e-02 : f32
    %390 = vector.broadcast %cst_101 : f32 to vector<16x64xf32>
    %391 = arith.mulf %390, %387 : vector<16x64xf32>
    %392 = arith.mulf %391, %387 : vector<16x64xf32>
    %393 = arith.mulf %392, %387 : vector<16x64xf32>
    %394 = arith.addf %387, %393 : vector<16x64xf32>
    %cst_102 = arith.constant 0.797884583 : f32
    %395 = vector.broadcast %cst_102 : f32 to vector<16x64xf32>
    %396 = arith.mulf %395, %394 : vector<16x64xf32>
    %397 = math.tanh %396 : vector<16x64xf32>
    %cst_103 = arith.constant 1.000000e+00 : f32
    %398 = vector.broadcast %cst_103 : f32 to vector<16x64xf32>
    %399 = arith.addf %398, %397 : vector<16x64xf32>
    %400 = arith.mulf %389, %399 : vector<16x64xf32>
    %401 = arith.truncf %400 : vector<16x64xf32> to vector<16x64xbf16>
    %c0_104 = arith.constant 0 : index
    %c1_105 = arith.constant 1 : index
    %c0_106 = arith.constant 0 : index
    %c0_107 = arith.constant 0 : index
    %402 = vector.load %arg3[%c0_104, %c1_105, %c0_106, %c0_107] : memref<1x2x64x32xbf16, #tpu.memory_space<vmem>>, vector<1x1x64x32xbf16>
    %403 = vector.shape_cast %402 : vector<1x1x64x32xbf16> to vector<64x32xbf16>
    %cst_108 = arith.constant dense<0.000000e+00> : vector<16x32xf32>
    %404 = tpu.matmul %401, %403, %cst_108 {dimension_numbers = #tpu.dot_dimension_numbers<[1], [0], [0], [1], [0, 0, 1, 1], [], []>} : vector<16x64xbf16>, vector<64x32xbf16>, vector<16x32xf32> -> vector<16x32xf32>
    %405 = vector.broadcast %234 : vector<1x32xf32> to vector<16x32xf32>
    %406 = arith.addf %404, %405 : vector<16x32xf32>
    %407 = arith.addf %382, %406 : vector<16x32xf32>
    %cst_109 = arith.constant dense<0.000000e+00> : vector<16xf32>
    %408 = vector.multi_reduction <add>, %407, %cst_109 [1] : vector<16x32xf32> to vector<16xf32>
    %409 = vector.shape_cast %408 : vector<16xf32> to vector<16x1xf32>
    %cst_110 = arith.constant 3.200000e+01 : f32
    %410 = vector.broadcast %cst_110 : f32 to vector<16x1xf32>
    %411 = arith.divf %409, %410 : vector<16x1xf32>
    %412 = vector.broadcast %411 : vector<16x1xf32> to vector<16x32xf32>
    %413 = arith.subf %407, %412 : vector<16x32xf32>
    %414 = arith.mulf %413, %413 : vector<16x32xf32>
    %cst_111 = arith.constant dense<0.000000e+00> : vector<16xf32>
    %415 = vector.multi_reduction <add>, %414, %cst_111 [1] : vector<16x32xf32> to vector<16xf32>
    %416 = vector.shape_cast %415 : vector<16xf32> to vector<16x1xf32>
    %cst_112 = arith.constant 3.200000e+01 : f32
    %417 = vector.broadcast %cst_112 : f32 to vector<16x1xf32>
    %418 = arith.divf %416, %417 : vector<16x1xf32>
    %cst_113 = arith.constant 9.99999996E-13 : f32
    %419 = vector.broadcast %cst_113 : f32 to vector<16x1xf32>
    %420 = arith.addf %418, %419 : vector<16x1xf32>
    %421 = math.rsqrt %420 : vector<16x1xf32>
    %422 = vector.broadcast %421 : vector<16x1xf32> to vector<16x32xf32>
    %423 = arith.mulf %413, %422 : vector<16x32xf32>
    %424 = vector.broadcast %237 : vector<1x32xf32> to vector<16x32xf32>
    %425 = arith.mulf %423, %424 : vector<16x32xf32>
    %426 = vector.broadcast %238 : vector<1x32xf32> to vector<16x32xf32>
    %427 = arith.addf %425, %426 : vector<16x32xf32>
    %428 = vector.extract_strided_slice %427 {offsets = [0, 0], sizes = [1, 32], strides = [1, 1]} : vector<16x32xf32> to vector<1x32xf32>
    %429 = vector.extract_strided_slice %427 {offsets = [8, 0], sizes = [1, 32], strides = [1, 1]} : vector<16x32xf32> to vector<1x32xf32>
    %cst_114 = arith.constant 0.000000e+00 : f32
    %430 = vector.broadcast %cst_114 : f32 to vector<6x32xf32>
    %431 = tpu.concatenate %428, %429, %430 in 0 : vector<1x32xf32>, vector<1x32xf32>, vector<6x32xf32> -> vector<8x32xf32>
    %432 = arith.truncf %431 : vector<8x32xf32> to vector<8x32xbf16>
    %c0_115 = arith.constant 0 : index
    %c0_116 = arith.constant 0 : index
    %c0_117 = arith.constant 0 : index
    %433 = vector.load %arg4[%c0_115, %c0_116, %c0_117] : memref<1x32x128xbf16, #tpu.memory_space<vmem>>, vector<1x32x128xbf16>
    %434 = vector.shape_cast %433 : vector<1x32x128xbf16> to vector<32x128xbf16>
    %cst_118 = arith.constant dense<0.000000e+00> : vector<8x128xf32>
    %435 = tpu.matmul %432, %434, %cst_118 {dimension_numbers = #tpu.dot_dimension_numbers<[1], [0], [0], [1], [0, 0, 1, 1], [], []>} : vector<8x32xbf16>, vector<32x128xbf16>, vector<8x128xf32> -> vector<8x128xf32>
    %436 = vector.extract_strided_slice %1 {offsets = [2, 0], sizes = [1, 128], strides = [1, 1]} : vector<8x128xf32> to vector<1x128xf32>
    %437 = vector.broadcast %436 : vector<1x128xf32> to vector<8x128xf32>
    %438 = arith.addf %435, %437 : vector<8x128xf32>
    %c0_119 = arith.constant 0 : index
    %c0_120 = arith.constant 0 : index
    %c0_121 = arith.constant 0 : index
    %439 = vector.load %arg7[%c0_119, %c0_120, %c0_121] : memref<1x8x128xf32, #tpu.memory_space<vmem>>, vector<1x8x128xf32>
    %440 = vector.shape_cast %439 : vector<1x8x128xf32> to vector<8x128xf32>
    %441 = vector.shape_cast %438 : vector<8x128xf32> to vector<1x8x128xf32>
    tpu.vector_store %arg7[%c0_119, %c0_120, %c0_121], %441 {strides = array<i32>} : memref<1x8x128xf32, #tpu.memory_space<vmem>>, vector<1x8x128xf32>,
    return
  }
  func.func @transform_0(%arg0: i32) -> (i32, i32, i32) {
    %c0_i32 = arith.constant 0 : i32
    %c0_i32_0 = arith.constant 0 : i32
    %c0_i32_1 = arith.constant 0 : i32
    return %arg0, %c0_i32, %c0_i32_0 : i32, i32, i32
  }
  func.func @transform_1(%arg0: i32) -> (i32, i32, i32, i32) {
    %c0_i32 = arith.constant 0 : i32
    %c0_i32_0 = arith.constant 0 : i32
    %c0_i32_1 = arith.constant 0 : i32
    %c0_i32_2 = arith.constant 0 : i32
    return %arg0, %c0_i32, %c0_i32_0, %c0_i32_1 : i32, i32, i32, i32
  }
  func.func @transform_2(%arg0: i32) -> (i32, i32, i32, i32) {
    %c0_i32 = arith.constant 0 : i32
    %c0_i32_0 = arith.constant 0 : i32
    %c0_i32_1 = arith.constant 0 : i32
    %c0_i32_2 = arith.constant 0 : i32
    return %arg0, %c0_i32, %c0_i32_0, %c0_i32_1 : i32, i32, i32, i32
  }
  func.func @transform_3(%arg0: i32) -> (i32, i32, i32) {
    %c0_i32 = arith.constant 0 : i32
    %c0_i32_0 = arith.constant 0 : i32
    %c0_i32_1 = arith.constant 0 : i32
    return %arg0, %c0_i32, %c0_i32_0 : i32, i32, i32
  }
  func.func @transform_4(%arg0: i32) -> (i32, i32, i32, i32) {
    %c0_i32 = arith.constant 0 : i32
    %c0_i32_0 = arith.constant 0 : i32
    %c0_i32_1 = arith.constant 0 : i32
    %c0_i32_2 = arith.constant 0 : i32
    return %arg0, %c0_i32, %c0_i32_0, %c0_i32_1 : i32, i32, i32, i32
  }
  func.func @transform_5(%arg0: i32) -> (i32, i32, i32) {
    %c0_i32 = arith.constant 0 : i32
    %c0_i32_0 = arith.constant 0 : i32
    %c0_i32_1 = arith.constant 0 : i32
    return %arg0, %c0_i32, %c0_i32_0 : i32, i32, i32
  }
  func.func @transform_6(%arg0: i32) -> (i32, i32, i32) {
    %c0_i32 = arith.constant 0 : i32
    %c0_i32_0 = arith.constant 0 : i32
    %c0_i32_1 = arith.constant 0 : i32
    return %arg0, %c0_i32, %c0_i32_0 : i32, i32, i32
  }
}

</mosaic_0001>

<llo_original>
// kernel: semges_dis_forward.1
$region0: #{semges_dis_forward.1}
  #allocation0 [shape = 'u32[]', space=smem, size = 0x4, offset = 0x4, fixed_abs, tag = 'smem constant byte address 0x4 - core index']
  #allocation1 [shape = 'u32[144,128]{1,0:T(1,128)}', space=vmem, size = 0x12000, scoped, tag = 'internal scratch']
  %s0 = inlined_call_operand.vmem [shape: f32[2,16,32], index: 0, kind: input, shape index: {}]
  %s1 = inlined_call_operand.vmem [shape: bf16[2,2,32,384], index: 1, kind: input, shape index: {}]
  %s2 = inlined_call_operand.vmem [shape: bf16[2,2,64,32], index: 2, kind: input, shape index: {}]
  %s3 = inlined_call_operand.vmem [shape: bf16[2,32,128], index: 3, kind: input, shape index: {}]
  %s4 = inlined_call_operand.vmem [shape: f32[2,2,8,128], index: 4, kind: input, shape index: {}]
  %s5 = inlined_call_operand.vmem [shape: f32[2,8,128], index: 5, kind: input, shape index: {}]
  %s6 = inlined_call_operand.vmem [shape: f32[2,8,128], index: 6, kind: output, shape index: {}]
  %s7 = sld [smem:[#allocation0]]
  $region57: #{semges_dis_forward.1} parent=0
    _
  %s9 = ssub.s32 1, %s7
  %s10 = scalar_select 0, %s9, %s7
  loop: start=0, step=1, limit=4
  $region2: #{semges_dis_forward.1} parent=0 // loop_pre_header
    _
  $region3: #{semges_dis_forward.1} parent=0 // loop_header
    %s12 = sphi 0, %s16
    %p13 = scmp.ge.s32.totalorder %s12, 4
    %s22 = sphi 0, %s24
    %s25 = sphi 0, %s22
    %s26 = sphi 0, %s25
    %s42 = sphi 0, %s26
    %s48 = sphi 0, %s50
    %s51 = sphi 0, %s48
    %s52 = sphi 0, %s51
    %s68 = sphi 0, %s52
    %s74 = sphi 0, %s76
    %s77 = sphi 0, %s74
    %s78 = sphi 0, %s77
    %s94 = sphi 0, %s78
    %s100 = sphi 0, %s102
    %s103 = sphi 0, %s100
    %s104 = sphi 0, %s103
    %s120 = sphi 0, %s104
    %s126 = sphi 0, %s128
    %s129 = sphi 0, %s126
    %s130 = sphi 0, %s129
    %s146 = sphi 0, %s130
    %s152 = sphi 0, %s154
    %s155 = sphi 0, %s152
    %s156 = sphi 0, %s155
    %s172 = sphi 0, %s156
    %s178 = sphi 0, %s180
    %s181 = sphi 0, %s178
    %s182 = sphi 0, %s181
    %s198 = sphi 0, %s182
  $region4: #{semges_dis_forward.1} parent=0 // loop_header_branch
    %15 = sbr.rel (%p13) target = $region8
  $region5: #{semges_dis_forward.1} parent=0 // loop_body
    %s17 = ssub.s32 %s12, 1
    %s18 = ssub.s32 %s12, 2
    %s19 = sadd.s32 %s12, 1
    %s20 = ssub.s32 %s12, %s19
    %p21 = scmp.eq.s32.totalorder %s20, 0
    %s23 = sadd.s32 %s22, 1
    %s24 = scalar_select %p21, %s22, %s23
    %p27 = pneg %p21
    %p28 = scmp.eq.s32.totalorder %s12, 1
    %p29 = por %p27, %p28
    %p30 = scmp.ne.s32.totalorder %s22, %s25
    %p31 = scmp.eq.s32.totalorder %s12, 0
    %p32 = por %p30, %p31
    %p33 = scmp.ne.s32.totalorder %s22, %s25
    %p34 = scmp.eq.s32.totalorder %s17, 1
    %p35 = por %p33, %p34
    %p36 = scmp.ne.s32.totalorder %s25, %s26
    %p37 = scmp.eq.s32.totalorder %s17, 0
    %p38 = por %p36, %p37
    %p39 = scmp.ne.s32.totalorder %s25, %s26
    %p40 = scmp.eq.s32.totalorder %s18, 1
    %p41 = por %p39, %p40
    %p43 = scmp.ne.s32.totalorder %s26, %s42
    %p44 = scmp.eq.s32.totalorder %s18, 0
    %p45 = por %p43, %p44
    %s46 = ssub.s32 %s12, %s19
    %p47 = scmp.eq.s32.totalorder %s46, 0
    %s49 = sadd.s32 %s48, 1
    %s50 = scalar_select %p47, %s48, %s49
    %p53 = pneg %p47
    %p54 = scmp.eq.s32.totalorder %s12, 1
    %p55 = por %p53, %p54
    %p56 = scmp.ne.s32.totalorder %s48, %s51
    %p57 = scmp.eq.s32.totalorder %s12, 0
    %p58 = por %p56, %p57
    %p59 = scmp.ne.s32.totalorder %s48, %s51
    %p60 = scmp.eq.s32.totalorder %s17, 1
    %p61 = por %p59, %p60
    %p62 = scmp.ne.s32.totalorder %s51, %s52
    %p63 = scmp.eq.s32.totalorder %s17, 0
    %p64 = por %p62, %p63
    %p65 = scmp.ne.s32.totalorder %s51, %s52
    %p66 = scmp.eq.s32.totalorder %s18, 1
    %p67 = por %p65, %p66
    %p69 = scmp.ne.s32.totalorder %s52, %s68
    %p70 = scmp.eq.s32.totalorder %s18, 0
    %p71 = por %p69, %p70
    %s72 = ssub.s32 %s12, %s19
    %p73 = scmp.eq.s32.totalorder %s72, 0
    %s75 = sadd.s32 %s74, 1
    %s76 = scalar_select %p73, %s74, %s75
    %p79 = pneg %p73
    %p80 = scmp.eq.s32.totalorder %s12, 1
    %p81 = por %p79, %p80
    %p82 = scmp.ne.s32.totalorder %s74, %s77
    %p83 = scmp.eq.s32.totalorder %s12, 0
    %p84 = por %p82, %p83
    %p85 = scmp.ne.s32.totalorder %s74, %s77
    %p86 = scmp.eq.s32.totalorder %s17, 1
    %p87 = por %p85, %p86
    %p88 = scmp.ne.s32.totalorder %s77, %s78
    %p89 = scmp.eq.s32.totalorder %s17, 0
    %p90 = por %p88, %p89
    %p91 = scmp.ne.s32.totalorder %s77, %s78
    %p92 = scmp.eq.s32.totalorder %s18, 1
    %p93 = por %p91, %p92
    %p95 = scmp.ne.s32.totalorder %s78, %s94
    %p96 = scmp.eq.s32.totalorder %s18, 0
    %p97 = por %p95, %p96
    %s98 = ssub.s32 %s12, %s19
    %p99 = scmp.eq.s32.totalorder %s98, 0
    %s101 = sadd.s32 %s100, 1
    %s102 = scalar_select %p99, %s100, %s101
    %p105 = pneg %p99
    %p106 = scmp.eq.s32.totalorder %s12, 1
    %p107 = por %p105, %p106
    %p108 = scmp.ne.s32.totalorder %s100, %s103
    %p109 = scmp.eq.s32.totalorder %s12, 0
    %p110 = por %p108, %p109
    %p111 = scmp.ne.s32.totalorder %s100, %s103
    %p112 = scmp.eq.s32.totalorder %s17, 1
    %p113 = por %p111, %p112
    %p114 = scmp.ne.s32.totalorder %s103, %s104
    %p115 = scmp.eq.s32.totalorder %s17, 0
    %p116 = por %p114, %p115
    %p117 = scmp.ne.s32.totalorder %s103, %s104
    %p118 = scmp.eq.s32.totalorder %s18, 1
    %p119 = por %p117, %p118
    %p121 = scmp.ne.s32.totalorder %s104, %s120
    %p122 = scmp.eq.s32.totalorder %s18, 0
    %p123 = por %p121, %p122
    %s124 = ssub.s32 %s12, %s19
    %p125 = scmp.eq.s32.totalorder %s124, 0
    %s127 = sadd.s32 %s126, 1
    %s128 = scalar_select %p125, %s126, %s127
    %p131 = pneg %p125
    %p132 = scmp.eq.s32.totalorder %s12, 1
    %p133 = por %p131, %p132
    %p134 = scmp.ne.s32.totalorder %s126, %s129
    %p135 = scmp.eq.s32.totalorder %s12, 0
    %p136 = por %p134, %p135
    %p137 = scmp.ne.s32.totalorder %s126, %s129
    %p138 = scmp.eq.s32.totalorder %s17, 1
    %p139 = por %p137, %p138
    %p140 = scmp.ne.s32.totalorder %s129, %s130
    %p141 = scmp.eq.s32.totalorder %s17, 0
    %p142 = por %p140, %p141
    %p143 = scmp.ne.s32.totalorder %s129, %s130
    %p144 = scmp.eq.s32.totalorder %s18, 1
    %p145 = por %p143, %p144
    %p147 = scmp.ne.s32.totalorder %s130, %s146
    %p148 = scmp.eq.s32.totalorder %s18, 0
    %p149 = por %p147, %p148
    %s150 = ssub.s32 %s12, %s19
    %p151 = scmp.eq.s32.totalorder %s150, 0
    %s153 = sadd.s32 %s152, 1
    %s154 = scalar_select %p151, %s152, %s153
    %p157 = pneg %p151
    %p158 = scmp.eq.s32.totalorder %s12, 1
    %p159 = por %p157, %p158
    %p160 = scmp.ne.s32.totalorder %s152, %s155
    %p161 = scmp.eq.s32.totalorder %s12, 0
    %p162 = por %p160, %p161
    %p163 = scmp.ne.s32.totalorder %s152, %s155
    %p164 = scmp.eq.s32.totalorder %s17, 1
    %p165 = por %p163, %p164
    %p166 = scmp.ne.s32.totalorder %s155, %s156
    %p167 = scmp.eq.s32.totalorder %s17, 0
    %p168 = por %p166, %p167
    %p169 = scmp.ne.s32.totalorder %s155, %s156
    %p170 = scmp.eq.s32.totalorder %s18, 1
    %p171 = por %p169, %p170
    %p173 = scmp.ne.s32.totalorder %s156, %s172
    %p174 = scmp.eq.s32.totalorder %s18, 0
    %p175 = por %p173, %p174
    %s176 = ssub.s32 %s12, %s19
    %p177 = scmp.eq.s32.totalorder %s176, 0
    %s179 = sadd.s32 %s178, 1
    %s180 = scalar_select %p177, %s178, %s179
    %p183 = pneg %p177
    %p184 = scmp.eq.s32.totalorder %s12, 1
    %p185 = por %p183, %p184
    %p186 = scmp.ne.s32.totalorder %s178, %s181
    %p187 = scmp.eq.s32.totalorder %s12, 0
    %p188 = por %p186, %p187
    %p189 = scmp.ne.s32.totalorder %s178, %s181
    %p190 = scmp.eq.s32.totalorder %s17, 1
    %p191 = por %p189, %p190
    %p192 = scmp.ne.s32.totalorder %s181, %s182
    %p193 = scmp.eq.s32.totalorder %s17, 0
    %p194 = por %p192, %p193
    %p195 = scmp.ne.s32.totalorder %s181, %s182
    %p196 = scmp.eq.s32.totalorder %s18, 1
    %p197 = por %p195, %p196
    %p199 = scmp.ne.s32.totalorder %s182, %s198
    %p200 = scmp.eq.s32.totalorder %s18, 0
    %p201 = por %p199, %p200
    %p202 = scmp.le.s32.totalorder 1, %s12
    %p203 = scmp.lt.s32.totalorder %s12, 3
    %p204 = pnand %p202, %p203
    %p205 = pneg %p204
    // Predicated region
    $region9: #{semges_dis_forward.1} parent=5 // pred_check
      _
    $region10: #{semges_dis_forward.1} parent=5 // pred_check_branch
      %207 = sbr.rel (%p204) target = $region12
    $region11: #{semges_dis_forward.1} parent=5 // pred_region
      %s208 = ssub.s32 %s12, 1
    $region12: #{semges_dis_forward.1} parent=5 // pred_fallthru
      _
    %p209 = scmp.lt.s32.totalorder %s12, 2
    // Predicated region
    $region13: #{semges_dis_forward.1} parent=5 // pred_check
      %p210 = pneg %p209
    $region14: #{semges_dis_forward.1} parent=5 // pred_check_branch
      %212 = sbr.rel (%p210) target = $region16
    $region15: #{semges_dis_forward.1} parent=5 // pred_region
      // Predicated region
      $region17: #{semges_dis_forward.1} parent=15 // pred_check
        %p213 = pneg %p32
      $region18: #{semges_dis_forward.1} parent=15 // pred_check_branch
        %215 = sbr.rel (%p213) target = $region20
      $region19: #{semges_dis_forward.1} parent=15 // pred_region
        %p216 = scmp.lt.s32.totalorder %s12, 1
        %s217 = scalar_select %p216, %s12, 1
        %s218 = smul.addr %s217, 2
        %s219 = smul.addr %s218, 8
        %s220 = scalar_lea.vmem %s0, %s219
      $region20: #{semges_dis_forward.1} parent=15 // pred_fallthru
        _
      // Predicated region
      $region21: #{semges_dis_forward.1} parent=15 // pred_check
        %p221 = pneg %p58
      $region22: #{semges_dis_forward.1} parent=15 // pred_check_branch
        %223 = sbr.rel (%p221) target = $region24
      $region23: #{semges_dis_forward.1} parent=15 // pred_region
        %p224 = scmp.lt.s32.totalorder %s12, 1
        %s225 = scalar_select %p224, %s12, 1
        %s226 = smul.addr %s225, 24
        %s227 = smul.addr %s226, 4
        %s228 = scalar_lea.vmem %s1, %s227
      $region24: #{semges_dis_forward.1} parent=15 // pred_fallthru
        _
      // Predicated region
      $region25: #{semges_dis_forward.1} parent=15 // pred_check
        %p229 = pneg %p84
      $region26: #{semges_dis_forward.1} parent=15 // pred_check_branch
        %231 = sbr.rel (%p229) target = $region28
      $region27: #{semges_dis_forward.1} parent=15 // pred_region
        %p232 = scmp.lt.s32.totalorder %s12, 1
        %s233 = scalar_select %p232, %s12, 1
        %s234 = smul.addr %s233, 16
        %s235 = smul.addr %s234, 4
        %s236 = scalar_lea.vmem %s2, %s235
      $region28: #{semges_dis_forward.1} parent=15 // pred_fallthru
        _
      // Predicated region
      $region29: #{semges_dis_forward.1} parent=15 // pred_check
        %p237 = pneg %p110
      $region30: #{semges_dis_forward.1} parent=15 // pred_check_branch
        %239 = sbr.rel (%p237) target = $region32
      $region31: #{semges_dis_forward.1} parent=15 // pred_region
        %p240 = scmp.lt.s32.totalorder %s12, 1
        %s241 = scalar_select %p240, %s12, 1
        %s242 = smul.addr %s241, 4
        %s243 = smul.addr %s242, 4
        %s244 = scalar_lea.vmem %s3, %s243
      $region32: #{semges_dis_forward.1} parent=15 // pred_fallthru
        _
      // Predicated region
      $region33: #{semges_dis_forward.1} parent=15 // pred_check
        %p245 = pneg %p136
      $region34: #{semges_dis_forward.1} parent=15 // pred_check_branch
        %247 = sbr.rel (%p245) target = $region36
      $region35: #{semges_dis_forward.1} parent=15 // pred_region
        %p248 = scmp.lt.s32.totalorder %s12, 1
        %s249 = scalar_select %p248, %s12, 1
        %s250 = smul.addr %s249, 2
        %s251 = smul.addr %s250, 8
        %s252 = scalar_lea.vmem %s4, %s251
      $region36: #{semges_dis_forward.1} parent=15 // pred_fallthru
        _
      // Predicated region
      $region37: #{semges_dis_forward.1} parent=15 // pred_check
        %p253 = pneg %p162
      $region38: #{semges_dis_forward.1} parent=15 // pred_check_branch
        %255 = sbr.rel (%p253) target = $region40
      $region39: #{semges_dis_forward.1} parent=15 // pred_region
        %p256 = scmp.lt.s32.totalorder %s12, 1
        %s257 = scalar_select %p256, %s12, 1
        %s258 = smul.addr %s257, 8
        %s259 = scalar_lea.vmem %s5, %s258
      $region40: #{semges_dis_forward.1} parent=15 // pred_fallthru
        _
    $region16: #{semges_dis_forward.1} parent=5 // pred_fallthru
      _
    %p260 = scmp.le.s32.totalorder 1, %s12
    %p261 = scmp.lt.s32.totalorder %s12, 3
    %p262 = pnand %p260, %p261
    %p263 = pneg %p262
    // Predicated region
    $region41: #{semges_dis_forward.1} parent=5 // pred_check
      _
    $region42: #{semges_dis_forward.1} parent=5 // pred_check_branch
      %265 = sbr.rel (%p262) target = $region44
    $region43: #{semges_dis_forward.1} parent=5 // pred_region
      %s266 = ssub.s32 %s12, 1
      %p267 = scmp.lt.s32.totalorder %s17, 1
      %s268 = scalar_select %p267, %s17, 1
      %s269 = smul.addr %s268, 2
      %s270 = smul.addr %s269, 8
      %s271 = scalar_lea.vmem %s0, %s270
      %p272 = pneg %p38
      %p273 = pneg %p35
      %p274 = scmp.lt.s32.totalorder %s17, 1
      %s275 = scalar_select %p274, %s17, 1
      %s276 = smul.addr %s275, 24
      %s277 = smul.addr %s276, 4
      %s278 = scalar_lea.vmem %s1, %s277
      %p279 = pneg %p64
      %p280 = pneg %p61
      %p281 = scmp.lt.s32.totalorder %s17, 1
      %s282 = scalar_select %p281, %s17, 1
      %s283 = smul.addr %s282, 16
      %s284 = smul.addr %s283, 4
      %s285 = scalar_lea.vmem %s2, %s284
      %p286 = pneg %p90
      %p287 = pneg %p87
      %p288 = scmp.lt.s32.totalorder %s17, 1
      %s289 = scalar_select %p288, %s17, 1
      %s290 = smul.addr %s289, 4
      %s291 = smul.addr %s290, 4
      %s292 = scalar_lea.vmem %s3, %s291
      %p293 = pneg %p116
      %p294 = pneg %p113
      %p295 = scmp.lt.s32.totalorder %s17, 1
      %s296 = scalar_select %p295, %s17, 1
      %s297 = smul.addr %s296, 2
      %s298 = smul.addr %s297, 8
      %s299 = scalar_lea.vmem %s4, %s298
      %p300 = pneg %p142
      %p301 = pneg %p139
      %p302 = scmp.lt.s32.totalorder %s17, 1
      %s303 = scalar_select %p302, %s17, 1
      %s304 = smul.addr %s303, 8
      %s305 = scalar_lea.vmem %s5, %s304
      %p306 = pneg %p168
      %p307 = pneg %p165
      %p308 = pneg %p194
      %p309 = pneg %p191
      %p310 = scmp.lt.s32.totalorder %s17, 1
      %s311 = scalar_select %p310, %s17, 1
      %s312 = smul.addr %s311, 8
      %s313 = scalar_lea.vmem %s6, %s312
      %p314 = scmp.lt.s32.totalorder %s17, 1
      %s315 = scalar_select %p314, %s17, 1
      %s316 = smul.addr %s315, 2
      %s317 = smul.addr %s316, 8
      %s318 = scalar_lea.vmem %s0, %s317
      %p319 = scmp.lt.s32.totalorder %s17, 1
      %s320 = scalar_select %p319, %s17, 1
      %s321 = smul.addr %s320, 24
      %s322 = smul.addr %s321, 4
      %s323 = scalar_lea.vmem %s1, %s322
      %p324 = scmp.lt.s32.totalorder %s17, 1
      %s325 = scalar_select %p324, %s17, 1
      %s326 = smul.addr %s325, 16
      %s327 = smul.addr %s326, 4
      %s328 = scalar_lea.vmem %s2, %s327
      %p329 = scmp.lt.s32.totalorder %s17, 1
      %s330 = scalar_select %p329, %s17, 1
      %s331 = smul.addr %s330, 4
      %s332 = smul.addr %s331, 4
      %s333 = scalar_lea.vmem %s3, %s332
      %p334 = scmp.lt.s32.totalorder %s17, 1
      %s335 = scalar_select %p334, %s17, 1
      %s336 = smul.addr %s335, 2
      %s337 = smul.addr %s336, 8
      %s338 = scalar_lea.vmem %s4, %s337
      %p339 = scmp.lt.s32.totalorder %s17, 1
      %s340 = scalar_select %p339, %s17, 1
      %s341 = smul.addr %s340, 8
      %s342 = scalar_lea.vmem %s5, %s341
      %p343 = scmp.lt.s32.totalorder %s17, 1
      %s344 = scalar_select %p343, %s17, 1
      %s345 = smul.addr %s344, 8
      %s346 = scalar_lea.vmem %s6, %s345
      %v348 = vld [vmem:[%s342] sm:$0xff]
      %v349 = vld [vmem:[%s318] sm:$0xff]
      %v350 = vld [vmem:[%s318 + $0x8] sm:$0xff]
      %vm351 = vcmask 261120
      %v352 = vsel %vm351, %v349, 0.0
      %353 = vadd.xlane.f32.xlu0 %v352
      %v354 = vpop.xlane.xlu0 %353
      %v355 = vsel %vm351, %v350, 0.0
      %356 = vadd.xlane.f32.xlu0 %v355
      %v357 = vpop.xlane.xlu0 %356
      %v358 = vrcp.pop 32.0
      %v359 = vmul.f32 %v354, %v358
      %v360 = vmul.f32 %v357, %v358
      %v361 = vsub.f32 %v349, %v359
      %v362 = vsub.f32 %v350, %v360
      %v363 = vmul.f32 %v361, %v361
      %v364 = vmul.f32 %v362, %v362
      %v365 = vsel %vm351, %v363, 0.0
      %366 = vadd.xlane.f32.xlu0 %v365
      %v367 = vpop.xlane.xlu0 %366
      %v368 = vsel %vm351, %v364, 0.0
      %369 = vadd.xlane.f32.xlu0 %v368
      %v370 = vpop.xlane.xlu0 %369
      %v371 = vmul.f32 %v367, %v358
      %v372 = vmul.f32 %v370, %v358
      %v373 = vadd.f32 %v371, 1e-12
      %v374 = vadd.f32 %v372, 1e-12
      %v375 = vrsqrt.pop %v373
      %v376 = vrsqrt.pop %v374
      %v377 = vmul.f32 %v361, %v375
      %v378 = vmul.f32 %v362, %v376
      %v379 = vlaneseq
      %v380 = vshrl.u32 %v379, 7
      %v381 = vsub.s32 0, %v380
      %v382 = vrot.slane %v348, %v381
      %v383 = vmul.f32 %v377, %v382
      %v384 = vmul.f32 %v378, %v382
      %v385 = vlaneseq
      %v386 = vshrl.u32 %v385, 7
      %v387 = vsub.s32 1, %v386
      %v388 = vrot.slane %v348, %v387
      %v389 = vadd.f32 %v383, %v388
      %v390 = vadd.f32 %v384, %v388
      %v391 = vld [vmem:[%s323] sm:$0xff]
      %v392 = vld [vmem:[%s323 + $0x8] sm:$0xf]
      %v393 = vld [vmem:[%s323 + $0xc] sm:$0xff]
      %v394 = vld [vmem:[%s323 + $0x14] sm:$0xf]
      %v395 = vld [vmem:[%s323 + $0x18] sm:$0xff]
      %v396 = vld [vmem:[%s323 + $0x20] sm:$0xf]
      %v397 = vld [vmem:[%s323 + $0x24] sm:$0xff]
      %v398 = vld [vmem:[%s323 + $0x2c] sm:$0xf]
      %v399 = vld [vmem:[%s338] sm:$0xff]
      %v400 = vpack.c.bf16 %v390, %v389
      %v401 = vlaneseq
      %v402 = vshrl.u32 %v401, 7
      %v403 = vsub.s32 0, %v402
      %v404 = vrot.slane %v399, %v403
      %v409 = vunpack.c.l.b16 %v391
      %v410 = vunpack.c.l.b16 %v393
      %v411 = vunpack.c.l.b16 %v395
      %v412 = vunpack.c.l.b16 %v397
      %v413 = vpack.c.b16 %v410, %v409
      %v414 = vpack.c.b16 %v412, %v411
      %v418 = vsel %vm351, %v400, 0
      %420 = vmatprep.subr.bf16.mxu0 0
      %421 = vmatpush1.bf16.msra.mxu0 0
      %422 = vmatprep.subr.bf16.mxu0 0
      %423 = vmatpush1.bf16.msra.mxu0 0
      %424 = vmatprep.subr.bf16.mxu0 0
      %425 = vmatpush1.bf16.msra.mxu0 0
      %426 = vmatprep.subr.bf16.mxu0 0
      %427 = vmatpush1.bf16.msra.mxu0 0
      %428 = vmatprep.subr.bf16.mxu0 0
      %429 = vmatpush1.bf16.msra.mxu0 0
      %430 = vmatprep.subr.bf16.mxu0 0
      %431 = vmatpush1.bf16.msra.mxu0 0
      %432 = vmatprep.subr.bf16.mxu0 0
      %433 = vmatpush1.bf16.msra.mxu0 %v414
      %434 = vmatprep.subr.bf16.mxu0 0
      %435 = vmatpush1.bf16.msra.mxu0 %v413
      %436 = vmatprep.subr.bf16.mxu0 0
      %437 = vmatpush2.bf16.msra.mxu0 0
      %438 = vmatprep.subr.bf16.mxu0 0
      %439 = vmatpush2.bf16.msra.mxu0 0
      %440 = vmatprep.subr.bf16.mxu0 0
      %441 = vmatpush2.bf16.msra.mxu0 0
      %442 = vmatprep.subr.bf16.mxu0 0
      %443 = vmatpush2.bf16.msra.mxu0 0
      %444 = vmatprep.subr.bf16.mxu0 0
      %445 = vmatpush2.bf16.msra.mxu0 0
      %446 = vmatprep.subr.bf16.mxu0 0
      %447 = vmatpush2.bf16.msra.mxu0 0
      %448 = vmatprep.subr.bf16.mxu0 0
      %449 = vmatpush2.bf16.msra.mxu0 0
      %450 = vmatprep.subr.bf16.mxu0 0
      %451 = vmatpush2.bf16.msra.mxu0 0
      %452 = vmatprep.mubr.bf16.mxu0 0
      %453 = vmatmul.mubr.bf16.gmra.mxu0 %v418
      %v454 = vpop.f32.mrf.mxu0
      %v455 = vadd.f32 %v404, %v454
      %v456 = vpop.f32.mrf.mxu0
      %v457 = vpop.f32.mrf.mxu0
      %v458 = vadd.f32 %v404, %v457
      %v459 = vpop.f32.mrf.mxu0
      %460 = vdwg.mxu0
      %v461 = vpack.c.bf16 %v455, %v455
      %v462 = vpack.c.bf16 %v458, %v458
      %464 = vrot.lane.b32.xlu0 %v461, 96
      %v465 = vpop.permute.xlu0 %464
      %vm466 = vcmask 64512
      %v468 = vsel %vm466, %v461, 0
      %v471 = vsel %vm466, %v465, 0
      %473 = vmatprep.subr.bf16.mxu0 0
      %474 = vmatpush1.bf16.xpose.msra.mxu0 0
      %475 = vmatprep.subr.bf16.mxu0 0
      %476 = vmatpush1.bf16.xpose.msra.mxu0 0
      %477 = vmatprep.subr.bf16.mxu0 0
      %478 = vmatpush1.bf16.xpose.msra.mxu0 0
      %479 = vmatprep.subr.bf16.mxu0 0
      %480 = vmatpush1.bf16.xpose.msra.mxu0 0
      %481 = vmatprep.subr.bf16.mxu0 0
      %482 = vmatpush1.bf16.xpose.msra.mxu0 0
      %483 = vmatprep.subr.bf16.mxu0 0
      %484 = vmatpush1.bf16.xpose.msra.mxu0 0
      %485 = vmatprep.subr.bf16.mxu0 0
      %486 = vmatpush1.bf16.xpose.msra.mxu0 0
      %487 = vmatprep.subr.bf16.mxu0 0
      %488 = vmatpush1.bf16.xpose.msra.mxu0 %v471
      %489 = vmatprep.subr.bf16.mxu0 0
      %490 = vmatpush2.bf16.xpose.msra.mxu0 0
      %491 = vmatprep.subr.bf16.mxu0 0
      %492 = vmatpush2.bf16.xpose.msra.mxu0 0
      %493 = vmatprep.subr.bf16.mxu0 0
      %494 = vmatpush2.bf16.xpose.msra.mxu0 0
      %495 = vmatprep.subr.bf16.mxu0 0
      %496 = vmatpush2.bf16.xpose.msra.mxu0 0
      %497 = vmatprep.subr.bf16.mxu0 0
      %498 = vmatpush2.bf16.xpose.msra.mxu0 0
      %499 = vmatprep.subr.bf16.mxu0 0
      %500 = vmatpush2.bf16.xpose.msra.mxu0 0
      %501 = vmatprep.subr.bf16.mxu0 0
      %502 = vmatpush2.bf16.xpose.msra.mxu0 0
      %503 = vmatprep.subr.bf16.mxu0 0
      %504 = vmatpush2.bf16.xpose.msra.mxu0 0
      %505 = vmatprep.mubr.bf16.mxu0 0
      %506 = vmatmul.mubr.bf16.gmra.mxu0 %v468
      %v507 = vpop.f32.mrf.mxu0
      %v508 = vadd.f32 0.0, %v507
      %v509 = vpop.f32.mrf.mxu0
      %v510 = vpop.f32.mrf.mxu0
      %v511 = vpop.f32.mrf.mxu0
      %512 = vdwg.mxu0
      %514 = vrot.lane.b32.xlu0 %v462, 96
      %v515 = vpop.permute.xlu0 %514
      %v517 = vsel %vm466, %v462, 0
      %v520 = vsel %vm466, %v515, 0
      %522 = vmatprep.subr.bf16.mxu0 0
      %523 = vmatpush1.bf16.xpose.msra.mxu0 0
      %524 = vmatprep.subr.bf16.mxu0 0
      %525 = vmatpush1.bf16.xpose.msra.mxu0 0
      %526 = vmatprep.subr.bf16.mxu0 0
      %527 = vmatpush1.bf16.xpose.msra.mxu0 0
      %528 = vmatprep.subr.bf16.mxu0 0
      %529 = vmatpush1.bf16.xpose.msra.mxu0 0
      %530 = vmatprep.subr.bf16.mxu0 0
      %531 = vmatpush1.bf16.xpose.msra.mxu0 0
      %532 = vmatprep.subr.bf16.mxu0 0
      %533 = vmatpush1.bf16.xpose.msra.mxu0 0
      %534 = vmatprep.subr.bf16.mxu0 0
      %535 = vmatpush1.bf16.xpose.msra.mxu0 0
      %536 = vmatprep.subr.bf16.mxu0 0
      %537 = vmatpush1.bf16.xpose.msra.mxu0 %v520
      %538 = vmatprep.subr.bf16.mxu0 0
      %539 = vmatpush2.bf16.xpose.msra.mxu0 0
      %540 = vmatprep.subr.bf16.mxu0 0
      %541 = vmatpush2.bf16.xpose.msra.mxu0 0
      %542 = vmatprep.subr.bf16.mxu0 0
      %543 = vmatpush2.bf16.xpose.msra.mxu0 0
      %544 = vmatprep.subr.bf16.mxu0 0
      %545 = vmatpush2.bf16.xpose.msra.mxu0 0
      %546 = vmatprep.subr.bf16.mxu0 0
      %547 = vmatpush2.bf16.xpose.msra.mxu0 0
      %548 = vmatprep.subr.bf16.mxu0 0
      %549 = vmatpush2.bf16.xpose.msra.mxu0 0
      %550 = vmatprep.subr.bf16.mxu0 0
      %551 = vmatpush2.bf16.xpose.msra.mxu0 0
      %552 = vmatprep.subr.bf16.mxu0 0
      %553 = vmatpush2.bf16.xpose.msra.mxu0 0
      %554 = vmatprep.mubr.bf16.mxu0 0
      %555 = vmatmul.mubr.bf16.gmra.mxu0 %v517
      %v556 = vpop.f32.mrf.mxu0
      %v557 = vadd.f32 0.0, %v556
      %v558 = vpop.f32.mrf.mxu0
      %v559 = vpop.f32.mrf.mxu0
      %v560 = vpop.f32.mrf.mxu0
      %561 = vdwg.mxu0
      %v562 = vmul.f32 %v508, 0.35355338
      %v563 = vmul.f32 %v557, 0.35355338
      %v564 = vsel %vm466, %v562, -inf
      %565 = vmax.xlane.f32.xlu0 %v564
      %v566 = vpop.xlane.xlu0 %565
      %v567 = vsel %vm466, %v563, -inf
      %568 = vmax.xlane.f32.xlu0 %v567
      %v569 = vpop.xlane.xlu0 %568
      %v570 = vsub.f32 %v562, %v566
      %v571 = vsub.f32 %v563, %v569
      %v572 = vmul.f32 %v570, 1.442695
      %v573 = vpow.pop %v572
      %v574 = vmul.f32 %v571, 1.442695
      %v575 = vpow.pop %v574
      %v576 = vsel %vm466, %v573, 0.0
      %577 = vadd.xlane.f32.xlu0 %v576
      %v578 = vpop.xlane.xlu0 %577
      %v579 = vsel %vm466, %v575, 0.0
      %580 = vadd.xlane.f32.xlu0 %v579
      %v581 = vpop.xlane.xlu0 %580
      %v582 = vrcp.pop %v578
      %v583 = vrcp.pop %v581
      %v584 = vmul.f32 %v573, %v582
      %v585 = vmul.f32 %v575, %v583
      %v586 = vpack.c.bf16 %v584, %v584
      %v587 = vpack.c.bf16 %v585, %v585
      %588 = vrot.lane.b32.xlu0 %v461, 64
      %v589 = vpop.permute.xlu0 %588
      %v591 = vsel %vm466, %v586, 0
      %vm593 = vcmask 1043456
      %v595 = vsel %vm593, %v589, 0
      %597 = vmatprep.subr.bf16.mxu0 0
      %598 = vmatpush1.bf16.msra.mxu0 0
      %599 = vmatprep.subr.bf16.mxu0 0
      %600 = vmatpush1.bf16.msra.mxu0 0
      %601 = vmatprep.subr.bf16.mxu0 0
      %602 = vmatpush1.bf16.msra.mxu0 0
      %603 = vmatprep.subr.bf16.mxu0 0
      %604 = vmatpush1.bf16.msra.mxu0 0
      %605 = vmatprep.subr.bf16.mxu0 0
      %606 = vmatpush1.bf16.msra.mxu0 0
      %607 = vmatprep.subr.bf16.mxu0 0
      %608 = vmatpush1.bf16.msra.mxu0 0
      %609 = vmatprep.subr.bf16.mxu0 0
      %610 = vmatpush1.bf16.msra.mxu0 0
      %611 = vmatprep.subr.bf16.mxu0 0
      %612 = vmatpush1.bf16.msra.mxu0 %v595
      %613 = vmatprep.subr.bf16.mxu0 0
      %614 = vmatpush2.bf16.msra.mxu0 0
      %615 = vmatprep.subr.bf16.mxu0 0
      %616 = vmatpush2.bf16.msra.mxu0 0
      %617 = vmatprep.subr.bf16.mxu0 0
      %618 = vmatpush2.bf16.msra.mxu0 0
      %619 = vmatprep.subr.bf16.mxu0 0
      %620 = vmatpush2.bf16.msra.mxu0 0
      %621 = vmatprep.subr.bf16.mxu0 0
      %622 = vmatpush2.bf16.msra.mxu0 0
      %623 = vmatprep.subr.bf16.mxu0 0
      %624 = vmatpush2.bf16.msra.mxu0 0
      %625 = vmatprep.subr.bf16.mxu0 0
      %626 = vmatpush2.bf16.msra.mxu0 0
      %627 = vmatprep.subr.bf16.mxu0 0
      %628 = vmatpush2.bf16.msra.mxu0 0
      %629 = vmatprep.mubr.bf16.mxu0 0
      %630 = vmatmul.mubr.bf16.gmra.mxu0 %v591
      %v631 = vpop.f32.mrf.mxu0
      %v632 = vadd.f32 0.0, %v631
      %v633 = vpop.f32.mrf.mxu0
      %v634 = vpop.f32.mrf.mxu0
      %v635 = vpop.f32.mrf.mxu0
      %636 = vdwg.mxu0
      %637 = vrot.lane.b32.xlu0 %v462, 64
      %v638 = vpop.permute.xlu0 %637
      %v640 = vsel %vm466, %v587, 0
      %v643 = vsel %vm593, %v638, 0
      %645 = vmatprep.subr.bf16.mxu0 0
      %646 = vmatpush1.bf16.msra.mxu0 0
      %647 = vmatprep.subr.bf16.mxu0 0
      %648 = vmatpush1.bf16.msra.mxu0 0
      %649 = vmatprep.subr.bf16.mxu0 0
      %650 = vmatpush1.bf16.msra.mxu0 0
      %651 = vmatprep.subr.bf16.mxu0 0
      %652 = vmatpush1.bf16.msra.mxu0 0
      %653 = vmatprep.subr.bf16.mxu0 0
      %654 = vmatpush1.bf16.msra.mxu0 0
      %655 = vmatprep.subr.bf16.mxu0 0
      %656 = vmatpush1.bf16.msra.mxu0 0
      %657 = vmatprep.subr.bf16.mxu0 0
      %658 = vmatpush1.bf16.msra.mxu0 0
      %659 = vmatprep.subr.bf16.mxu0 0
      %660 = vmatpush1.bf16.msra.mxu0 %v643
      %661 = vmatprep.subr.bf16.mxu0 0
      %662 = vmatpush2.bf16.msra.mxu0 0
      %663 = vmatprep.subr.bf16.mxu0 0
      %664 = vmatpush2.bf16.msra.mxu0 0
      %665 = vmatprep.subr.bf16.mxu0 0
      %666 = vmatpush2.bf16.msra.mxu0 0
      %667 = vmatprep.subr.bf16.mxu0 0
      %668 = vmatpush2.bf16.msra.mxu0 0
      %669 = vmatprep.subr.bf16.mxu0 0
      %670 = vmatpush2.bf16.msra.mxu0 0
      %671 = vmatprep.subr.bf16.mxu0 0
      %672 = vmatpush2.bf16.msra.mxu0 0
      %673 = vmatprep.subr.bf16.mxu0 0
      %674 = vmatpush2.bf16.msra.mxu0 0
      %675 = vmatprep.subr.bf16.mxu0 0
      %676 = vmatpush2.bf16.msra.mxu0 0
      %677 = vmatprep.mubr.bf16.mxu0 0
      %678 = vmatmul.mubr.bf16.gmra.mxu0 %v640
      %v679 = vpop.f32.mrf.mxu0
      %v680 = vadd.f32 0.0, %v679
      %v681 = vpop.f32.mrf.mxu0
      %v682 = vpop.f32.mrf.mxu0
      %v683 = vpop.f32.mrf.mxu0
      %684 = vdwg.mxu0
      %v685 = vpack.c.bf16 %v680, %v632
      %686 = vrot.lane.b32.xlu0 %v461, 120
      %v687 = vpop.permute.xlu0 %686
      %688 = vrot.lane.b32.xlu0 %v461, 88
      %v689 = vpop.permute.xlu0 %688
      %v691 = vsel %vm466, %v687, 0
      %v694 = vsel %vm466, %v689, 0
      %696 = vmatprep.subr.bf16.mxu0 0
      %697 = vmatpush1.bf16.xpose.msra.mxu0 0
      %698 = vmatprep.subr.bf16.mxu0 0
      %699 = vmatpush1.bf16.xpose.msra.mxu0 0
      %700 = vmatprep.subr.bf16.mxu0 0
      %701 = vmatpush1.bf16.xpose.msra.mxu0 0
      %702 = vmatprep.subr.bf16.mxu0 0
      %703 = vmatpush1.bf16.xpose.msra.mxu0 0
      %704 = vmatprep.subr.bf16.mxu0 0
      %705 = vmatpush1.bf16.xpose.msra.mxu0 0
      %706 = vmatprep.subr.bf16.mxu0 0
      %707 = vmatpush1.bf16.xpose.msra.mxu0 0
      %708 = vmatprep.subr.bf16.mxu0 0
      %709 = vmatpush1.bf16.xpose.msra.mxu0 0
      %710 = vmatprep.subr.bf16.mxu0 0
      %711 = vmatpush1.bf16.xpose.msra.mxu0 %v694
      %712 = vmatprep.subr.bf16.mxu0 0
      %713 = vmatpush2.bf16.xpose.msra.mxu0 0
      %714 = vmatprep.subr.bf16.mxu0 0
      %715 = vmatpush2.bf16.xpose.msra.mxu0 0
      %716 = vmatprep.subr.bf16.mxu0 0
      %717 = vmatpush2.bf16.xpose.msra.mxu0 0
      %718 = vmatprep.subr.bf16.mxu0 0
      %719 = vmatpush2.bf16.xpose.msra.mxu0 0
      %720 = vmatprep.subr.bf16.mxu0 0
      %721 = vmatpush2.bf16.xpose.msra.mxu0 0
      %722 = vmatprep.subr.bf16.mxu0 0
      %723 = vmatpush2.bf16.xpose.msra.mxu0 0
      %724 = vmatprep.subr.bf16.mxu0 0
      %725 = vmatpush2.bf16.xpose.msra.mxu0 0
      %726 = vmatprep.subr.bf16.mxu0 0
      %727 = vmatpush2.bf16.xpose.msra.mxu0 0
      %728 = vmatprep.mubr.bf16.mxu0 0
      %729 = vmatmul.mubr.bf16.gmra.mxu0 %v691
      %v730 = vpop.f32.mrf.mxu0
      %v731 = vadd.f32 0.0, %v730
      %v732 = vpop.f32.mrf.mxu0
      %v733 = vpop.f32.mrf.mxu0
      %v734 = vpop.f32.mrf.mxu0
      %735 = vdwg.mxu0
      %736 = vrot.lane.b32.xlu0 %v462, 120
      %v737 = vpop.permute.xlu0 %736
      %738 = vrot.lane.b32.xlu0 %v462, 88
      %v739 = vpop.permute.xlu0 %738
      %v741 = vsel %vm466, %v737, 0
      %v744 = vsel %vm466, %v739, 0
      %746 = vmatprep.subr.bf16.mxu0 0
      %747 = vmatpush1.bf16.xpose.msra.mxu0 0
      %748 = vmatprep.subr.bf16.mxu0 0
      %749 = vmatpush1.bf16.xpose.msra.mxu0 0
      %750 = vmatprep.subr.bf16.mxu0 0
      %751 = vmatpush1.bf16.xpose.msra.mxu0 0
      %752 = vmatprep.subr.bf16.mxu0 0
      %753 = vmatpush1.bf16.xpose.msra.mxu0 0
      %754 = vmatprep.subr.bf16.mxu0 0
      %755 = vmatpush1.bf16.xpose.msra.mxu0 0
      %756 = vmatprep.subr.bf16.mxu0 0
      %757 = vmatpush1.bf16.xpose.msra.mxu0 0
      %758 = vmatprep.subr.bf16.mxu0 0
      %759 = vmatpush1.bf16.xpose.msra.mxu0 0
      %760 = vmatprep.subr.bf16.mxu0 0
      %761 = vmatpush1.bf16.xpose.msra.mxu0 %v744
      %762 = vmatprep.subr.bf16.mxu0 0
      %763 = vmatpush2.bf16.xpose.msra.mxu0 0
      %764 = vmatprep.subr.bf16.mxu0 0
      %765 = vmatpush2.bf16.xpose.msra.mxu0 0
      %766 = vmatprep.subr.bf16.mxu0 0
      %767 = vmatpush2.bf16.xpose.msra.mxu0 0
      %768 = vmatprep.subr.bf16.mxu0 0
      %769 = vmatpush2.bf16.xpose.msra.mxu0 0
      %770 = vmatprep.subr.bf16.mxu0 0
      %771 = vmatpush2.bf16.xpose.msra.mxu0 0
      %772 = vmatprep.subr.bf16.mxu0 0
      %773 = vmatpush2.bf16.xpose.msra.mxu0 0
      %774 = vmatprep.subr.bf16.mxu0 0
      %775 = vmatpush2.bf16.xpose.msra.mxu0 0
      %776 = vmatprep.subr.bf16.mxu0 0
      %777 = vmatpush2.bf16.xpose.msra.mxu0 0
      %778 = vmatprep.mubr.bf16.mxu0 0
      %779 = vmatmul.mubr.bf16.gmra.mxu0 %v741
      %v780 = vpop.f32.mrf.mxu0
      %v781 = vadd.f32 0.0, %v780
      %v782 = vpop.f32.mrf.mxu0
      %v783 = vpop.f32.mrf.mxu0
      %v784 = vpop.f32.mrf.mxu0
      %785 = vdwg.mxu0
      %v786 = vmul.f32 %v731, 0.35355338
      %v787 = vmul.f32 %v781, 0.35355338
      %v788 = vsel %vm466, %v786, -inf
      %789 = vmax.xlane.f32.xlu0 %v788
      %v790 = vpop.xlane.xlu0 %789
      %v791 = vsel %vm466, %v787, -inf
      %792 = vmax.xlane.f32.xlu0 %v791
      %v793 = vpop.xlane.xlu0 %792
      %v794 = vsub.f32 %v786, %v790
      %v795 = vsub.f32 %v787, %v793
      %v796 = vmul.f32 %v794, 1.442695
      %v797 = vpow.pop %v796
      %v798 = vmul.f32 %v795, 1.442695
      %v799 = vpow.pop %v798
      %v800 = vsel %vm466, %v797, 0.0
      %801 = vadd.xlane.f32.xlu0 %v800
      %v802 = vpop.xlane.xlu0 %801
      %v803 = vsel %vm466, %v799, 0.0
      %804 = vadd.xlane.f32.xlu0 %v803
      %v805 = vpop.xlane.xlu0 %804
      %v806 = vrcp.pop %v802
      %v807 = vrcp.pop %v805
      %v808 = vmul.f32 %v797, %v806
      %v809 = vmul.f32 %v799, %v807
      %v810 = vpack.c.bf16 %v808, %v808
      %v811 = vpack.c.bf16 %v809, %v809
      %812 = vrot.lane.b32.xlu0 %v461, 56
      %v813 = vpop.permute.xlu0 %812
      %v815 = vsel %vm466, %v810, 0
      %v818 = vsel %vm593, %v813, 0
      %820 = vmatprep.subr.bf16.mxu0 0
      %821 = vmatpush1.bf16.msra.mxu0 0
      %822 = vmatprep.subr.bf16.mxu0 0
      %823 = vmatpush1.bf16.msra.mxu0 0
      %824 = vmatprep.subr.bf16.mxu0 0
      %825 = vmatpush1.bf16.msra.mxu0 0
      %826 = vmatprep.subr.bf16.mxu0 0
      %827 = vmatpush1.bf16.msra.mxu0 0
      %828 = vmatprep.subr.bf16.mxu0 0
      %829 = vmatpush1.bf16.msra.mxu0 0
      %830 = vmatprep.subr.bf16.mxu0 0
      %831 = vmatpush1.bf16.msra.mxu0 0
      %832 = vmatprep.subr.bf16.mxu0 0
      %833 = vmatpush1.bf16.msra.mxu0 0
      %834 = vmatprep.subr.bf16.mxu0 0
      %835 = vmatpush1.bf16.msra.mxu0 %v818
      %836 = vmatprep.subr.bf16.mxu0 0
      %837 = vmatpush2.bf16.msra.mxu0 0
      %838 = vmatprep.subr.bf16.mxu0 0
      %839 = vmatpush2.bf16.msra.mxu0 0
      %840 = vmatprep.subr.bf16.mxu0 0
      %841 = vmatpush2.bf16.msra.mxu0 0
      %842 = vmatprep.subr.bf16.mxu0 0
      %843 = vmatpush2.bf16.msra.mxu0 0
      %844 = vmatprep.subr.bf16.mxu0 0
      %845 = vmatpush2.bf16.msra.mxu0 0
      %846 = vmatprep.subr.bf16.mxu0 0
      %847 = vmatpush2.bf16.msra.mxu0 0
      %848 = vmatprep.subr.bf16.mxu0 0
      %849 = vmatpush2.bf16.msra.mxu0 0
      %850 = vmatprep.subr.bf16.mxu0 0
      %851 = vmatpush2.bf16.msra.mxu0 0
      %852 = vmatprep.mubr.bf16.mxu0 0
      %853 = vmatmul.mubr.bf16.gmra.mxu0 %v815
      %v854 = vpop.f32.mrf.mxu0
      %v855 = vadd.f32 0.0, %v854
      %v856 = vpop.f32.mrf.mxu0
      %v857 = vpop.f32.mrf.mxu0
      %v858 = vpop.f32.mrf.mxu0
      %859 = vdwg.mxu0
      %860 = vrot.lane.b32.xlu0 %v462, 56
      %v861 = vpop.permute.xlu0 %860
      %v863 = vsel %vm466, %v811, 0
      %v866 = vsel %vm593, %v861, 0
      %868 = vmatprep.subr.bf16.mxu0 0
      %869 = vmatpush1.bf16.msra.mxu0 0
      %870 = vmatprep.subr.bf16.mxu0 0
      %871 = vmatpush1.bf16.msra.mxu0 0
      %872 = vmatprep.subr.bf16.mxu0 0
      %873 = vmatpush1.bf16.msra.mxu0 0
      %874 = vmatprep.subr.bf16.mxu0 0
      %875 = vmatpush1.bf16.msra.mxu0 0
      %876 = vmatprep.subr.bf16.mxu0 0
      %877 = vmatpush1.bf16.msra.mxu0 0
      %878 = vmatprep.subr.bf16.mxu0 0
      %879 = vmatpush1.bf16.msra.mxu0 0
      %880 = vmatprep.subr.bf16.mxu0 0
      %881 = vmatpush1.bf16.msra.mxu0 0
      %882 = vmatprep.subr.bf16.mxu0 0
      %883 = vmatpush1.bf16.msra.mxu0 %v866
      %884 = vmatprep.subr.bf16.mxu0 0
      %885 = vmatpush2.bf16.msra.mxu0 0
      %886 = vmatprep.subr.bf16.mxu0 0
      %887 = vmatpush2.bf16.msra.mxu0 0
      %888 = vmatprep.subr.bf16.mxu0 0
      %889 = vmatpush2.bf16.msra.mxu0 0
      %890 = vmatprep.subr.bf16.mxu0 0
      %891 = vmatpush2.bf16.msra.mxu0 0
      %892 = vmatprep.subr.bf16.mxu0 0
      %893 = vmatpush2.bf16.msra.mxu0 0
      %894 = vmatprep.subr.bf16.mxu0 0
      %895 = vmatpush2.bf16.msra.mxu0 0
      %896 = vmatprep.subr.bf16.mxu0 0
      %897 = vmatpush2.bf16.msra.mxu0 0
      %898 = vmatprep.subr.bf16.mxu0 0
      %899 = vmatpush2.bf16.msra.mxu0 0
      %900 = vmatprep.mubr.bf16.mxu0 0
      %901 = vmatmul.mubr.bf16.gmra.mxu0 %v863
      %v902 = vpop.f32.mrf.mxu0
      %v903 = vadd.f32 0.0, %v902
      %v904 = vpop.f32.mrf.mxu0
      %v905 = vpop.f32.mrf.mxu0
      %v906 = vpop.f32.mrf.mxu0
      %907 = vdwg.mxu0
      %v908 = vpack.c.bf16 %v903, %v855
      %v909 = vunpack.c.h.b16 %v393
      %v910 = vpack.c.b16 %v909, %v909
      %v912 = vsel %vm466, %v908, 0
      %v915 = vsel %vm593, %v910, 0
      %917 = vmatprep.subr.bf16.mxu0 0
      %918 = vmatpush1.bf16.msra.mxu0 0
      %919 = vmatprep.subr.bf16.mxu0 0
      %920 = vmatpush1.bf16.msra.mxu0 0
      %921 = vmatprep.subr.bf16.mxu0 0
      %922 = vmatpush1.bf16.msra.mxu0 0
      %923 = vmatprep.subr.bf16.mxu0 0
      %924 = vmatpush1.bf16.msra.mxu0 0
      %925 = vmatprep.subr.bf16.mxu0 0
      %926 = vmatpush1.bf16.msra.mxu0 0
      %927 = vmatprep.subr.bf16.mxu0 0
      %928 = vmatpush1.bf16.msra.mxu0 0
      %929 = vmatprep.subr.bf16.mxu0 0
      %930 = vmatpush1.bf16.msra.mxu0 0
      %931 = vmatprep.subr.bf16.mxu0 0
      %932 = vmatpush1.bf16.msra.mxu0 %v915
      %933 = vmatprep.subr.bf16.mxu0 0
      %934 = vmatpush2.bf16.msra.mxu0 0
      %935 = vmatprep.subr.bf16.mxu0 0
      %936 = vmatpush2.bf16.msra.mxu0 0
      %937 = vmatprep.subr.bf16.mxu0 0
      %938 = vmatpush2.bf16.msra.mxu0 0
      %939 = vmatprep.subr.bf16.mxu0 0
      %940 = vmatpush2.bf16.msra.mxu0 0
      %941 = vmatprep.subr.bf16.mxu0 0
      %942 = vmatpush2.bf16.msra.mxu0 0
      %943 = vmatprep.subr.bf16.mxu0 0
      %944 = vmatpush2.bf16.msra.mxu0 0
      %945 = vmatprep.subr.bf16.mxu0 0
      %946 = vmatpush2.bf16.msra.mxu0 0
      %947 = vmatprep.subr.bf16.mxu0 0
      %948 = vmatpush2.bf16.msra.mxu0 0
      %949 = vmatprep.mubr.bf16.mxu0 0
      %950 = vmatmul.mubr.bf16.gmra.mxu0 %v912
      %v951 = vpop.f32.mrf.mxu0
      %v952 = vadd.f32 0.0, %v951
      %v953 = vpop.f32.mrf.mxu0
      %v954 = vpop.f32.mrf.mxu0
      %v955 = vadd.f32 0.0, %v954
      %v956 = vpop.f32.mrf.mxu0
      %957 = vdwg.mxu0
      %v958 = vunpack.c.h.b16 %v391
      %v959 = vpack.c.b16 %v958, %v958
      %v961 = vsel %vm466, %v685, 0
      %v964 = vsel %vm593, %v959, 0
      %966 = vmatprep.subr.bf16.mxu0 0
      %967 = vmatpush1.bf16.msra.mxu0 0
      %968 = vmatprep.subr.bf16.mxu0 0
      %969 = vmatpush1.bf16.msra.mxu0 0
      %970 = vmatprep.subr.bf16.mxu0 0
      %971 = vmatpush1.bf16.msra.mxu0 0
      %972 = vmatprep.subr.bf16.mxu0 0
      %973 = vmatpush1.bf16.msra.mxu0 0
      %974 = vmatprep.subr.bf16.mxu0 0
      %975 = vmatpush1.bf16.msra.mxu0 0
      %976 = vmatprep.subr.bf16.mxu0 0
      %977 = vmatpush1.bf16.msra.mxu0 0
      %978 = vmatprep.subr.bf16.mxu0 0
      %979 = vmatpush1.bf16.msra.mxu0 0
      %980 = vmatprep.subr.bf16.mxu0 0
      %981 = vmatpush1.bf16.msra.mxu0 %v964
      %982 = vmatprep.subr.bf16.mxu0 0
      %983 = vmatpush2.bf16.msra.mxu0 0
      %984 = vmatprep.subr.bf16.mxu0 0
      %985 = vmatpush2.bf16.msra.mxu0 0
      %986 = vmatprep.subr.bf16.mxu0 0
      %987 = vmatpush2.bf16.msra.mxu0 0
      %988 = vmatprep.subr.bf16.mxu0 0
      %989 = vmatpush2.bf16.msra.mxu0 0
      %990 = vmatprep.subr.bf16.mxu0 0
      %991 = vmatpush2.bf16.msra.mxu0 0
      %992 = vmatprep.subr.bf16.mxu0 0
      %993 = vmatpush2.bf16.msra.mxu0 0
      %994 = vmatprep.subr.bf16.mxu0 0
      %995 = vmatpush2.bf16.msra.mxu0 0
      %996 = vmatprep.subr.bf16.mxu0 0
      %997 = vmatpush2.bf16.msra.mxu0 0
      %998 = vmatprep.mubr.bf16.mxu0 0
      %999 = vmatmul.mubr.bf16.gmra.mxu0 %v961
      %v1000 = vpop.f32.mrf.mxu0
      %v1001 = vadd.f32 %v952, %v1000
      %v1002 = vpop.f32.mrf.mxu0
      %v1003 = vpop.f32.mrf.mxu0
      %v1004 = vadd.f32 %v955, %v1003
      %v1005 = vpop.f32.mrf.mxu0
      %1006 = vdwg.mxu0
      %1007 = vrot.lane.b32.xlu0 %v461, 112
      %v1008 = vpop.permute.xlu0 %1007
      %1009 = vrot.lane.b32.xlu0 %v461, 80
      %v1010 = vpop.permute.xlu0 %1009
      %v1012 = vsel %vm466, %v1008, 0
      %v1015 = vsel %vm466, %v1010, 0
      %1017 = vmatprep.subr.bf16.mxu0 0
      %1018 = vmatpush1.bf16.xpose.msra.mxu0 0
      %1019 = vmatprep.subr.bf16.mxu0 0
      %1020 = vmatpush1.bf16.xpose.msra.mxu0 0
      %1021 = vmatprep.subr.bf16.mxu0 0
      %1022 = vmatpush1.bf16.xpose.msra.mxu0 0
      %1023 = vmatprep.subr.bf16.mxu0 0
      %1024 = vmatpush1.bf16.xpose.msra.mxu0 0
      %1025 = vmatprep.subr.bf16.mxu0 0
      %1026 = vmatpush1.bf16.xpose.msra.mxu0 0
      %1027 = vmatprep.subr.bf16.mxu0 0
      %1028 = vmatpush1.bf16.xpose.msra.mxu0 0
      %1029 = vmatprep.subr.bf16.mxu0 0
      %1030 = vmatpush1.bf16.xpose.msra.mxu0 0
      %1031 = vmatprep.subr.bf16.mxu0 0
      %1032 = vmatpush1.bf16.xpose.msra.mxu0 %v1015
      %1033 = vmatprep.subr.bf16.mxu0 0
      %1034 = vmatpush2.bf16.xpose.msra.mxu0 0
      %1035 = vmatprep.subr.bf16.mxu0 0
      %1036 = vmatpush2.bf16.xpose.msra.mxu0 0
      %1037 = vmatprep.subr.bf16.mxu0 0
      %1038 = vmatpush2.bf16.xpose.msra.mxu0 0
      %1039 = vmatprep.subr.bf16.mxu0 0
      %1040 = vmatpush2.bf16.xpose.msra.mxu0 0
      %1041 = vmatprep.subr.bf16.mxu0 0
      %1042 = vmatpush2.bf16.xpose.msra.mxu0 0
      %1043 = vmatprep.subr.bf16.mxu0 0
      %1044 = vmatpush2.bf16.xpose.msra.mxu0 0
      %1045 = vmatprep.subr.bf16.mxu0 0
      %1046 = vmatpush2.bf16.xpose.msra.mxu0 0
      %1047 = vmatprep.subr.bf16.mxu0 0
      %1048 = vmatpush2.bf16.xpose.msra.mxu0 0
      %1049 = vmatprep.mubr.bf16.mxu0 0
      %1050 = vmatmul.mubr.bf16.gmra.mxu0 %v1012
      %v1051 = vpop.f32.mrf.mxu0
      %v1052 = vadd.f32 0.0, %v1051
      %v1053 = vpop.f32.mrf.mxu0
      %v1054 = vpop.f32.mrf.mxu0
      %v1055 = vpop.f32.mrf.mxu0
      %1056 = vdwg.mxu0
      %1057 = vrot.lane.b32.xlu0 %v462, 112
      %v1058 = vpop.permute.xlu0 %1057
      %1059 = vrot.lane.b32.xlu0 %v462, 80
      %v1060 = vpop.permute.xlu0 %1059
      %v1062 = vsel %vm466, %v1058, 0
      %v1065 = vsel %vm466, %v1060, 0
      %1067 = vmatprep.subr.bf16.mxu0 0
      %1068 = vmatpush1.bf16.xpose.msra.mxu0 0
      %1069 = vmatprep.subr.bf16.mxu0 0
      %1070 = vmatpush1.bf16.xpose.msra.mxu0 0
      %1071 = vmatprep.subr.bf16.mxu0 0
      %1072 = vmatpush1.bf16.xpose.msra.mxu0 0
      %1073 = vmatprep.subr.bf16.mxu0 0
      %1074 = vmatpush1.bf16.xpose.msra.mxu0 0
      %1075 = vmatprep.subr.bf16.mxu0 0
      %1076 = vmatpush1.bf16.xpose.msra.mxu0 0
      %1077 = vmatprep.subr.bf16.mxu0 0
      %1078 = vmatpush1.bf16.xpose.msra.mxu0 0
      %1079 = vmatprep.subr.bf16.mxu0 0
      %1080 = vmatpush1.bf16.xpose.msra.mxu0 0
      %1081 = vmatprep.subr.bf16.mxu0 0
      %1082 = vmatpush1.bf16.xpose.msra.mxu0 %v1065
      %1083 = vmatprep.subr.bf16.mxu0 0
      %1084 = vmatpush2.bf16.xpose.msra.mxu0 0
      %1085 = vmatprep.subr.bf16.mxu0 0
      %1086 = vmatpush2.bf16.xpose.msra.mxu0 0
      %1087 = vmatprep.subr.bf16.mxu0 0
      %1088 = vmatpush2.bf16.xpose.msra.mxu0 0
      %1089 = vmatprep.subr.bf16.mxu0 0
      %1090 = vmatpush2.bf16.xpose.msra.mxu0 0
      %1091 = vmatprep.subr.bf16.mxu0 0
      %1092 = vmatpush2.bf16.xpose.msra.mxu0 0
      %1093 = vmatprep.subr.bf16.mxu0 0
      %1094 = vmatpush2.bf16.xpose.msra.mxu0 0
      %1095 = vmatprep.subr.bf16.mxu0 0
      %1096 = vmatpush2.bf16.xpose.msra.mxu0 0
      %1097 = vmatprep.subr.bf16.mxu0 0
      %1098 = vmatpush2.bf16.xpose.msra.mxu0 0
      %1099 = vmatprep.mubr.bf16.mxu0 0
      %1100 = vmatmul.mubr.bf16.gmra.mxu0 %v1062
      %v1101 = vpop.f32.mrf.mxu0
      %v1102 = vadd.f32 0.0, %v1101
      %v1103 = vpop.f32.mrf.mxu0
      %v1104 = vpop.f32.mrf.mxu0
      %v1105 = vpop.f32.mrf.mxu0
      %1106 = vdwg.mxu0
      %v1107 = vmul.f32 %v1052, 0.35355338
      %v1108 = vmul.f32 %v1102, 0.35355338
      %v1109 = vsel %vm466, %v1107, -inf
      %1110 = vmax.xlane.f32.xlu0 %v1109
      %v1111 = vpop.xlane.xlu0 %1110
      %v1112 = vsel %vm466, %v1108, -inf
      %1113 = vmax.xlane.f32.xlu0 %v1112
      %v1114 = vpop.xlane.xlu0 %1113
      %v1115 = vsub.f32 %v1107, %v1111
      %v1116 = vsub.f32 %v1108, %v1114
      %v1117 = vmul.f32 %v1115, 1.442695
      %v1118 = vpow.pop %v1117
      %v1119 = vmul.f32 %v1116, 1.442695
      %v1120 = vpow.pop %v1119
      %v1121 = vsel %vm466, %v1118, 0.0
      %1122 = vadd.xlane.f32.xlu0 %v1121
      %v1123 = vpop.xlane.xlu0 %1122
      %v1124 = vsel %vm466, %v1120, 0.0
      %1125 = vadd.xlane.f32.xlu0 %v1124
      %v1126 = vpop.xlane.xlu0 %1125
      %v1127 = vrcp.pop %v1123
      %v1128 = vrcp.pop %v1126
      %v1129 = vmul.f32 %v1118, %v1127
      %v1130 = vmul.f32 %v1120, %v1128
      %v1131 = vpack.c.bf16 %v1129, %v1129
      %v1132 = vpack.c.bf16 %v1130, %v1130
      %1133 = vrot.lane.b32.xlu0 %v461, 48
      %v1134 = vpop.permute.xlu0 %1133
      %v1136 = vsel %vm466, %v1131, 0
      %v1139 = vsel %vm593, %v1134, 0
      %1141 = vmatprep.subr.bf16.mxu0 0
      %1142 = vmatpush1.bf16.msra.mxu0 0
      %1143 = vmatprep.subr.bf16.mxu0 0
      %1144 = vmatpush1.bf16.msra.mxu0 0
      %1145 = vmatprep.subr.bf16.mxu0 0
      %1146 = vmatpush1.bf16.msra.mxu0 0
      %1147 = vmatprep.subr.bf16.mxu0 0
      %1148 = vmatpush1.bf16.msra.mxu0 0
      %1149 = vmatprep.subr.bf16.mxu0 0
      %1150 = vmatpush1.bf16.msra.mxu0 0
      %1151 = vmatprep.subr.bf16.mxu0 0
      %1152 = vmatpush1.bf16.msra.mxu0 0
      %1153 = vmatprep.subr.bf16.mxu0 0
      %1154 = vmatpush1.bf16.msra.mxu0 0
      %1155 = vmatprep.subr.bf16.mxu0 0
      %1156 = vmatpush1.bf16.msra.mxu0 %v1139
      %1157 = vmatprep.subr.bf16.mxu0 0
      %1158 = vmatpush2.bf16.msra.mxu0 0
      %1159 = vmatprep.subr.bf16.mxu0 0
      %1160 = vmatpush2.bf16.msra.mxu0 0
      %1161 = vmatprep.subr.bf16.mxu0 0
      %1162 = vmatpush2.bf16.msra.mxu0 0
      %1163 = vmatprep.subr.bf16.mxu0 0
      %1164 = vmatpush2.bf16.msra.mxu0 0
      %1165 = vmatprep.subr.bf16.mxu0 0
      %1166 = vmatpush2.bf16.msra.mxu0 0
      %1167 = vmatprep.subr.bf16.mxu0 0
      %1168 = vmatpush2.bf16.msra.mxu0 0
      %1169 = vmatprep.subr.bf16.mxu0 0
      %1170 = vmatpush2.bf16.msra.mxu0 0
      %1171 = vmatprep.subr.bf16.mxu0 0
      %1172 = vmatpush2.bf16.msra.mxu0 0
      %1173 = vmatprep.mubr.bf16.mxu0 0
      %1174 = vmatmul.mubr.bf16.gmra.mxu0 %v1136
      %v1175 = vpop.f32.mrf.mxu0
      %v1176 = vadd.f32 0.0, %v1175
      %v1177 = vpop.f32.mrf.mxu0
      %v1178 = vpop.f32.mrf.mxu0
      %v1179 = vpop.f32.mrf.mxu0
      %1180 = vdwg.mxu0
      %1181 = vrot.lane.b32.xlu0 %v462, 48
      %v1182 = vpop.permute.xlu0 %1181
      %v1184 = vsel %vm466, %v1132, 0
      %v1187 = vsel %vm593, %v1182, 0
      %1189 = vmatprep.subr.bf16.mxu0 0
      %1190 = vmatpush1.bf16.msra.mxu0 0
      %1191 = vmatprep.subr.bf16.mxu0 0
      %1192 = vmatpush1.bf16.msra.mxu0 0
      %1193 = vmatprep.subr.bf16.mxu0 0
      %1194 = vmatpush1.bf16.msra.mxu0 0
      %1195 = vmatprep.subr.bf16.mxu0 0
      %1196 = vmatpush1.bf16.msra.mxu0 0
      %1197 = vmatprep.subr.bf16.mxu0 0
      %1198 = vmatpush1.bf16.msra.mxu0 0
      %1199 = vmatprep.subr.bf16.mxu0 0
      %1200 = vmatpush1.bf16.msra.mxu0 0
      %1201 = vmatprep.subr.bf16.mxu0 0
      %1202 = vmatpush1.bf16.msra.mxu0 0
      %1203 = vmatprep.subr.bf16.mxu0 0
      %1204 = vmatpush1.bf16.msra.mxu0 %v1187
      %1205 = vmatprep.subr.bf16.mxu0 0
      %1206 = vmatpush2.bf16.msra.mxu0 0
      %1207 = vmatprep.subr.bf16.mxu0 0
      %1208 = vmatpush2.bf16.msra.mxu0 0
      %1209 = vmatprep.subr.bf16.mxu0 0
      %1210 = vmatpush2.bf16.msra.mxu0 0
      %1211 = vmatprep.subr.bf16.mxu0 0
      %1212 = vmatpush2.bf16.msra.mxu0 0
      %1213 = vmatprep.subr.bf16.mxu0 0
      %1214 = vmatpush2.bf16.msra.mxu0 0
      %1215 = vmatprep.subr.bf16.mxu0 0
      %1216 = vmatpush2.bf16.msra.mxu0 0
      %1217 = vmatprep.subr.bf16.mxu0 0
      %1218 = vmatpush2.bf16.msra.mxu0 0
      %1219 = vmatprep.subr.bf16.mxu0 0
      %1220 = vmatpush2.bf16.msra.mxu0 0
      %1221 = vmatprep.mubr.bf16.mxu0 0
      %1222 = vmatmul.mubr.bf16.gmra.mxu0 %v1184
      %v1223 = vpop.f32.mrf.mxu0
      %v1224 = vadd.f32 0.0, %v1223
      %v1225 = vpop.f32.mrf.mxu0
      %v1226 = vpop.f32.mrf.mxu0
      %v1227 = vpop.f32.mrf.mxu0
      %1228 = vdwg.mxu0
      %v1229 = vpack.c.bf16 %v1224, %v1176
      %v1230 = vunpack.c.h.b16 %v395
      %v1231 = vpack.c.b16 %v1230, %v1230
      %v1233 = vsel %vm466, %v1229, 0
      %v1236 = vsel %vm593, %v1231, 0
      %1238 = vmatprep.subr.bf16.mxu0 0
      %1239 = vmatpush1.bf16.msra.mxu0 0
      %1240 = vmatprep.subr.bf16.mxu0 0
      %1241 = vmatpush1.bf16.msra.mxu0 0
      %1242 = vmatprep.subr.bf16.mxu0 0
      %1243 = vmatpush1.bf16.msra.mxu0 0
      %1244 = vmatprep.subr.bf16.mxu0 0
      %1245 = vmatpush1.bf16.msra.mxu0 0
      %1246 = vmatprep.subr.bf16.mxu0 0
      %1247 = vmatpush1.bf16.msra.mxu0 0
      %1248 = vmatprep.subr.bf16.mxu0 0
      %1249 = vmatpush1.bf16.msra.mxu0 0
      %1250 = vmatprep.subr.bf16.mxu0 0
      %1251 = vmatpush1.bf16.msra.mxu0 0
      %1252 = vmatprep.subr.bf16.mxu0 0
      %1253 = vmatpush1.bf16.msra.mxu0 %v1236
      %1254 = vmatprep.subr.bf16.mxu0 0
      %1255 = vmatpush2.bf16.msra.mxu0 0
      %1256 = vmatprep.subr.bf16.mxu0 0
      %1257 = vmatpush2.bf16.msra.mxu0 0
      %1258 = vmatprep.subr.bf16.mxu0 0
      %1259 = vmatpush2.bf16.msra.mxu0 0
      %1260 = vmatprep.subr.bf16.mxu0 0
      %1261 = vmatpush2.bf16.msra.mxu0 0
      %1262 = vmatprep.subr.bf16.mxu0 0
      %1263 = vmatpush2.bf16.msra.mxu0 0
      %1264 = vmatprep.subr.bf16.mxu0 0
      %1265 = vmatpush2.bf16.msra.mxu0 0
      %1266 = vmatprep.subr.bf16.mxu0 0
      %1267 = vmatpush2.bf16.msra.mxu0 0
      %1268 = vmatprep.subr.bf16.mxu0 0
      %1269 = vmatpush2.bf16.msra.mxu0 0
      %1270 = vmatprep.mubr.bf16.mxu0 0
      %1271 = vmatmul.mubr.bf16.gmra.mxu0 %v1233
      %v1272 = vpop.f32.mrf.mxu0
      %v1273 = vadd.f32 0.0, %v1272
      %v1274 = vpop.f32.mrf.mxu0
      %v1275 = vpop.f32.mrf.mxu0
      %v1276 = vadd.f32 0.0, %v1275
      %v1277 = vpop.f32.mrf.mxu0
      %1278 = vdwg.mxu0
      %v1279 = vadd.f32 %v1001, %v1273
      %v1280 = vadd.f32 %v1004, %v1276
      %1281 = vrot.lane.b32.xlu0 %v461, 104
      %v1282 = vpop.permute.xlu0 %1281
      %1283 = vrot.lane.b32.xlu0 %v461, 72
      %v1284 = vpop.permute.xlu0 %1283
      %v1286 = vsel %vm466, %v1282, 0
      %v1289 = vsel %vm466, %v1284, 0
      %1291 = vmatprep.subr.bf16.mxu0 0
      %1292 = vmatpush1.bf16.xpose.msra.mxu0 0
      %1293 = vmatprep.subr.bf16.mxu0 0
      %1294 = vmatpush1.bf16.xpose.msra.mxu0 0
      %1295 = vmatprep.subr.bf16.mxu0 0
      %1296 = vmatpush1.bf16.xpose.msra.mxu0 0
      %1297 = vmatprep.subr.bf16.mxu0 0
      %1298 = vmatpush1.bf16.xpose.msra.mxu0 0
      %1299 = vmatprep.subr.bf16.mxu0 0
      %1300 = vmatpush1.bf16.xpose.msra.mxu0 0
      %1301 = vmatprep.subr.bf16.mxu0 0
      %1302 = vmatpush1.bf16.xpose.msra.mxu0 0
      %1303 = vmatprep.subr.bf16.mxu0 0
      %1304 = vmatpush1.bf16.xpose.msra.mxu0 0
      %1305 = vmatprep.subr.bf16.mxu0 0
      %1306 = vmatpush1.bf16.xpose.msra.mxu0 %v1289
      %1307 = vmatprep.subr.bf16.mxu0 0
      %1308 = vmatpush2.bf16.xpose.msra.mxu0 0
      %1309 = vmatprep.subr.bf16.mxu0 0
      %1310 = vmatpush2.bf16.xpose.msra.mxu0 0
      %1311 = vmatprep.subr.bf16.mxu0 0
      %1312 = vmatpush2.bf16.xpose.msra.mxu0 0
      %1313 = vmatprep.subr.bf16.mxu0 0
      %1314 = vmatpush2.bf16.xpose.msra.mxu0 0
      %1315 = vmatprep.subr.bf16.mxu0 0
      %1316 = vmatpush2.bf16.xpose.msra.mxu0 0
      %1317 = vmatprep.subr.bf16.mxu0 0
      %1318 = vmatpush2.bf16.xpose.msra.mxu0 0
      %1319 = vmatprep.subr.bf16.mxu0 0
      %1320 = vmatpush2.bf16.xpose.msra.mxu0 0
      %1321 = vmatprep.subr.bf16.mxu0 0
      %1322 = vmatpush2.bf16.xpose.msra.mxu0 0
      %1323 = vmatprep.mubr.bf16.mxu0 0
      %1324 = vmatmul.mubr.bf16.gmra.mxu0 %v1286
      %v1325 = vpop.f32.mrf.mxu0
      %v1326 = vadd.f32 0.0, %v1325
      %v1327 = vpop.f32.mrf.mxu0
      %v1328 = vpop.f32.mrf.mxu0
      %v1329 = vpop.f32.mrf.mxu0
      %1330 = vdwg.mxu0
      %1331 = vrot.lane.b32.xlu0 %v462, 104
      %v1332 = vpop.permute.xlu0 %1331
      %1333 = vrot.lane.b32.xlu0 %v462, 72
      %v1334 = vpop.permute.xlu0 %1333
      %v1336 = vsel %vm466, %v1332, 0
      %v1339 = vsel %vm466, %v1334, 0
      %1341 = vmatprep.subr.bf16.mxu0 0
      %1342 = vmatpush1.bf16.xpose.msra.mxu0 0
      %1343 = vmatprep.subr.bf16.mxu0 0
      %1344 = vmatpush1.bf16.xpose.msra.mxu0 0
      %1345 = vmatprep.subr.bf16.mxu0 0
      %1346 = vmatpush1.bf16.xpose.msra.mxu0 0
      %1347 = vmatprep.subr.bf16.mxu0 0
      %1348 = vmatpush1.bf16.xpose.msra.mxu0 0
      %1349 = vmatprep.subr.bf16.mxu0 0
      %1350 = vmatpush1.bf16.xpose.msra.mxu0 0
      %1351 = vmatprep.subr.bf16.mxu0 0
      %1352 = vmatpush1.bf16.xpose.msra.mxu0 0
      %1353 = vmatprep.subr.bf16.mxu0 0
      %1354 = vmatpush1.bf16.xpose.msra.mxu0 0
      %1355 = vmatprep.subr.bf16.mxu0 0
      %1356 = vmatpush1.bf16.xpose.msra.mxu0 %v1339
      %1357 = vmatprep.subr.bf16.mxu0 0
      %1358 = vmatpush2.bf16.xpose.msra.mxu0 0
      %1359 = vmatprep.subr.bf16.mxu0 0
      %1360 = vmatpush2.bf16.xpose.msra.mxu0 0
      %1361 = vmatprep.subr.bf16.mxu0 0
      %1362 = vmatpush2.bf16.xpose.msra.mxu0 0
      %1363 = vmatprep.subr.bf16.mxu0 0
      %1364 = vmatpush2.bf16.xpose.msra.mxu0 0
      %1365 = vmatprep.subr.bf16.mxu0 0
      %1366 = vmatpush2.bf16.xpose.msra.mxu0 0
      %1367 = vmatprep.subr.bf16.mxu0 0
      %1368 = vmatpush2.bf16.xpose.msra.mxu0 0
      %1369 = vmatprep.subr.bf16.mxu0 0
      %1370 = vmatpush2.bf16.xpose.msra.mxu0 0
      %1371 = vmatprep.subr.bf16.mxu0 0
      %1372 = vmatpush2.bf16.xpose.msra.mxu0 0
      %1373 = vmatprep.mubr.bf16.mxu0 0
      %1374 = vmatmul.mubr.bf16.gmra.mxu0 %v1336
      %v1375 = vpop.f32.mrf.mxu0
      %v1376 = vadd.f32 0.0, %v1375
      %v1377 = vpop.f32.mrf.mxu0
      %v1378 = vpop.f32.mrf.mxu0
      %v1379 = vpop.f32.mrf.mxu0
      %1380 = vdwg.mxu0
      %v1381 = vmul.f32 %v1326, 0.35355338
      %v1382 = vmul.f32 %v1376, 0.35355338
      %v1383 = vsel %vm466, %v1381, -inf
      %1384 = vmax.xlane.f32.xlu0 %v1383
      %v1385 = vpop.xlane.xlu0 %1384
      %v1386 = vsel %vm466, %v1382, -inf
      %1387 = vmax.xlane.f32.xlu0 %v1386
      %v1388 = vpop.xlane.xlu0 %1387
      %v1389 = vsub.f32 %v1381, %v1385
      %v1390 = vsub.f32 %v1382, %v1388
      %v1391 = vmul.f32 %v1389, 1.442695
      %v1392 = vpow.pop %v1391
      %v1393 = vmul.f32 %v1390, 1.442695
      %v1394 = vpow.pop %v1393
      %v1395 = vsel %vm466, %v1392, 0.0
      %1396 = vadd.xlane.f32.xlu0 %v1395
      %v1397 = vpop.xlane.xlu0 %1396
      %v1398 = vsel %vm466, %v1394, 0.0
      %1399 = vadd.xlane.f32.xlu0 %v1398
      %v1400 = vpop.xlane.xlu0 %1399
      %v1401 = vrcp.pop %v1397
      %v1402 = vrcp.pop %v1400
      %v1403 = vmul.f32 %v1392, %v1401
      %v1404 = vmul.f32 %v1394, %v1402
      %v1405 = vpack.c.bf16 %v1403, %v1403
      %v1406 = vpack.c.bf16 %v1404, %v1404
      %1407 = vrot.lane.b32.xlu0 %v461, 40
      %v1408 = vpop.permute.xlu0 %1407
      %v1410 = vsel %vm466, %v1405, 0
      %v1413 = vsel %vm593, %v1408, 0
      %1415 = vmatprep.subr.bf16.mxu0 0
      %1416 = vmatpush1.bf16.msra.mxu0 0
      %1417 = vmatprep.subr.bf16.mxu0 0
      %1418 = vmatpush1.bf16.msra.mxu0 0
      %1419 = vmatprep.subr.bf16.mxu0 0
      %1420 = vmatpush1.bf16.msra.mxu0 0
      %1421 = vmatprep.subr.bf16.mxu0 0
      %1422 = vmatpush1.bf16.msra.mxu0 0
      %1423 = vmatprep.subr.bf16.mxu0 0
      %1424 = vmatpush1.bf16.msra.mxu0 0
      %1425 = vmatprep.subr.bf16.mxu0 0
      %1426 = vmatpush1.bf16.msra.mxu0 0
      %1427 = vmatprep.subr.bf16.mxu0 0
      %1428 = vmatpush1.bf16.msra.mxu0 0
      %1429 = vmatprep.subr.bf16.mxu0 0
      %1430 = vmatpush1.bf16.msra.mxu0 %v1413
      %1431 = vmatprep.subr.bf16.mxu0 0
      %1432 = vmatpush2.bf16.msra.mxu0 0
      %1433 = vmatprep.subr.bf16.mxu0 0
      %1434 = vmatpush2.bf16.msra.mxu0 0
      %1435 = vmatprep.subr.bf16.mxu0 0
      %1436 = vmatpush2.bf16.msra.mxu0 0
      %1437 = vmatprep.subr.bf16.mxu0 0
      %1438 = vmatpush2.bf16.msra.mxu0 0
      %1439 = vmatprep.subr.bf16.mxu0 0
      %1440 = vmatpush2.bf16.msra.mxu0 0
      %1441 = vmatprep.subr.bf16.mxu0 0
      %1442 = vmatpush2.bf16.msra.mxu0 0
      %1443 = vmatprep.subr.bf16.mxu0 0
      %1444 = vmatpush2.bf16.msra.mxu0 0
      %1445 = vmatprep.subr.bf16.mxu0 0
      %1446 = vmatpush2.bf16.msra.mxu0 0
      %1447 = vmatprep.mubr.bf16.mxu0 0
      %1448 = vmatmul.mubr.bf16.gmra.mxu0 %v1410
      %v1449 = vpop.f32.mrf.mxu0
      %v1450 = vadd.f32 0.0, %v1449
      %v1451 = vpop.f32.mrf.mxu0
      %v1452 = vpop.f32.mrf.mxu0
      %v1453 = vpop.f32.mrf.mxu0
      %1454 = vdwg.mxu0
      %1455 = vrot.lane.b32.xlu0 %v462, 40
      %v1456 = vpop.permute.xlu0 %1455
      %v1458 = vsel %vm466, %v1406, 0
      %v1461 = vsel %vm593, %v1456, 0
      %1463 = vmatprep.subr.bf16.mxu0 0
      %1464 = vmatpush1.bf16.msra.mxu0 0
      %1465 = vmatprep.subr.bf16.mxu0 0
      %1466 = vmatpush1.bf16.msra.mxu0 0
      %1467 = vmatprep.subr.bf16.mxu0 0
      %1468 = vmatpush1.bf16.msra.mxu0 0
      %1469 = vmatprep.subr.bf16.mxu0 0
      %1470 = vmatpush1.bf16.msra.mxu0 0
      %1471 = vmatprep.subr.bf16.mxu0 0
      %1472 = vmatpush1.bf16.msra.mxu0 0
      %1473 = vmatprep.subr.bf16.mxu0 0
      %1474 = vmatpush1.bf16.msra.mxu0 0
      %1475 = vmatprep.subr.bf16.mxu0 0
      %1476 = vmatpush1.bf16.msra.mxu0 0
      %1477 = vmatprep.subr.bf16.mxu0 0
      %1478 = vmatpush1.bf16.msra.mxu0 %v1461
      %1479 = vmatprep.subr.bf16.mxu0 0
      %1480 = vmatpush2.bf16.msra.mxu0 0
      %1481 = vmatprep.subr.bf16.mxu0 0
      %1482 = vmatpush2.bf16.msra.mxu0 0
      %1483 = vmatprep.subr.bf16.mxu0 0
      %1484 = vmatpush2.bf16.msra.mxu0 0
      %1485 = vmatprep.subr.bf16.mxu0 0
      %1486 = vmatpush2.bf16.msra.mxu0 0
      %1487 = vmatprep.subr.bf16.mxu0 0
      %1488 = vmatpush2.bf16.msra.mxu0 0
      %1489 = vmatprep.subr.bf16.mxu0 0
      %1490 = vmatpush2.bf16.msra.mxu0 0
      %1491 = vmatprep.subr.bf16.mxu0 0
      %1492 = vmatpush2.bf16.msra.mxu0 0
      %1493 = vmatprep.subr.bf16.mxu0 0
      %1494 = vmatpush2.bf16.msra.mxu0 0
      %1495 = vmatprep.mubr.bf16.mxu0 0
      %1496 = vmatmul.mubr.bf16.gmra.mxu0 %v1458
      %v1497 = vpop.f32.mrf.mxu0
      %v1498 = vadd.f32 0.0, %v1497
      %v1499 = vpop.f32.mrf.mxu0
      %v1500 = vpop.f32.mrf.mxu0
      %v1501 = vpop.f32.mrf.mxu0
      %1502 = vdwg.mxu0
      %v1503 = vpack.c.bf16 %v1498, %v1450
      %v1504 = vunpack.c.h.b16 %v397
      %v1505 = vpack.c.b16 %v1504, %v1504
      %v1507 = vsel %vm466, %v1503, 0
      %v1510 = vsel %vm593, %v1505, 0
      %1512 = vmatprep.subr.bf16.mxu0 0
      %1513 = vmatpush1.bf16.msra.mxu0 0
      %1514 = vmatprep.subr.bf16.mxu0 0
      %1515 = vmatpush1.bf16.msra.mxu0 0
      %1516 = vmatprep.subr.bf16.mxu0 0
      %1517 = vmatpush1.bf16.msra.mxu0 0
      %1518 = vmatprep.subr.bf16.mxu0 0
      %1519 = vmatpush1.bf16.msra.mxu0 0
      %1520 = vmatprep.subr.bf16.mxu0 0
      %1521 = vmatpush1.bf16.msra.mxu0 0
      %1522 = vmatprep.subr.bf16.mxu0 0
      %1523 = vmatpush1.bf16.msra.mxu0 0
      %1524 = vmatprep.subr.bf16.mxu0 0
      %1525 = vmatpush1.bf16.msra.mxu0 0
      %1526 = vmatprep.subr.bf16.mxu0 0
      %1527 = vmatpush1.bf16.msra.mxu0 %v1510
      %1528 = vmatprep.subr.bf16.mxu0 0
      %1529 = vmatpush2.bf16.msra.mxu0 0
      %1530 = vmatprep.subr.bf16.mxu0 0
      %1531 = vmatpush2.bf16.msra.mxu0 0
      %1532 = vmatprep.subr.bf16.mxu0 0
      %1533 = vmatpush2.bf16.msra.mxu0 0
      %1534 = vmatprep.subr.bf16.mxu0 0
      %1535 = vmatpush2.bf16.msra.mxu0 0
      %1536 = vmatprep.subr.bf16.mxu0 0
      %1537 = vmatpush2.bf16.msra.mxu0 0
      %1538 = vmatprep.subr.bf16.mxu0 0
      %1539 = vmatpush2.bf16.msra.mxu0 0
      %1540 = vmatprep.subr.bf16.mxu0 0
      %1541 = vmatpush2.bf16.msra.mxu0 0
      %1542 = vmatprep.subr.bf16.mxu0 0
      %1543 = vmatpush2.bf16.msra.mxu0 0
      %1544 = vmatprep.mubr.bf16.mxu0 0
      %1545 = vmatmul.mubr.bf16.gmra.mxu0 %v1507
      %v1546 = vpop.f32.mrf.mxu0
      %v1547 = vadd.f32 0.0, %v1546
      %v1548 = vpop.f32.mrf.mxu0
      %v1549 = vpop.f32.mrf.mxu0
      %v1550 = vadd.f32 0.0, %v1549
      %v1551 = vpop.f32.mrf.mxu0
      %1552 = vdwg.mxu0
      %v1553 = vadd.f32 %v1279, %v1547
      %v1554 = vadd.f32 %v1280, %v1550
      %v1555 = vadd.f32 %v389, %v1553
      %v1556 = vadd.f32 %v390, %v1554
      %v1557 = vlaneseq
      %v1558 = vshrl.u32 %v1557, 7
      %v1559 = vsub.s32 1, %v1558
      %v1560 = vrot.slane %v399, %v1559
      %v1561 = vadd.f32 %v1555, %v1560
      %v1562 = vadd.f32 %v1556, %v1560
      %v1563 = vsel %vm351, %v1561, 0.0
      %1564 = vadd.xlane.f32.xlu0 %v1563
      %v1565 = vpop.xlane.xlu0 %1564
      %v1566 = vsel %vm351, %v1562, 0.0
      %1567 = vadd.xlane.f32.xlu0 %v1566
      %v1568 = vpop.xlane.xlu0 %1567
      %v1569 = vmul.f32 %v1565, %v358
      %v1570 = vmul.f32 %v1568, %v358
      %v1571 = vsub.f32 %v1561, %v1569
      %v1572 = vsub.f32 %v1562, %v1570
      %v1573 = vmul.f32 %v1571, %v1571
      %v1574 = vmul.f32 %v1572, %v1572
      %v1575 = vsel %vm351, %v1573, 0.0
      %1576 = vadd.xlane.f32.xlu0 %v1575
      %v1577 = vpop.xlane.xlu0 %1576
      %v1578 = vsel %vm351, %v1574, 0.0
      %1579 = vadd.xlane.f32.xlu0 %v1578
      %v1580 = vpop.xlane.xlu0 %1579
      %v1581 = vmul.f32 %v1577, %v358
      %v1582 = vmul.f32 %v1580, %v358
      %v1583 = vadd.f32 %v1581, 1e-12
      %v1584 = vadd.f32 %v1582, 1e-12
      %v1585 = vrsqrt.pop %v1583
      %v1586 = vrsqrt.pop %v1584
      %v1587 = vmul.f32 %v1571, %v1585
      %v1588 = vmul.f32 %v1572, %v1586
      %v1589 = vlaneseq
      %v1590 = vshrl.u32 %v1589, 7
      %v1591 = vsub.s32 4, %v1590
      %v1592 = vrot.slane %v399, %v1591
      %v1593 = vmul.f32 %v1587, %v1592
      %v1594 = vmul.f32 %v1588, %v1592
      %v1595 = vlaneseq
      %v1596 = vshrl.u32 %v1595, 7
      %v1597 = vsub.s32 5, %v1596
      %v1598 = vrot.slane %v399, %v1597
      %v1599 = vadd.f32 %v1593, %v1598
      %v1600 = vadd.f32 %v1594, %v1598
      %v1601 = vpack.c.bf16 %v1600, %v1599
      %v1602 = vlaneseq
      %v1603 = vshrl.u32 %v1602, 7
      %v1604 = vsub.s32 2, %v1603
      %v1605 = vrot.slane %v399, %v1604
      %v1610 = vunpack.c.l.b16 %v392
      %v1611 = vunpack.c.l.b16 %v394
      %v1612 = vunpack.c.l.b16 %v396
      %v1613 = vunpack.c.l.b16 %v398
      %v1614 = vpack.c.b16 %v1611, %v1610
      %v1615 = vpack.c.b16 %v1613, %v1612
      %v1619 = vsel %vm351, %v1601, 0
      %1621 = vmatprep.subr.bf16.mxu0 0
      %1622 = vmatpush1.bf16.msra.mxu0 0
      %1623 = vmatprep.subr.bf16.mxu0 0
      %1624 = vmatpush1.bf16.msra.mxu0 0
      %1625 = vmatprep.subr.bf16.mxu0 0
      %1626 = vmatpush1.bf16.msra.mxu0 0
      %1627 = vmatprep.subr.bf16.mxu0 0
      %1628 = vmatpush1.bf16.msra.mxu0 0
      %1629 = vmatprep.subr.bf16.mxu0 0
      %1630 = vmatpush1.bf16.msra.mxu0 0
      %1631 = vmatprep.subr.bf16.mxu0 0
      %1632 = vmatpush1.bf16.msra.mxu0 0
      %1633 = vmatprep.subr.bf16.mxu0 0
      %1634 = vmatpush1.bf16.msra.mxu0 %v1615
      %1635 = vmatprep.subr.bf16.mxu0 0
      %1636 = vmatpush1.bf16.msra.mxu0 %v1614
      %1637 = vmatprep.subr.bf16.mxu0 0
      %1638 = vmatpush2.bf16.msra.mxu0 0
      %1639 = vmatprep.subr.bf16.mxu0 0
      %1640 = vmatpush2.bf16.msra.mxu0 0
      %1641 = vmatprep.subr.bf16.mxu0 0
      %1642 = vmatpush2.bf16.msra.mxu0 0
      %1643 = vmatprep.subr.bf16.mxu0 0
      %1644 = vmatpush2.bf16.msra.mxu0 0
      %1645 = vmatprep.subr.bf16.mxu0 0
      %1646 = vmatpush2.bf16.msra.mxu0 0
      %1647 = vmatprep.subr.bf16.mxu0 0
      %1648 = vmatpush2.bf16.msra.mxu0 0
      %1649 = vmatprep.subr.bf16.mxu0 0
      %1650 = vmatpush2.bf16.msra.mxu0 0
      %1651 = vmatprep.subr.bf16.mxu0 0
      %1652 = vmatpush2.bf16.msra.mxu0 0
      %1653 = vmatprep.mubr.bf16.mxu0 0
      %1654 = vmatmul.mubr.bf16.gmra.mxu0 %v1619
      %v1655 = vpop.f32.mrf.mxu0
      %v1656 = vadd.f32 %v1605, %v1655
      %v1657 = vpop.f32.mrf.mxu0
      %v1658 = vpop.f32.mrf.mxu0
      %v1659 = vadd.f32 %v1605, %v1658
      %v1660 = vpop.f32.mrf.mxu0
      %1661 = vdwg.mxu0
      %v1662 = vmul.f32 %v1656, 0.5
      %v1663 = vmul.f32 %v1659, 0.5
      %v1664 = vmul.f32 %v1656, 0.044715
      %v1665 = vmul.f32 %v1659, 0.044715
      %v1666 = vmul.f32 %v1664, %v1656
      %v1667 = vmul.f32 %v1665, %v1659
      %v1668 = vmul.f32 %v1666, %v1656
      %v1669 = vmul.f32 %v1667, %v1659
      %v1670 = vadd.f32 %v1656, %v1668
      %v1671 = vadd.f32 %v1659, %v1669
      %v1672 = vmul.f32 %v1670, 0.7978846
      %v1673 = vmul.f32 %v1671, 0.7978846
      %v1674 = vtanh.pop %v1672
      %v1675 = vtanh.pop %v1673
      %v1676 = vadd.f32 %v1674, 1.0
      %v1677 = vadd.f32 %v1675, 1.0
      %v1678 = vmul.f32 %v1662, %v1676
      %v1679 = vmul.f32 %v1663, %v1677
      %v1680 = vpack.c.bf16 %v1679, %v1678
      %v1681 = vld [vmem:[%s328] sm:$0xf]
      %v1682 = vld [vmem:[%s328 + $0x4] sm:$0xf]
      %v1683 = vld [vmem:[%s328 + $0x8] sm:$0xf]
      %v1684 = vld [vmem:[%s328 + $0xc] sm:$0xf]
      %v1685 = vld [vmem:[%s328 + $0x10] sm:$0xf]
      %v1686 = vld [vmem:[%s328 + $0x14] sm:$0xf]
      %v1687 = vld [vmem:[%s328 + $0x18] sm:$0xf]
      %v1688 = vld [vmem:[%s328 + $0x1c] sm:$0xf]
      %v1689 = vlaneseq
      %v1690 = vshrl.u32 %v1689, 7
      %v1691 = vsub.s32 3, %v1690
      %v1692 = vrot.slane %v399, %v1691
      %v1701 = vunpack.c.l.b16 %v1681
      %v1702 = vunpack.c.l.b16 %v1682
      %v1703 = vunpack.c.l.b16 %v1683
      %v1704 = vunpack.c.l.b16 %v1684
      %v1705 = vunpack.c.l.b16 %v1685
      %v1706 = vunpack.c.l.b16 %v1686
      %v1707 = vunpack.c.l.b16 %v1687
      %v1708 = vunpack.c.l.b16 %v1688
      %v1709 = vpack.c.b16 %v1702, %v1701
      %v1710 = vpack.c.b16 %v1704, %v1703
      %v1711 = vpack.c.b16 %v1706, %v1705
      %v1712 = vpack.c.b16 %v1708, %v1707
      %vm1717 = vcmask 523264
      %v1719 = vsel %vm1717, %v1680, 0
      %1721 = vmatprep.subr.bf16.mxu0 0
      %1722 = vmatpush1.bf16.msra.mxu0 0
      %1723 = vmatprep.subr.bf16.mxu0 0
      %1724 = vmatpush1.bf16.msra.mxu0 0
      %1725 = vmatprep.subr.bf16.mxu0 0
      %1726 = vmatpush1.bf16.msra.mxu0 0
      %1727 = vmatprep.subr.bf16.mxu0 0
      %1728 = vmatpush1.bf16.msra.mxu0 0
      %1729 = vmatprep.subr.bf16.mxu0 0
      %1730 = vmatpush1.bf16.msra.mxu0 %v1712
      %1731 = vmatprep.subr.bf16.mxu0 0
      %1732 = vmatpush1.bf16.msra.mxu0 %v1711
      %1733 = vmatprep.subr.bf16.mxu0 0
      %1734 = vmatpush1.bf16.msra.mxu0 %v1710
      %1735 = vmatprep.subr.bf16.mxu0 0
      %1736 = vmatpush1.bf16.msra.mxu0 %v1709
      %1737 = vmatprep.subr.bf16.mxu0 0
      %1738 = vmatpush2.bf16.msra.mxu0 0
      %1739 = vmatprep.subr.bf16.mxu0 0
      %1740 = vmatpush2.bf16.msra.mxu0 0
      %1741 = vmatprep.subr.bf16.mxu0 0
      %1742 = vmatpush2.bf16.msra.mxu0 0
      %1743 = vmatprep.subr.bf16.mxu0 0
      %1744 = vmatpush2.bf16.msra.mxu0 0
      %1745 = vmatprep.subr.bf16.mxu0 0
      %1746 = vmatpush2.bf16.msra.mxu0 0
      %1747 = vmatprep.subr.bf16.mxu0 0
      %1748 = vmatpush2.bf16.msra.mxu0 0
      %1749 = vmatprep.subr.bf16.mxu0 0
      %1750 = vmatpush2.bf16.msra.mxu0 0
      %1751 = vmatprep.subr.bf16.mxu0 0
      %1752 = vmatpush2.bf16.msra.mxu0 0
      %1753 = vmatprep.mubr.bf16.mxu0 0
      %1754 = vmatmul.mubr.bf16.gmra.mxu0 %v1719
      %v1755 = vpop.f32.mrf.mxu0
      %v1756 = vadd.f32 %v1692, %v1755
      %v1757 = vpop.f32.mrf.mxu0
      %v1758 = vpop.f32.mrf.mxu0
      %v1759 = vadd.f32 %v1692, %v1758
      %v1760 = vpop.f32.mrf.mxu0
      %1761 = vdwg.mxu0
      %v1762 = vadd.f32 %v1599, %v1756
      %v1763 = vadd.f32 %v1600, %v1759
      %v1764 = vsel %vm351, %v1762, 0.0
      %1765 = vadd.xlane.f32.xlu0 %v1764
      %v1766 = vpop.xlane.xlu0 %1765
      %v1767 = vsel %vm351, %v1763, 0.0
      %1768 = vadd.xlane.f32.xlu0 %v1767
      %v1769 = vpop.xlane.xlu0 %1768
      %v1770 = vmul.f32 %v1766, %v358
      %v1771 = vmul.f32 %v1769, %v358
      %v1772 = vsub.f32 %v1762, %v1770
      %v1773 = vsub.f32 %v1763, %v1771
      %v1774 = vmul.f32 %v1772, %v1772
      %v1775 = vmul.f32 %v1773, %v1773
      %v1776 = vsel %vm351, %v1774, 0.0
      %1777 = vadd.xlane.f32.xlu0 %v1776
      %v1778 = vpop.xlane.xlu0 %1777
      %v1779 = vsel %vm351, %v1775, 0.0
      %1780 = vadd.xlane.f32.xlu0 %v1779
      %v1781 = vpop.xlane.xlu0 %1780
      %v1782 = vmul.f32 %v1778, %v358
      %v1783 = vmul.f32 %v1781, %v358
      %v1784 = vadd.f32 %v1782, 1e-12
      %v1785 = vadd.f32 %v1783, 1e-12
      %v1786 = vrsqrt.pop %v1784
      %v1787 = vrsqrt.pop %v1785
      %v1788 = vmul.f32 %v1772, %v1786
      %v1789 = vmul.f32 %v1773, %v1787
      %v1790 = vlaneseq
      %v1791 = vshrl.u32 %v1790, 7
      %v1792 = vsub.s32 6, %v1791
      %v1793 = vrot.slane %v399, %v1792
      %v1794 = vmul.f32 %v1788, %v1793
      %v1795 = vmul.f32 %v1789, %v1793
      %v1796 = vlaneseq
      %v1797 = vshrl.u32 %v1796, 7
      %v1798 = vsub.s32 7, %v1797
      %v1799 = vrot.slane %v399, %v1798
      %v1800 = vadd.f32 %v1794, %v1799
      %v1801 = vadd.f32 %v1795, %v1799
      %s1802 = scalar_lea.vmem %s323, 48
      %v1803 = vld [vmem:[%s1802] sm:$0xff]
      %v1804 = vld [vmem:[%s1802 + $0x8] sm:$0xf]
      %v1805 = vld [vmem:[%s1802 + $0xc] sm:$0xff]
      %v1806 = vld [vmem:[%s1802 + $0x14] sm:$0xf]
      %v1807 = vld [vmem:[%s1802 + $0x18] sm:$0xff]
      %v1808 = vld [vmem:[%s1802 + $0x20] sm:$0xf]
      %v1809 = vld [vmem:[%s1802 + $0x24] sm:$0xff]
      %v1810 = vld [vmem:[%s1802 + $0x2c] sm:$0xf]
      %s1811 = scalar_lea.vmem %s338, 8
      %v1812 = vld [vmem:[%s1811] sm:$0xff]
      %v1813 = vpack.c.bf16 %v1801, %v1800
      %v1814 = vlaneseq
      %v1815 = vshrl.u32 %v1814, 7
      %v1816 = vsub.s32 0, %v1815
      %v1817 = vrot.slane %v1812, %v1816
      %v1822 = vunpack.c.l.b16 %v1803
      %v1823 = vunpack.c.l.b16 %v1805
      %v1824 = vunpack.c.l.b16 %v1807
      %v1825 = vunpack.c.l.b16 %v1809
      %v1826 = vpack.c.b16 %v1823, %v1822
      %v1827 = vpack.c.b16 %v1825, %v1824
      %v1831 = vsel %vm351, %v1813, 0
      %1833 = vmatprep.subr.bf16.mxu0 0
      %1834 = vmatpush1.bf16.msra.mxu0 0
      %1835 = vmatprep.subr.bf16.mxu0 0
      %1836 = vmatpush1.bf16.msra.mxu0 0
      %1837 = vmatprep.subr.bf16.mxu0 0
      %1838 = vmatpush1.bf16.msra.mxu0 0
      %1839 = vmatprep.subr.bf16.mxu0 0
      %1840 = vmatpush1.bf16.msra.mxu0 0
      %1841 = vmatprep.subr.bf16.mxu0 0
      %1842 = vmatpush1.bf16.msra.mxu0 0
      %1843 = vmatprep.subr.bf16.mxu0 0
      %1844 = vmatpush1.bf16.msra.mxu0 0
      %1845 = vmatprep.subr.bf16.mxu0 0
      %1846 = vmatpush1.bf16.msra.mxu0 %v1827
      %1847 = vmatprep.subr.bf16.mxu0 0
      %1848 = vmatpush1.bf16.msra.mxu0 %v1826
      %1849 = vmatprep.subr.bf16.mxu0 0
      %1850 = vmatpush2.bf16.msra.mxu0 0
      %1851 = vmatprep.subr.bf16.mxu0 0
      %1852 = vmatpush2.bf16.msra.mxu0 0
      %1853 = vmatprep.subr.bf16.mxu0 0
      %1854 = vmatpush2.bf16.msra.mxu0 0
      %1855 = vmatprep.subr.bf16.mxu0 0
      %1856 = vmatpush2.bf16.msra.mxu0 0
      %1857 = vmatprep.subr.bf16.mxu0 0
      %1858 = vmatpush2.bf16.msra.mxu0 0
      %1859 = vmatprep.subr.bf16.mxu0 0
      %1860 = vmatpush2.bf16.msra.mxu0 0
      %1861 = vmatprep.subr.bf16.mxu0 0
      %1862 = vmatpush2.bf16.msra.mxu0 0
      %1863 = vmatprep.subr.bf16.mxu0 0
      %1864 = vmatpush2.bf16.msra.mxu0 0
      %1865 = vmatprep.mubr.bf16.mxu0 0
      %1866 = vmatmul.mubr.bf16.gmra.mxu0 %v1831
      %v1867 = vpop.f32.mrf.mxu0
      %v1868 = vadd.f32 %v1817, %v1867
      %v1869 = vpop.f32.mrf.mxu0
      %v1870 = vpop.f32.mrf.mxu0
      %v1871 = vadd.f32 %v1817, %v1870
      %v1872 = vpop.f32.mrf.mxu0
      %1873 = vdwg.mxu0
      %v1874 = vpack.c.bf16 %v1868, %v1868
      %v1875 = vpack.c.bf16 %v1871, %v1871
      %1877 = vrot.lane.b32.xlu0 %v1874, 96
      %v1878 = vpop.permute.xlu0 %1877
      %v1880 = vsel %vm466, %v1874, 0
      %v1883 = vsel %vm466, %v1878, 0
      %1885 = vmatprep.subr.bf16.mxu0 0
      %1886 = vmatpush1.bf16.xpose.msra.mxu0 0
      %1887 = vmatprep.subr.bf16.mxu0 0
      %1888 = vmatpush1.bf16.xpose.msra.mxu0 0
      %1889 = vmatprep.subr.bf16.mxu0 0
      %1890 = vmatpush1.bf16.xpose.msra.mxu0 0
      %1891 = vmatprep.subr.bf16.mxu0 0
      %1892 = vmatpush1.bf16.xpose.msra.mxu0 0
      %1893 = vmatprep.subr.bf16.mxu0 0
      %1894 = vmatpush1.bf16.xpose.msra.mxu0 0
      %1895 = vmatprep.subr.bf16.mxu0 0
      %1896 = vmatpush1.bf16.xpose.msra.mxu0 0
      %1897 = vmatprep.subr.bf16.mxu0 0
      %1898 = vmatpush1.bf16.xpose.msra.mxu0 0
      %1899 = vmatprep.subr.bf16.mxu0 0
      %1900 = vmatpush1.bf16.xpose.msra.mxu0 %v1883
      %1901 = vmatprep.subr.bf16.mxu0 0
      %1902 = vmatpush2.bf16.xpose.msra.mxu0 0
      %1903 = vmatprep.subr.bf16.mxu0 0
      %1904 = vmatpush2.bf16.xpose.msra.mxu0 0
      %1905 = vmatprep.subr.bf16.mxu0 0
      %1906 = vmatpush2.bf16.xpose.msra.mxu0 0
      %1907 = vmatprep.subr.bf16.mxu0 0
      %1908 = vmatpush2.bf16.xpose.msra.mxu0 0
      %1909 = vmatprep.subr.bf16.mxu0 0
      %1910 = vmatpush2.bf16.xpose.msra.mxu0 0
      %1911 = vmatprep.subr.bf16.mxu0 0
      %1912 = vmatpush2.bf16.xpose.msra.mxu0 0
      %1913 = vmatprep.subr.bf16.mxu0 0
      %1914 = vmatpush2.bf16.xpose.msra.mxu0 0
      %1915 = vmatprep.subr.bf16.mxu0 0
      %1916 = vmatpush2.bf16.xpose.msra.mxu0 0
      %1917 = vmatprep.mubr.bf16.mxu0 0
      %1918 = vmatmul.mubr.bf16.gmra.mxu0 %v1880
      %v1919 = vpop.f32.mrf.mxu0
      %v1920 = vadd.f32 0.0, %v1919
      %v1921 = vpop.f32.mrf.mxu0
      %v1922 = vpop.f32.mrf.mxu0
      %v1923 = vpop.f32.mrf.mxu0
      %1924 = vdwg.mxu0
      %1926 = vrot.lane.b32.xlu0 %v1875, 96
      %v1927 = vpop.permute.xlu0 %1926
      %v1929 = vsel %vm466, %v1875, 0
      %v1932 = vsel %vm466, %v1927, 0
      %1934 = vmatprep.subr.bf16.mxu0 0
      %1935 = vmatpush1.bf16.xpose.msra.mxu0 0
      %1936 = vmatprep.subr.bf16.mxu0 0
      %1937 = vmatpush1.bf16.xpose.msra.mxu0 0
      %1938 = vmatprep.subr.bf16.mxu0 0
      %1939 = vmatpush1.bf16.xpose.msra.mxu0 0
      %1940 = vmatprep.subr.bf16.mxu0 0
      %1941 = vmatpush1.bf16.xpose.msra.mxu0 0
      %1942 = vmatprep.subr.bf16.mxu0 0
      %1943 = vmatpush1.bf16.xpose.msra.mxu0 0
      %1944 = vmatprep.subr.bf16.mxu0 0
      %1945 = vmatpush1.bf16.xpose.msra.mxu0 0
      %1946 = vmatprep.subr.bf16.mxu0 0
      %1947 = vmatpush1.bf16.xpose.msra.mxu0 0
      %1948 = vmatprep.subr.bf16.mxu0 0
      %1949 = vmatpush1.bf16.xpose.msra.mxu0 %v1932
      %1950 = vmatprep.subr.bf16.mxu0 0
      %1951 = vmatpush2.bf16.xpose.msra.mxu0 0
      %1952 = vmatprep.subr.bf16.mxu0 0
      %1953 = vmatpush2.bf16.xpose.msra.mxu0 0
      %1954 = vmatprep.subr.bf16.mxu0 0
      %1955 = vmatpush2.bf16.xpose.msra.mxu0 0
      %1956 = vmatprep.subr.bf16.mxu0 0
      %1957 = vmatpush2.bf16.xpose.msra.mxu0 0
      %1958 = vmatprep.subr.bf16.mxu0 0
      %1959 = vmatpush2.bf16.xpose.msra.mxu0 0
      %1960 = vmatprep.subr.bf16.mxu0 0
      %1961 = vmatpush2.bf16.xpose.msra.mxu0 0
      %1962 = vmatprep.subr.bf16.mxu0 0
      %1963 = vmatpush2.bf16.xpose.msra.mxu0 0
      %1964 = vmatprep.subr.bf16.mxu0 0
      %1965 = vmatpush2.bf16.xpose.msra.mxu0 0
      %1966 = vmatprep.mubr.bf16.mxu0 0
      %1967 = vmatmul.mubr.bf16.gmra.mxu0 %v1929
      %v1968 = vpop.f32.mrf.mxu0
      %v1969 = vadd.f32 0.0, %v1968
      %v1970 = vpop.f32.mrf.mxu0
      %v1971 = vpop.f32.mrf.mxu0
      %v1972 = vpop.f32.mrf.mxu0
      %1973 = vdwg.mxu0
      %v1974 = vmul.f32 %v1920, 0.35355338
      %v1975 = vmul.f32 %v1969, 0.35355338
      %v1976 = vsel %vm466, %v1974, -inf
      %1977 = vmax.xlane.f32.xlu0 %v1976
      %v1978 = vpop.xlane.xlu0 %1977
      %v1979 = vsel %vm466, %v1975, -inf
      %1980 = vmax.xlane.f32.xlu0 %v1979
      %v1981 = vpop.xlane.xlu0 %1980
      %v1982 = vsub.f32 %v1974, %v1978
      %v1983 = vsub.f32 %v1975, %v1981
      %v1984 = vmul.f32 %v1982, 1.442695
      %v1985 = vpow.pop %v1984
      %v1986 = vmul.f32 %v1983, 1.442695
      %v1987 = vpow.pop %v1986
      %v1988 = vsel %vm466, %v1985, 0.0
      %1989 = vadd.xlane.f32.xlu0 %v1988
      %v1990 = vpop.xlane.xlu0 %1989
      %v1991 = vsel %vm466, %v1987, 0.0
      %1992 = vadd.xlane.f32.xlu0 %v1991
      %v1993 = vpop.xlane.xlu0 %1992
      %v1994 = vrcp.pop %v1990
      %v1995 = vrcp.pop %v1993
      %v1996 = vmul.f32 %v1985, %v1994
      %v1997 = vmul.f32 %v1987, %v1995
      %v1998 = vpack.c.bf16 %v1996, %v1996
      %v1999 = vpack.c.bf16 %v1997, %v1997
      %2000 = vrot.lane.b32.xlu0 %v1874, 64
      %v2001 = vpop.permute.xlu0 %2000
      %v2003 = vsel %vm466, %v1998, 0
      %v2006 = vsel %vm593, %v2001, 0
      %2008 = vmatprep.subr.bf16.mxu0 0
      %2009 = vmatpush1.bf16.msra.mxu0 0
      %2010 = vmatprep.subr.bf16.mxu0 0
      %2011 = vmatpush1.bf16.msra.mxu0 0
      %2012 = vmatprep.subr.bf16.mxu0 0
      %2013 = vmatpush1.bf16.msra.mxu0 0
      %2014 = vmatprep.subr.bf16.mxu0 0
      %2015 = vmatpush1.bf16.msra.mxu0 0
      %2016 = vmatprep.subr.bf16.mxu0 0
      %2017 = vmatpush1.bf16.msra.mxu0 0
      %2018 = vmatprep.subr.bf16.mxu0 0
      %2019 = vmatpush1.bf16.msra.mxu0 0
      %2020 = vmatprep.subr.bf16.mxu0 0
      %2021 = vmatpush1.bf16.msra.mxu0 0
      %2022 = vmatprep.subr.bf16.mxu0 0
      %2023 = vmatpush1.bf16.msra.mxu0 %v2006
      %2024 = vmatprep.subr.bf16.mxu0 0
      %2025 = vmatpush2.bf16.msra.mxu0 0
      %2026 = vmatprep.subr.bf16.mxu0 0
      %2027 = vmatpush2.bf16.msra.mxu0 0
      %2028 = vmatprep.subr.bf16.mxu0 0
      %2029 = vmatpush2.bf16.msra.mxu0 0
      %2030 = vmatprep.subr.bf16.mxu0 0
      %2031 = vmatpush2.bf16.msra.mxu0 0
      %2032 = vmatprep.subr.bf16.mxu0 0
      %2033 = vmatpush2.bf16.msra.mxu0 0
      %2034 = vmatprep.subr.bf16.mxu0 0
      %2035 = vmatpush2.bf16.msra.mxu0 0
      %2036 = vmatprep.subr.bf16.mxu0 0
      %2037 = vmatpush2.bf16.msra.mxu0 0
      %2038 = vmatprep.subr.bf16.mxu0 0
      %2039 = vmatpush2.bf16.msra.mxu0 0
      %2040 = vmatprep.mubr.bf16.mxu0 0
      %2041 = vmatmul.mubr.bf16.gmra.mxu0 %v2003
      %v2042 = vpop.f32.mrf.mxu0
      %v2043 = vadd.f32 0.0, %v2042
      %v2044 = vpop.f32.mrf.mxu0
      %v2045 = vpop.f32.mrf.mxu0
      %v2046 = vpop.f32.mrf.mxu0
      %2047 = vdwg.mxu0
      %2048 = vrot.lane.b32.xlu0 %v1875, 64
      %v2049 = vpop.permute.xlu0 %2048
      %v2051 = vsel %vm466, %v1999, 0
      %v2054 = vsel %vm593, %v2049, 0
      %2056 = vmatprep.subr.bf16.mxu0 0
      %2057 = vmatpush1.bf16.msra.mxu0 0
      %2058 = vmatprep.subr.bf16.mxu0 0
      %2059 = vmatpush1.bf16.msra.mxu0 0
      %2060 = vmatprep.subr.bf16.mxu0 0
      %2061 = vmatpush1.bf16.msra.mxu0 0
      %2062 = vmatprep.subr.bf16.mxu0 0
      %2063 = vmatpush1.bf16.msra.mxu0 0
      %2064 = vmatprep.subr.bf16.mxu0 0
      %2065 = vmatpush1.bf16.msra.mxu0 0
      %2066 = vmatprep.subr.bf16.mxu0 0
      %2067 = vmatpush1.bf16.msra.mxu0 0
      %2068 = vmatprep.subr.bf16.mxu0 0
      %2069 = vmatpush1.bf16.msra.mxu0 0
      %2070 = vmatprep.subr.bf16.mxu0 0
      %2071 = vmatpush1.bf16.msra.mxu0 %v2054
      %2072 = vmatprep.subr.bf16.mxu0 0
      %2073 = vmatpush2.bf16.msra.mxu0 0
      %2074 = vmatprep.subr.bf16.mxu0 0
      %2075 = vmatpush2.bf16.msra.mxu0 0
      %2076 = vmatprep.subr.bf16.mxu0 0
      %2077 = vmatpush2.bf16.msra.mxu0 0
      %2078 = vmatprep.subr.bf16.mxu0 0
      %2079 = vmatpush2.bf16.msra.mxu0 0
      %2080 = vmatprep.subr.bf16.mxu0 0
      %2081 = vmatpush2.bf16.msra.mxu0 0
      %2082 = vmatprep.subr.bf16.mxu0 0
      %2083 = vmatpush2.bf16.msra.mxu0 0
      %2084 = vmatprep.subr.bf16.mxu0 0
      %2085 = vmatpush2.bf16.msra.mxu0 0
      %2086 = vmatprep.subr.bf16.mxu0 0
      %2087 = vmatpush2.bf16.msra.mxu0 0
      %2088 = vmatprep.mubr.bf16.mxu0 0
      %2089 = vmatmul.mubr.bf16.gmra.mxu0 %v2051
      %v2090 = vpop.f32.mrf.mxu0
      %v2091 = vadd.f32 0.0, %v2090
      %v2092 = vpop.f32.mrf.mxu0
      %v2093 = vpop.f32.mrf.mxu0
      %v2094 = vpop.f32.mrf.mxu0
      %2095 = vdwg.mxu0
      %v2096 = vpack.c.bf16 %v2091, %v2043
      %2097 = vrot.lane.b32.xlu0 %v1874, 120
      %v2098 = vpop.permute.xlu0 %2097
      %2099 = vrot.lane.b32.xlu0 %v1874, 88
      %v2100 = vpop.permute.xlu0 %2099
      %v2102 = vsel %vm466, %v2098, 0
      %v2105 = vsel %vm466, %v2100, 0
      %2107 = vmatprep.subr.bf16.mxu0 0
      %2108 = vmatpush1.bf16.xpose.msra.mxu0 0
      %2109 = vmatprep.subr.bf16.mxu0 0
      %2110 = vmatpush1.bf16.xpose.msra.mxu0 0
      %2111 = vmatprep.subr.bf16.mxu0 0
      %2112 = vmatpush1.bf16.xpose.msra.mxu0 0
      %2113 = vmatprep.subr.bf16.mxu0 0
      %2114 = vmatpush1.bf16.xpose.msra.mxu0 0
      %2115 = vmatprep.subr.bf16.mxu0 0
      %2116 = vmatpush1.bf16.xpose.msra.mxu0 0
      %2117 = vmatprep.subr.bf16.mxu0 0
      %2118 = vmatpush1.bf16.xpose.msra.mxu0 0
      %2119 = vmatprep.subr.bf16.mxu0 0
      %2120 = vmatpush1.bf16.xpose.msra.mxu0 0
      %2121 = vmatprep.subr.bf16.mxu0 0
      %2122 = vmatpush1.bf16.xpose.msra.mxu0 %v2105
      %2123 = vmatprep.subr.bf16.mxu0 0
      %2124 = vmatpush2.bf16.xpose.msra.mxu0 0
      %2125 = vmatprep.subr.bf16.mxu0 0
      %2126 = vmatpush2.bf16.xpose.msra.mxu0 0
      %2127 = vmatprep.subr.bf16.mxu0 0
      %2128 = vmatpush2.bf16.xpose.msra.mxu0 0
      %2129 = vmatprep.subr.bf16.mxu0 0
      %2130 = vmatpush2.bf16.xpose.msra.mxu0 0
      %2131 = vmatprep.subr.bf16.mxu0 0
      %2132 = vmatpush2.bf16.xpose.msra.mxu0 0
      %2133 = vmatprep.subr.bf16.mxu0 0
      %2134 = vmatpush2.bf16.xpose.msra.mxu0 0
      %2135 = vmatprep.subr.bf16.mxu0 0
      %2136 = vmatpush2.bf16.xpose.msra.mxu0 0
      %2137 = vmatprep.subr.bf16.mxu0 0
      %2138 = vmatpush2.bf16.xpose.msra.mxu0 0
      %2139 = vmatprep.mubr.bf16.mxu0 0
      %2140 = vmatmul.mubr.bf16.gmra.mxu0 %v2102
      %v2141 = vpop.f32.mrf.mxu0
      %v2142 = vadd.f32 0.0, %v2141
      %v2143 = vpop.f32.mrf.mxu0
      %v2144 = vpop.f32.mrf.mxu0
      %v2145 = vpop.f32.mrf.mxu0
      %2146 = vdwg.mxu0
      %2147 = vrot.lane.b32.xlu0 %v1875, 120
      %v2148 = vpop.permute.xlu0 %2147
      %2149 = vrot.lane.b32.xlu0 %v1875, 88
      %v2150 = vpop.permute.xlu0 %2149
      %v2152 = vsel %vm466, %v2148, 0
      %v2155 = vsel %vm466, %v2150, 0
      %2157 = vmatprep.subr.bf16.mxu0 0
      %2158 = vmatpush1.bf16.xpose.msra.mxu0 0
      %2159 = vmatprep.subr.bf16.mxu0 0
      %2160 = vmatpush1.bf16.xpose.msra.mxu0 0
      %2161 = vmatprep.subr.bf16.mxu0 0
      %2162 = vmatpush1.bf16.xpose.msra.mxu0 0
      %2163 = vmatprep.subr.bf16.mxu0 0
      %2164 = vmatpush1.bf16.xpose.msra.mxu0 0
      %2165 = vmatprep.subr.bf16.mxu0 0
      %2166 = vmatpush1.bf16.xpose.msra.mxu0 0
      %2167 = vmatprep.subr.bf16.mxu0 0
      %2168 = vmatpush1.bf16.xpose.msra.mxu0 0
      %2169 = vmatprep.subr.bf16.mxu0 0
      %2170 = vmatpush1.bf16.xpose.msra.mxu0 0
      %2171 = vmatprep.subr.bf16.mxu0 0
      %2172 = vmatpush1.bf16.xpose.msra.mxu0 %v2155
      %2173 = vmatprep.subr.bf16.mxu0 0
      %2174 = vmatpush2.bf16.xpose.msra.mxu0 0
      %2175 = vmatprep.subr.bf16.mxu0 0
      %2176 = vmatpush2.bf16.xpose.msra.mxu0 0
      %2177 = vmatprep.subr.bf16.mxu0 0
      %2178 = vmatpush2.bf16.xpose.msra.mxu0 0
      %2179 = vmatprep.subr.bf16.mxu0 0
      %2180 = vmatpush2.bf16.xpose.msra.mxu0 0
      %2181 = vmatprep.subr.bf16.mxu0 0
      %2182 = vmatpush2.bf16.xpose.msra.mxu0 0
      %2183 = vmatprep.subr.bf16.mxu0 0
      %2184 = vmatpush2.bf16.xpose.msra.mxu0 0
      %2185 = vmatprep.subr.bf16.mxu0 0
      %2186 = vmatpush2.bf16.xpose.msra.mxu0 0
      %2187 = vmatprep.subr.bf16.mxu0 0
      %2188 = vmatpush2.bf16.xpose.msra.mxu0 0
      %2189 = vmatprep.mubr.bf16.mxu0 0
      %2190 = vmatmul.mubr.bf16.gmra.mxu0 %v2152
      %v2191 = vpop.f32.mrf.mxu0
      %v2192 = vadd.f32 0.0, %v2191
      %v2193 = vpop.f32.mrf.mxu0
      %v2194 = vpop.f32.mrf.mxu0
      %v2195 = vpop.f32.mrf.mxu0
      %2196 = vdwg.mxu0
      %v2197 = vmul.f32 %v2142, 0.35355338
      %v2198 = vmul.f32 %v2192, 0.35355338
      %v2199 = vsel %vm466, %v2197, -inf
      %2200 = vmax.xlane.f32.xlu0 %v2199
      %v2201 = vpop.xlane.xlu0 %2200
      %v2202 = vsel %vm466, %v2198, -inf
      %2203 = vmax.xlane.f32.xlu0 %v2202
      %v2204 = vpop.xlane.xlu0 %2203
      %v2205 = vsub.f32 %v2197, %v2201
      %v2206 = vsub.f32 %v2198, %v2204
      %v2207 = vmul.f32 %v2205, 1.442695
      %v2208 = vpow.pop %v2207
      %v2209 = vmul.f32 %v2206, 1.442695
      %v2210 = vpow.pop %v2209
      %v2211 = vsel %vm466, %v2208, 0.0
      %2212 = vadd.xlane.f32.xlu0 %v2211
      %v2213 = vpop.xlane.xlu0 %2212
      %v2214 = vsel %vm466, %v2210, 0.0
      %2215 = vadd.xlane.f32.xlu0 %v2214
      %v2216 = vpop.xlane.xlu0 %2215
      %v2217 = vrcp.pop %v2213
      %v2218 = vrcp.pop %v2216
      %v2219 = vmul.f32 %v2208, %v2217
      %v2220 = vmul.f32 %v2210, %v2218
      %v2221 = vpack.c.bf16 %v2219, %v2219
      %v2222 = vpack.c.bf16 %v2220, %v2220
      %2223 = vrot.lane.b32.xlu0 %v1874, 56
      %v2224 = vpop.permute.xlu0 %2223
      %v2226 = vsel %vm466, %v2221, 0
      %v2229 = vsel %vm593, %v2224, 0
      %2231 = vmatprep.subr.bf16.mxu0 0
      %2232 = vmatpush1.bf16.msra.mxu0 0
      %2233 = vmatprep.subr.bf16.mxu0 0
      %2234 = vmatpush1.bf16.msra.mxu0 0
      %2235 = vmatprep.subr.bf16.mxu0 0
      %2236 = vmatpush1.bf16.msra.mxu0 0
      %2237 = vmatprep.subr.bf16.mxu0 0
      %2238 = vmatpush1.bf16.msra.mxu0 0
      %2239 = vmatprep.subr.bf16.mxu0 0
      %2240 = vmatpush1.bf16.msra.mxu0 0
      %2241 = vmatprep.subr.bf16.mxu0 0
      %2242 = vmatpush1.bf16.msra.mxu0 0
      %2243 = vmatprep.subr.bf16.mxu0 0
      %2244 = vmatpush1.bf16.msra.mxu0 0
      %2245 = vmatprep.subr.bf16.mxu0 0
      %2246 = vmatpush1.bf16.msra.mxu0 %v2229
      %2247 = vmatprep.subr.bf16.mxu0 0
      %2248 = vmatpush2.bf16.msra.mxu0 0
      %2249 = vmatprep.subr.bf16.mxu0 0
      %2250 = vmatpush2.bf16.msra.mxu0 0
      %2251 = vmatprep.subr.bf16.mxu0 0
      %2252 = vmatpush2.bf16.msra.mxu0 0
      %2253 = vmatprep.subr.bf16.mxu0 0
      %2254 = vmatpush2.bf16.msra.mxu0 0
      %2255 = vmatprep.subr.bf16.mxu0 0
      %2256 = vmatpush2.bf16.msra.mxu0 0
      %2257 = vmatprep.subr.bf16.mxu0 0
      %2258 = vmatpush2.bf16.msra.mxu0 0
      %2259 = vmatprep.subr.bf16.mxu0 0
      %2260 = vmatpush2.bf16.msra.mxu0 0
      %2261 = vmatprep.subr.bf16.mxu0 0
      %2262 = vmatpush2.bf16.msra.mxu0 0
      %2263 = vmatprep.mubr.bf16.mxu0 0
      %2264 = vmatmul.mubr.bf16.gmra.mxu0 %v2226
      %v2265 = vpop.f32.mrf.mxu0
      %v2266 = vadd.f32 0.0, %v2265
      %v2267 = vpop.f32.mrf.mxu0
      %v2268 = vpop.f32.mrf.mxu0
      %v2269 = vpop.f32.mrf.mxu0
      %2270 = vdwg.mxu0
      %2271 = vrot.lane.b32.xlu0 %v1875, 56
      %v2272 = vpop.permute.xlu0 %2271
      %v2274 = vsel %vm466, %v2222, 0
      %v2277 = vsel %vm593, %v2272, 0
      %2279 = vmatprep.subr.bf16.mxu0 0
      %2280 = vmatpush1.bf16.msra.mxu0 0
      %2281 = vmatprep.subr.bf16.mxu0 0
      %2282 = vmatpush1.bf16.msra.mxu0 0
      %2283 = vmatprep.subr.bf16.mxu0 0
      %2284 = vmatpush1.bf16.msra.mxu0 0
      %2285 = vmatprep.subr.bf16.mxu0 0
      %2286 = vmatpush1.bf16.msra.mxu0 0
      %2287 = vmatprep.subr.bf16.mxu0 0
      %2288 = vmatpush1.bf16.msra.mxu0 0
      %2289 = vmatprep.subr.bf16.mxu0 0
      %2290 = vmatpush1.bf16.msra.mxu0 0
      %2291 = vmatprep.subr.bf16.mxu0 0
      %2292 = vmatpush1.bf16.msra.mxu0 0
      %2293 = vmatprep.subr.bf16.mxu0 0
      %2294 = vmatpush1.bf16.msra.mxu0 %v2277
      %2295 = vmatprep.subr.bf16.mxu0 0
      %2296 = vmatpush2.bf16.msra.mxu0 0
      %2297 = vmatprep.subr.bf16.mxu0 0
      %2298 = vmatpush2.bf16.msra.mxu0 0
      %2299 = vmatprep.subr.bf16.mxu0 0
      %2300 = vmatpush2.bf16.msra.mxu0 0
      %2301 = vmatprep.subr.bf16.mxu0 0
      %2302 = vmatpush2.bf16.msra.mxu0 0
      %2303 = vmatprep.subr.bf16.mxu0 0
      %2304 = vmatpush2.bf16.msra.mxu0 0
      %2305 = vmatprep.subr.bf16.mxu0 0
      %2306 = vmatpush2.bf16.msra.mxu0 0
      %2307 = vmatprep.subr.bf16.mxu0 0
      %2308 = vmatpush2.bf16.msra.mxu0 0
      %2309 = vmatprep.subr.bf16.mxu0 0
      %2310 = vmatpush2.bf16.msra.mxu0 0
      %2311 = vmatprep.mubr.bf16.mxu0 0
      %2312 = vmatmul.mubr.bf16.gmra.mxu0 %v2274
      %v2313 = vpop.f32.mrf.mxu0
      %v2314 = vadd.f32 0.0, %v2313
      %v2315 = vpop.f32.mrf.mxu0
      %v2316 = vpop.f32.mrf.mxu0
      %v2317 = vpop.f32.mrf.mxu0
      %2318 = vdwg.mxu0
      %v2319 = vpack.c.bf16 %v2314, %v2266
      %v2320 = vunpack.c.h.b16 %v1805
      %v2321 = vpack.c.b16 %v2320, %v2320
      %v2323 = vsel %vm466, %v2319, 0
      %v2326 = vsel %vm593, %v2321, 0
      %2328 = vmatprep.subr.bf16.mxu0 0
      %2329 = vmatpush1.bf16.msra.mxu0 0
      %2330 = vmatprep.subr.bf16.mxu0 0
      %2331 = vmatpush1.bf16.msra.mxu0 0
      %2332 = vmatprep.subr.bf16.mxu0 0
      %2333 = vmatpush1.bf16.msra.mxu0 0
      %2334 = vmatprep.subr.bf16.mxu0 0
      %2335 = vmatpush1.bf16.msra.mxu0 0
      %2336 = vmatprep.subr.bf16.mxu0 0
      %2337 = vmatpush1.bf16.msra.mxu0 0
      %2338 = vmatprep.subr.bf16.mxu0 0
      %2339 = vmatpush1.bf16.msra.mxu0 0
      %2340 = vmatprep.subr.bf16.mxu0 0
      %2341 = vmatpush1.bf16.msra.mxu0 0
      %2342 = vmatprep.subr.bf16.mxu0 0
      %2343 = vmatpush1.bf16.msra.mxu0 %v2326
      %2344 = vmatprep.subr.bf16.mxu0 0
      %2345 = vmatpush2.bf16.msra.mxu0 0
      %2346 = vmatprep.subr.bf16.mxu0 0
      %2347 = vmatpush2.bf16.msra.mxu0 0
      %2348 = vmatprep.subr.bf16.mxu0 0
      %2349 = vmatpush2.bf16.msra.mxu0 0
      %2350 = vmatprep.subr.bf16.mxu0 0
      %2351 = vmatpush2.bf16.msra.mxu0 0
      %2352 = vmatprep.subr.bf16.mxu0 0
      %2353 = vmatpush2.bf16.msra.mxu0 0
      %2354 = vmatprep.subr.bf16.mxu0 0
      %2355 = vmatpush2.bf16.msra.mxu0 0
      %2356 = vmatprep.subr.bf16.mxu0 0
      %2357 = vmatpush2.bf16.msra.mxu0 0
      %2358 = vmatprep.subr.bf16.mxu0 0
      %2359 = vmatpush2.bf16.msra.mxu0 0
      %2360 = vmatprep.mubr.bf16.mxu0 0
      %2361 = vmatmul.mubr.bf16.gmra.mxu0 %v2323
      %v2362 = vpop.f32.mrf.mxu0
      %v2363 = vadd.f32 0.0, %v2362
      %v2364 = vpop.f32.mrf.mxu0
      %v2365 = vpop.f32.mrf.mxu0
      %v2366 = vadd.f32 0.0, %v2365
      %v2367 = vpop.f32.mrf.mxu0
      %2368 = vdwg.mxu0
      %v2369 = vunpack.c.h.b16 %v1803
      %v2370 = vpack.c.b16 %v2369, %v2369
      %v2372 = vsel %vm466, %v2096, 0
      %v2375 = vsel %vm593, %v2370, 0
      %2377 = vmatprep.subr.bf16.mxu0 0
      %2378 = vmatpush1.bf16.msra.mxu0 0
      %2379 = vmatprep.subr.bf16.mxu0 0
      %2380 = vmatpush1.bf16.msra.mxu0 0
      %2381 = vmatprep.subr.bf16.mxu0 0
      %2382 = vmatpush1.bf16.msra.mxu0 0
      %2383 = vmatprep.subr.bf16.mxu0 0
      %2384 = vmatpush1.bf16.msra.mxu0 0
      %2385 = vmatprep.subr.bf16.mxu0 0
      %2386 = vmatpush1.bf16.msra.mxu0 0
      %2387 = vmatprep.subr.bf16.mxu0 0
      %2388 = vmatpush1.bf16.msra.mxu0 0
      %2389 = vmatprep.subr.bf16.mxu0 0
      %2390 = vmatpush1.bf16.msra.mxu0 0
      %2391 = vmatprep.subr.bf16.mxu0 0
      %2392 = vmatpush1.bf16.msra.mxu0 %v2375
      %2393 = vmatprep.subr.bf16.mxu0 0
      %2394 = vmatpush2.bf16.msra.mxu0 0
      %2395 = vmatprep.subr.bf16.mxu0 0
      %2396 = vmatpush2.bf16.msra.mxu0 0
      %2397 = vmatprep.subr.bf16.mxu0 0
      %2398 = vmatpush2.bf16.msra.mxu0 0
      %2399 = vmatprep.subr.bf16.mxu0 0
      %2400 = vmatpush2.bf16.msra.mxu0 0
      %2401 = vmatprep.subr.bf16.mxu0 0
      %2402 = vmatpush2.bf16.msra.mxu0 0
      %2403 = vmatprep.subr.bf16.mxu0 0
      %2404 = vmatpush2.bf16.msra.mxu0 0
      %2405 = vmatprep.subr.bf16.mxu0 0
      %2406 = vmatpush2.bf16.msra.mxu0 0
      %2407 = vmatprep.subr.bf16.mxu0 0
      %2408 = vmatpush2.bf16.msra.mxu0 0
      %2409 = vmatprep.mubr.bf16.mxu0 0
      %2410 = vmatmul.mubr.bf16.gmra.mxu0 %v2372
      %v2411 = vpop.f32.mrf.mxu0
      %v2412 = vadd.f32 %v2363, %v2411
      %v2413 = vpop.f32.mrf.mxu0
      %v2414 = vpop.f32.mrf.mxu0
      %v2415 = vadd.f32 %v2366, %v2414
      %v2416 = vpop.f32.mrf.mxu0
      %2417 = vdwg.mxu0
      %2418 = vrot.lane.b32.xlu0 %v1874, 112
      %v2419 = vpop.permute.xlu0 %2418
      %2420 = vrot.lane.b32.xlu0 %v1874, 80
      %v2421 = vpop.permute.xlu0 %2420
      %v2423 = vsel %vm466, %v2419, 0
      %v2426 = vsel %vm466, %v2421, 0
      %2428 = vmatprep.subr.bf16.mxu0 0
      %2429 = vmatpush1.bf16.xpose.msra.mxu0 0
      %2430 = vmatprep.subr.bf16.mxu0 0
      %2431 = vmatpush1.bf16.xpose.msra.mxu0 0
      %2432 = vmatprep.subr.bf16.mxu0 0
      %2433 = vmatpush1.bf16.xpose.msra.mxu0 0
      %2434 = vmatprep.subr.bf16.mxu0 0
      %2435 = vmatpush1.bf16.xpose.msra.mxu0 0
      %2436 = vmatprep.subr.bf16.mxu0 0
      %2437 = vmatpush1.bf16.xpose.msra.mxu0 0
      %2438 = vmatprep.subr.bf16.mxu0 0
      %2439 = vmatpush1.bf16.xpose.msra.mxu0 0
      %2440 = vmatprep.subr.bf16.mxu0 0
      %2441 = vmatpush1.bf16.xpose.msra.mxu0 0
      %2442 = vmatprep.subr.bf16.mxu0 0
      %2443 = vmatpush1.bf16.xpose.msra.mxu0 %v2426
      %2444 = vmatprep.subr.bf16.mxu0 0
      %2445 = vmatpush2.bf16.xpose.msra.mxu0 0
      %2446 = vmatprep.subr.bf16.mxu0 0
      %2447 = vmatpush2.bf16.xpose.msra.mxu0 0
      %2448 = vmatprep.subr.bf16.mxu0 0
      %2449 = vmatpush2.bf16.xpose.msra.mxu0 0
      %2450 = vmatprep.subr.bf16.mxu0 0
      %2451 = vmatpush2.bf16.xpose.msra.mxu0 0
      %2452 = vmatprep.subr.bf16.mxu0 0
      %2453 = vmatpush2.bf16.xpose.msra.mxu0 0
      %2454 = vmatprep.subr.bf16.mxu0 0
      %2455 = vmatpush2.bf16.xpose.msra.mxu0 0
      %2456 = vmatprep.subr.bf16.mxu0 0
      %2457 = vmatpush2.bf16.xpose.msra.mxu0 0
      %2458 = vmatprep.subr.bf16.mxu0 0
      %2459 = vmatpush2.bf16.xpose.msra.mxu0 0
      %2460 = vmatprep.mubr.bf16.mxu0 0
      %2461 = vmatmul.mubr.bf16.gmra.mxu0 %v2423
      %v2462 = vpop.f32.mrf.mxu0
      %v2463 = vadd.f32 0.0, %v2462
      %v2464 = vpop.f32.mrf.mxu0
      %v2465 = vpop.f32.mrf.mxu0
      %v2466 = vpop.f32.mrf.mxu0
      %2467 = vdwg.mxu0
      %2468 = vrot.lane.b32.xlu0 %v1875, 112
      %v2469 = vpop.permute.xlu0 %2468
      %2470 = vrot.lane.b32.xlu0 %v1875, 80
      %v2471 = vpop.permute.xlu0 %2470
      %v2473 = vsel %vm466, %v2469, 0
      %v2476 = vsel %vm466, %v2471, 0
      %2478 = vmatprep.subr.bf16.mxu0 0
      %2479 = vmatpush1.bf16.xpose.msra.mxu0 0
      %2480 = vmatprep.subr.bf16.mxu0 0
      %2481 = vmatpush1.bf16.xpose.msra.mxu0 0
      %2482 = vmatprep.subr.bf16.mxu0 0
      %2483 = vmatpush1.bf16.xpose.msra.mxu0 0
      %2484 = vmatprep.subr.bf16.mxu0 0
      %2485 = vmatpush1.bf16.xpose.msra.mxu0 0
      %2486 = vmatprep.subr.bf16.mxu0 0
      %2487 = vmatpush1.bf16.xpose.msra.mxu0 0
      %2488 = vmatprep.subr.bf16.mxu0 0
      %2489 = vmatpush1.bf16.xpose.msra.mxu0 0
      %2490 = vmatprep.subr.bf16.mxu0 0
      %2491 = vmatpush1.bf16.xpose.msra.mxu0 0
      %2492 = vmatprep.subr.bf16.mxu0 0
      %2493 = vmatpush1.bf16.xpose.msra.mxu0 %v2476
      %2494 = vmatprep.subr.bf16.mxu0 0
      %2495 = vmatpush2.bf16.xpose.msra.mxu0 0
      %2496 = vmatprep.subr.bf16.mxu0 0
      %2497 = vmatpush2.bf16.xpose.msra.mxu0 0
      %2498 = vmatprep.subr.bf16.mxu0 0
      %2499 = vmatpush2.bf16.xpose.msra.mxu0 0
      %2500 = vmatprep.subr.bf16.mxu0 0
      %2501 = vmatpush2.bf16.xpose.msra.mxu0 0
      %2502 = vmatprep.subr.bf16.mxu0 0
      %2503 = vmatpush2.bf16.xpose.msra.mxu0 0
      %2504 = vmatprep.subr.bf16.mxu0 0
      %2505 = vmatpush2.bf16.xpose.msra.mxu0 0
      %2506 = vmatprep.subr.bf16.mxu0 0
      %2507 = vmatpush2.bf16.xpose.msra.mxu0 0
      %2508 = vmatprep.subr.bf16.mxu0 0
      %2509 = vmatpush2.bf16.xpose.msra.mxu0 0
      %2510 = vmatprep.mubr.bf16.mxu0 0
      %2511 = vmatmul.mubr.bf16.gmra.mxu0 %v2473
      %v2512 = vpop.f32.mrf.mxu0
      %v2513 = vadd.f32 0.0, %v2512
      %v2514 = vpop.f32.mrf.mxu0
      %v2515 = vpop.f32.mrf.mxu0
      %v2516 = vpop.f32.mrf.mxu0
      %2517 = vdwg.mxu0
      %v2518 = vmul.f32 %v2463, 0.35355338
      %v2519 = vmul.f32 %v2513, 0.35355338
      %v2520 = vsel %vm466, %v2518, -inf
      %2521 = vmax.xlane.f32.xlu0 %v2520
      %v2522 = vpop.xlane.xlu0 %2521
      %v2523 = vsel %vm466, %v2519, -inf
      %2524 = vmax.xlane.f32.xlu0 %v2523
      %v2525 = vpop.xlane.xlu0 %2524
      %v2526 = vsub.f32 %v2518, %v2522
      %v2527 = vsub.f32 %v2519, %v2525
      %v2528 = vmul.f32 %v2526, 1.442695
      %v2529 = vpow.pop %v2528
      %v2530 = vmul.f32 %v2527, 1.442695
      %v2531 = vpow.pop %v2530
      %v2532 = vsel %vm466, %v2529, 0.0
      %2533 = vadd.xlane.f32.xlu0 %v2532
      %v2534 = vpop.xlane.xlu0 %2533
      %v2535 = vsel %vm466, %v2531, 0.0
      %2536 = vadd.xlane.f32.xlu0 %v2535
      %v2537 = vpop.xlane.xlu0 %2536
      %v2538 = vrcp.pop %v2534
      %v2539 = vrcp.pop %v2537
      %v2540 = vmul.f32 %v2529, %v2538
      %v2541 = vmul.f32 %v2531, %v2539
      %v2542 = vpack.c.bf16 %v2540, %v2540
      %v2543 = vpack.c.bf16 %v2541, %v2541
      %2544 = vrot.lane.b32.xlu0 %v1874, 48
      %v2545 = vpop.permute.xlu0 %2544
      %v2547 = vsel %vm466, %v2542, 0
      %v2550 = vsel %vm593, %v2545, 0
      %2552 = vmatprep.subr.bf16.mxu0 0
      %2553 = vmatpush1.bf16.msra.mxu0 0
      %2554 = vmatprep.subr.bf16.mxu0 0
      %2555 = vmatpush1.bf16.msra.mxu0 0
      %2556 = vmatprep.subr.bf16.mxu0 0
      %2557 = vmatpush1.bf16.msra.mxu0 0
      %2558 = vmatprep.subr.bf16.mxu0 0
      %2559 = vmatpush1.bf16.msra.mxu0 0
      %2560 = vmatprep.subr.bf16.mxu0 0
      %2561 = vmatpush1.bf16.msra.mxu0 0
      %2562 = vmatprep.subr.bf16.mxu0 0
      %2563 = vmatpush1.bf16.msra.mxu0 0
      %2564 = vmatprep.subr.bf16.mxu0 0
      %2565 = vmatpush1.bf16.msra.mxu0 0
      %2566 = vmatprep.subr.bf16.mxu0 0
      %2567 = vmatpush1.bf16.msra.mxu0 %v2550
      %2568 = vmatprep.subr.bf16.mxu0 0
      %2569 = vmatpush2.bf16.msra.mxu0 0
      %2570 = vmatprep.subr.bf16.mxu0 0
      %2571 = vmatpush2.bf16.msra.mxu0 0
      %2572 = vmatprep.subr.bf16.mxu0 0
      %2573 = vmatpush2.bf16.msra.mxu0 0
      %2574 = vmatprep.subr.bf16.mxu0 0
      %2575 = vmatpush2.bf16.msra.mxu0 0
      %2576 = vmatprep.subr.bf16.mxu0 0
      %2577 = vmatpush2.bf16.msra.mxu0 0
      %2578 = vmatprep.subr.bf16.mxu0 0
      %2579 = vmatpush2.bf16.msra.mxu0 0
      %2580 = vmatprep.subr.bf16.mxu0 0
      %2581 = vmatpush2.bf16.msra.mxu0 0
      %2582 = vmatprep.subr.bf16.mxu0 0
      %2583 = vmatpush2.bf16.msra.mxu0 0
      %2584 = vmatprep.mubr.bf16.mxu0 0
      %2585 = vmatmul.mubr.bf16.gmra.mxu0 %v2547
      %v2586 = vpop.f32.mrf.mxu0
      %v2587 = vadd.f32 0.0, %v2586
      %v2588 = vpop.f32.mrf.mxu0
      %v2589 = vpop.f32.mrf.mxu0
      %v2590 = vpop.f32.mrf.mxu0
      %2591 = vdwg.mxu0
      %2592 = vrot.lane.b32.xlu0 %v1875, 48
      %v2593 = vpop.permute.xlu0 %2592
      %v2595 = vsel %vm466, %v2543, 0
      %v2598 = vsel %vm593, %v2593, 0
      %2600 = vmatprep.subr.bf16.mxu0 0
      %2601 = vmatpush1.bf16.msra.mxu0 0
      %2602 = vmatprep.subr.bf16.mxu0 0
      %2603 = vmatpush1.bf16.msra.mxu0 0
      %2604 = vmatprep.subr.bf16.mxu0 0
      %2605 = vmatpush1.bf16.msra.mxu0 0
      %2606 = vmatprep.subr.bf16.mxu0 0
      %2607 = vmatpush1.bf16.msra.mxu0 0
      %2608 = vmatprep.subr.bf16.mxu0 0
      %2609 = vmatpush1.bf16.msra.mxu0 0
      %2610 = vmatprep.subr.bf16.mxu0 0
      %2611 = vmatpush1.bf16.msra.mxu0 0
      %2612 = vmatprep.subr.bf16.mxu0 0
      %2613 = vmatpush1.bf16.msra.mxu0 0
      %2614 = vmatprep.subr.bf16.mxu0 0
      %2615 = vmatpush1.bf16.msra.mxu0 %v2598
      %2616 = vmatprep.subr.bf16.mxu0 0
      %2617 = vmatpush2.bf16.msra.mxu0 0
      %2618 = vmatprep.subr.bf16.mxu0 0
      %2619 = vmatpush2.bf16.msra.mxu0 0
      %2620 = vmatprep.subr.bf16.mxu0 0
      %2621 = vmatpush2.bf16.msra.mxu0 0
      %2622 = vmatprep.subr.bf16.mxu0 0
      %2623 = vmatpush2.bf16.msra.mxu0 0
      %2624 = vmatprep.subr.bf16.mxu0 0
      %2625 = vmatpush2.bf16.msra.mxu0 0
      %2626 = vmatprep.subr.bf16.mxu0 0
      %2627 = vmatpush2.bf16.msra.mxu0 0
      %2628 = vmatprep.subr.bf16.mxu0 0
      %2629 = vmatpush2.bf16.msra.mxu0 0
      %2630 = vmatprep.subr.bf16.mxu0 0
      %2631 = vmatpush2.bf16.msra.mxu0 0
      %2632 = vmatprep.mubr.bf16.mxu0 0
      %2633 = vmatmul.mubr.bf16.gmra.mxu0 %v2595
      %v2634 = vpop.f32.mrf.mxu0
      %v2635 = vadd.f32 0.0, %v2634
      %v2636 = vpop.f32.mrf.mxu0
      %v2637 = vpop.f32.mrf.mxu0
      %v2638 = vpop.f32.mrf.mxu0
      %2639 = vdwg.mxu0
      %v2640 = vpack.c.bf16 %v2635, %v2587
      %v2641 = vunpack.c.h.b16 %v1807
      %v2642 = vpack.c.b16 %v2641, %v2641
      %v2644 = vsel %vm466, %v2640, 0
      %v2647 = vsel %vm593, %v2642, 0
      %2649 = vmatprep.subr.bf16.mxu0 0
      %2650 = vmatpush1.bf16.msra.mxu0 0
      %2651 = vmatprep.subr.bf16.mxu0 0
      %2652 = vmatpush1.bf16.msra.mxu0 0
      %2653 = vmatprep.subr.bf16.mxu0 0
      %2654 = vmatpush1.bf16.msra.mxu0 0
      %2655 = vmatprep.subr.bf16.mxu0 0
      %2656 = vmatpush1.bf16.msra.mxu0 0
      %2657 = vmatprep.subr.bf16.mxu0 0
      %2658 = vmatpush1.bf16.msra.mxu0 0
      %2659 = vmatprep.subr.bf16.mxu0 0
      %2660 = vmatpush1.bf16.msra.mxu0 0
      %2661 = vmatprep.subr.bf16.mxu0 0
      %2662 = vmatpush1.bf16.msra.mxu0 0
      %2663 = vmatprep.subr.bf16.mxu0 0
      %2664 = vmatpush1.bf16.msra.mxu0 %v2647
      %2665 = vmatprep.subr.bf16.mxu0 0
      %2666 = vmatpush2.bf16.msra.mxu0 0
      %2667 = vmatprep.subr.bf16.mxu0 0
      %2668 = vmatpush2.bf16.msra.mxu0 0
      %2669 = vmatprep.subr.bf16.mxu0 0
      %2670 = vmatpush2.bf16.msra.mxu0 0
      %2671 = vmatprep.subr.bf16.mxu0 0
      %2672 = vmatpush2.bf16.msra.mxu0 0
      %2673 = vmatprep.subr.bf16.mxu0 0
      %2674 = vmatpush2.bf16.msra.mxu0 0
      %2675 = vmatprep.subr.bf16.mxu0 0
      %2676 = vmatpush2.bf16.msra.mxu0 0
      %2677 = vmatprep.subr.bf16.mxu0 0
      %2678 = vmatpush2.bf16.msra.mxu0 0
      %2679 = vmatprep.subr.bf16.mxu0 0
      %2680 = vmatpush2.bf16.msra.mxu0 0
      %2681 = vmatprep.mubr.bf16.mxu0 0
      %2682 = vmatmul.mubr.bf16.gmra.mxu0 %v2644
      %v2683 = vpop.f32.mrf.mxu0
      %v2684 = vadd.f32 0.0, %v2683
      %v2685 = vpop.f32.mrf.mxu0
      %v2686 = vpop.f32.mrf.mxu0
      %v2687 = vadd.f32 0.0, %v2686
      %v2688 = vpop.f32.mrf.mxu0
      %2689 = vdwg.mxu0
      %v2690 = vadd.f32 %v2412, %v2684
      %v2691 = vadd.f32 %v2415, %v2687
      %2692 = vrot.lane.b32.xlu0 %v1874, 104
      %v2693 = vpop.permute.xlu0 %2692
      %2694 = vrot.lane.b32.xlu0 %v1874, 72
      %v2695 = vpop.permute.xlu0 %2694
      %v2697 = vsel %vm466, %v2693, 0
      %v2700 = vsel %vm466, %v2695, 0
      %2702 = vmatprep.subr.bf16.mxu0 0
      %2703 = vmatpush1.bf16.xpose.msra.mxu0 0
      %2704 = vmatprep.subr.bf16.mxu0 0
      %2705 = vmatpush1.bf16.xpose.msra.mxu0 0
      %2706 = vmatprep.subr.bf16.mxu0 0
      %2707 = vmatpush1.bf16.xpose.msra.mxu0 0
      %2708 = vmatprep.subr.bf16.mxu0 0
      %2709 = vmatpush1.bf16.xpose.msra.mxu0 0
      %2710 = vmatprep.subr.bf16.mxu0 0
      %2711 = vmatpush1.bf16.xpose.msra.mxu0 0
      %2712 = vmatprep.subr.bf16.mxu0 0
      %2713 = vmatpush1.bf16.xpose.msra.mxu0 0
      %2714 = vmatprep.subr.bf16.mxu0 0
      %2715 = vmatpush1.bf16.xpose.msra.mxu0 0
      %2716 = vmatprep.subr.bf16.mxu0 0
      %2717 = vmatpush1.bf16.xpose.msra.mxu0 %v2700
      %2718 = vmatprep.subr.bf16.mxu0 0
      %2719 = vmatpush2.bf16.xpose.msra.mxu0 0
      %2720 = vmatprep.subr.bf16.mxu0 0
      %2721 = vmatpush2.bf16.xpose.msra.mxu0 0
      %2722 = vmatprep.subr.bf16.mxu0 0
      %2723 = vmatpush2.bf16.xpose.msra.mxu0 0
      %2724 = vmatprep.subr.bf16.mxu0 0
      %2725 = vmatpush2.bf16.xpose.msra.mxu0 0
      %2726 = vmatprep.subr.bf16.mxu0 0
      %2727 = vmatpush2.bf16.xpose.msra.mxu0 0
      %2728 = vmatprep.subr.bf16.mxu0 0
      %2729 = vmatpush2.bf16.xpose.msra.mxu0 0
      %2730 = vmatprep.subr.bf16.mxu0 0
      %2731 = vmatpush2.bf16.xpose.msra.mxu0 0
      %2732 = vmatprep.subr.bf16.mxu0 0
      %2733 = vmatpush2.bf16.xpose.msra.mxu0 0
      %2734 = vmatprep.mubr.bf16.mxu0 0
      %2735 = vmatmul.mubr.bf16.gmra.mxu0 %v2697
      %v2736 = vpop.f32.mrf.mxu0
      %v2737 = vadd.f32 0.0, %v2736
      %v2738 = vpop.f32.mrf.mxu0
      %v2739 = vpop.f32.mrf.mxu0
      %v2740 = vpop.f32.mrf.mxu0
      %2741 = vdwg.mxu0
      %2742 = vrot.lane.b32.xlu0 %v1875, 104
      %v2743 = vpop.permute.xlu0 %2742
      %2744 = vrot.lane.b32.xlu0 %v1875, 72
      %v2745 = vpop.permute.xlu0 %2744
      %v2747 = vsel %vm466, %v2743, 0
      %v2750 = vsel %vm466, %v2745, 0
      %2752 = vmatprep.subr.bf16.mxu0 0
      %2753 = vmatpush1.bf16.xpose.msra.mxu0 0
      %2754 = vmatprep.subr.bf16.mxu0 0
      %2755 = vmatpush1.bf16.xpose.msra.mxu0 0
      %2756 = vmatprep.subr.bf16.mxu0 0
      %2757 = vmatpush1.bf16.xpose.msra.mxu0 0
      %2758 = vmatprep.subr.bf16.mxu0 0
      %2759 = vmatpush1.bf16.xpose.msra.mxu0 0
      %2760 = vmatprep.subr.bf16.mxu0 0
      %2761 = vmatpush1.bf16.xpose.msra.mxu0 0
      %2762 = vmatprep.subr.bf16.mxu0 0
      %2763 = vmatpush1.bf16.xpose.msra.mxu0 0
      %2764 = vmatprep.subr.bf16.mxu0 0
      %2765 = vmatpush1.bf16.xpose.msra.mxu0 0
      %2766 = vmatprep.subr.bf16.mxu0 0
      %2767 = vmatpush1.bf16.xpose.msra.mxu0 %v2750
      %2768 = vmatprep.subr.bf16.mxu0 0
      %2769 = vmatpush2.bf16.xpose.msra.mxu0 0
      %2770 = vmatprep.subr.bf16.mxu0 0
      %2771 = vmatpush2.bf16.xpose.msra.mxu0 0
      %2772 = vmatprep.subr.bf16.mxu0 0
      %2773 = vmatpush2.bf16.xpose.msra.mxu0 0
      %2774 = vmatprep.subr.bf16.mxu0 0
      %2775 = vmatpush2.bf16.xpose.msra.mxu0 0
      %2776 = vmatprep.subr.bf16.mxu0 0
      %2777 = vmatpush2.bf16.xpose.msra.mxu0 0
      %2778 = vmatprep.subr.bf16.mxu0 0
      %2779 = vmatpush2.bf16.xpose.msra.mxu0 0
      %2780 = vmatprep.subr.bf16.mxu0 0
      %2781 = vmatpush2.bf16.xpose.msra.mxu0 0
      %2782 = vmatprep.subr.bf16.mxu0 0
      %2783 = vmatpush2.bf16.xpose.msra.mxu0 0
      %2784 = vmatprep.mubr.bf16.mxu0 0
      %2785 = vmatmul.mubr.bf16.gmra.mxu0 %v2747
      %v2786 = vpop.f32.mrf.mxu0
      %v2787 = vadd.f32 0.0, %v2786
      %v2788 = vpop.f32.mrf.mxu0
      %v2789 = vpop.f32.mrf.mxu0
      %v2790 = vpop.f32.mrf.mxu0
      %2791 = vdwg.mxu0
      %v2792 = vmul.f32 %v2737, 0.35355338
      %v2793 = vmul.f32 %v2787, 0.35355338
      %v2794 = vsel %vm466, %v2792, -inf
      %2795 = vmax.xlane.f32.xlu0 %v2794
      %v2796 = vpop.xlane.xlu0 %2795
      %v2797 = vsel %vm466, %v2793, -inf
      %2798 = vmax.xlane.f32.xlu0 %v2797
      %v2799 = vpop.xlane.xlu0 %2798
      %v2800 = vsub.f32 %v2792, %v2796
      %v2801 = vsub.f32 %v2793, %v2799
      %v2802 = vmul.f32 %v2800, 1.442695
      %v2803 = vpow.pop %v2802
      %v2804 = vmul.f32 %v2801, 1.442695
      %v2805 = vpow.pop %v2804
      %v2806 = vsel %vm466, %v2803, 0.0
      %2807 = vadd.xlane.f32.xlu0 %v2806
      %v2808 = vpop.xlane.xlu0 %2807
      %v2809 = vsel %vm466, %v2805, 0.0
      %2810 = vadd.xlane.f32.xlu0 %v2809
      %v2811 = vpop.xlane.xlu0 %2810
      %v2812 = vrcp.pop %v2808
      %v2813 = vrcp.pop %v2811
      %v2814 = vmul.f32 %v2803, %v2812
      %v2815 = vmul.f32 %v2805, %v2813
      %v2816 = vpack.c.bf16 %v2814, %v2814
      %v2817 = vpack.c.bf16 %v2815, %v2815
      %2818 = vrot.lane.b32.xlu0 %v1874, 40
      %v2819 = vpop.permute.xlu0 %2818
      %v2821 = vsel %vm466, %v2816, 0
      %v2824 = vsel %vm593, %v2819, 0
      %2826 = vmatprep.subr.bf16.mxu0 0
      %2827 = vmatpush1.bf16.msra.mxu0 0
      %2828 = vmatprep.subr.bf16.mxu0 0
      %2829 = vmatpush1.bf16.msra.mxu0 0
      %2830 = vmatprep.subr.bf16.mxu0 0
      %2831 = vmatpush1.bf16.msra.mxu0 0
      %2832 = vmatprep.subr.bf16.mxu0 0
      %2833 = vmatpush1.bf16.msra.mxu0 0
      %2834 = vmatprep.subr.bf16.mxu0 0
      %2835 = vmatpush1.bf16.msra.mxu0 0
      %2836 = vmatprep.subr.bf16.mxu0 0
      %2837 = vmatpush1.bf16.msra.mxu0 0
      %2838 = vmatprep.subr.bf16.mxu0 0
      %2839 = vmatpush1.bf16.msra.mxu0 0
      %2840 = vmatprep.subr.bf16.mxu0 0
      %2841 = vmatpush1.bf16.msra.mxu0 %v2824
      %2842 = vmatprep.subr.bf16.mxu0 0
      %2843 = vmatpush2.bf16.msra.mxu0 0
      %2844 = vmatprep.subr.bf16.mxu0 0
      %2845 = vmatpush2.bf16.msra.mxu0 0
      %2846 = vmatprep.subr.bf16.mxu0 0
      %2847 = vmatpush2.bf16.msra.mxu0 0
      %2848 = vmatprep.subr.bf16.mxu0 0
      %2849 = vmatpush2.bf16.msra.mxu0 0
      %2850 = vmatprep.subr.bf16.mxu0 0
      %2851 = vmatpush2.bf16.msra.mxu0 0
      %2852 = vmatprep.subr.bf16.mxu0 0
      %2853 = vmatpush2.bf16.msra.mxu0 0
      %2854 = vmatprep.subr.bf16.mxu0 0
      %2855 = vmatpush2.bf16.msra.mxu0 0
      %2856 = vmatprep.subr.bf16.mxu0 0
      %2857 = vmatpush2.bf16.msra.mxu0 0
      %2858 = vmatprep.mubr.bf16.mxu0 0
      %2859 = vmatmul.mubr.bf16.gmra.mxu0 %v2821
      %v2860 = vpop.f32.mrf.mxu0
      %v2861 = vadd.f32 0.0, %v2860
      %v2862 = vpop.f32.mrf.mxu0
      %v2863 = vpop.f32.mrf.mxu0
      %v2864 = vpop.f32.mrf.mxu0
      %2865 = vdwg.mxu0
      %2866 = vrot.lane.b32.xlu0 %v1875, 40
      %v2867 = vpop.permute.xlu0 %2866
      %v2869 = vsel %vm466, %v2817, 0
      %v2872 = vsel %vm593, %v2867, 0
      %2874 = vmatprep.subr.bf16.mxu0 0
      %2875 = vmatpush1.bf16.msra.mxu0 0
      %2876 = vmatprep.subr.bf16.mxu0 0
      %2877 = vmatpush1.bf16.msra.mxu0 0
      %2878 = vmatprep.subr.bf16.mxu0 0
      %2879 = vmatpush1.bf16.msra.mxu0 0
      %2880 = vmatprep.subr.bf16.mxu0 0
      %2881 = vmatpush1.bf16.msra.mxu0 0
      %2882 = vmatprep.subr.bf16.mxu0 0
      %2883 = vmatpush1.bf16.msra.mxu0 0
      %2884 = vmatprep.subr.bf16.mxu0 0
      %2885 = vmatpush1.bf16.msra.mxu0 0
      %2886 = vmatprep.subr.bf16.mxu0 0
      %2887 = vmatpush1.bf16.msra.mxu0 0
      %2888 = vmatprep.subr.bf16.mxu0 0
      %2889 = vmatpush1.bf16.msra.mxu0 %v2872
      %2890 = vmatprep.subr.bf16.mxu0 0
      %2891 = vmatpush2.bf16.msra.mxu0 0
      %2892 = vmatprep.subr.bf16.mxu0 0
      %2893 = vmatpush2.bf16.msra.mxu0 0
      %2894 = vmatprep.subr.bf16.mxu0 0
      %2895 = vmatpush2.bf16.msra.mxu0 0
      %2896 = vmatprep.subr.bf16.mxu0 0
      %2897 = vmatpush2.bf16.msra.mxu0 0
      %2898 = vmatprep.subr.bf16.mxu0 0
      %2899 = vmatpush2.bf16.msra.mxu0 0
      %2900 = vmatprep.subr.bf16.mxu0 0
      %2901 = vmatpush2.bf16.msra.mxu0 0
      %2902 = vmatprep.subr.bf16.mxu0 0
      %2903 = vmatpush2.bf16.msra.mxu0 0
      %2904 = vmatprep.subr.bf16.mxu0 0
      %2905 = vmatpush2.bf16.msra.mxu0 0
      %2906 = vmatprep.mubr.bf16.mxu0 0
      %2907 = vmatmul.mubr.bf16.gmra.mxu0 %v2869
      %v2908 = vpop.f32.mrf.mxu0
      %v2909 = vadd.f32 0.0, %v2908
      %v2910 = vpop.f32.mrf.mxu0
      %v2911 = vpop.f32.mrf.mxu0
      %v2912 = vpop.f32.mrf.mxu0
      %2913 = vdwg.mxu0
      %v2914 = vpack.c.bf16 %v2909, %v2861
      %v2915 = vunpack.c.h.b16 %v1809
      %v2916 = vpack.c.b16 %v2915, %v2915
      %v2918 = vsel %vm466, %v2914, 0
      %v2921 = vsel %vm593, %v2916, 0
      %2923 = vmatprep.subr.bf16.mxu0 0
      %2924 = vmatpush1.bf16.msra.mxu0 0
      %2925 = vmatprep.subr.bf16.mxu0 0
      %2926 = vmatpush1.bf16.msra.mxu0 0
      %2927 = vmatprep.subr.bf16.mxu0 0
      %2928 = vmatpush1.bf16.msra.mxu0 0
      %2929 = vmatprep.subr.bf16.mxu0 0
      %2930 = vmatpush1.bf16.msra.mxu0 0
      %2931 = vmatprep.subr.bf16.mxu0 0
      %2932 = vmatpush1.bf16.msra.mxu0 0
      %2933 = vmatprep.subr.bf16.mxu0 0
      %2934 = vmatpush1.bf16.msra.mxu0 0
      %2935 = vmatprep.subr.bf16.mxu0 0
      %2936 = vmatpush1.bf16.msra.mxu0 0
      %2937 = vmatprep.subr.bf16.mxu0 0
      %2938 = vmatpush1.bf16.msra.mxu0 %v2921
      %2939 = vmatprep.subr.bf16.mxu0 0
      %2940 = vmatpush2.bf16.msra.mxu0 0
      %2941 = vmatprep.subr.bf16.mxu0 0
      %2942 = vmatpush2.bf16.msra.mxu0 0
      %2943 = vmatprep.subr.bf16.mxu0 0
      %2944 = vmatpush2.bf16.msra.mxu0 0
      %2945 = vmatprep.subr.bf16.mxu0 0
      %2946 = vmatpush2.bf16.msra.mxu0 0
      %2947 = vmatprep.subr.bf16.mxu0 0
      %2948 = vmatpush2.bf16.msra.mxu0 0
      %2949 = vmatprep.subr.bf16.mxu0 0
      %2950 = vmatpush2.bf16.msra.mxu0 0
      %2951 = vmatprep.subr.bf16.mxu0 0
      %2952 = vmatpush2.bf16.msra.mxu0 0
      %2953 = vmatprep.subr.bf16.mxu0 0
      %2954 = vmatpush2.bf16.msra.mxu0 0
      %2955 = vmatprep.mubr.bf16.mxu0 0
      %2956 = vmatmul.mubr.bf16.gmra.mxu0 %v2918
      %v2957 = vpop.f32.mrf.mxu0
      %v2958 = vadd.f32 0.0, %v2957
      %v2959 = vpop.f32.mrf.mxu0
      %v2960 = vpop.f32.mrf.mxu0
      %v2961 = vadd.f32 0.0, %v2960
      %v2962 = vpop.f32.mrf.mxu0
      %2963 = vdwg.mxu0
      %v2964 = vadd.f32 %v2690, %v2958
      %v2965 = vadd.f32 %v2691, %v2961
      %v2966 = vadd.f32 %v1800, %v2964
      %v2967 = vadd.f32 %v1801, %v2965
      %v2968 = vlaneseq
      %v2969 = vshrl.u32 %v2968, 7
      %v2970 = vsub.s32 1, %v2969
      %v2971 = vrot.slane %v1812, %v2970
      %v2972 = vadd.f32 %v2966, %v2971
      %v2973 = vadd.f32 %v2967, %v2971
      %v2974 = vsel %vm351, %v2972, 0.0
      %2975 = vadd.xlane.f32.xlu0 %v2974
      %v2976 = vpop.xlane.xlu0 %2975
      %v2977 = vsel %vm351, %v2973, 0.0
      %2978 = vadd.xlane.f32.xlu0 %v2977
      %v2979 = vpop.xlane.xlu0 %2978
      %v2980 = vmul.f32 %v2976, %v358
      %v2981 = vmul.f32 %v2979, %v358
      %v2982 = vsub.f32 %v2972, %v2980
      %v2983 = vsub.f32 %v2973, %v2981
      %v2984 = vmul.f32 %v2982, %v2982
      %v2985 = vmul.f32 %v2983, %v2983
      %v2986 = vsel %vm351, %v2984, 0.0
      %2987 = vadd.xlane.f32.xlu0 %v2986
      %v2988 = vpop.xlane.xlu0 %2987
      %v2989 = vsel %vm351, %v2985, 0.0
      %2990 = vadd.xlane.f32.xlu0 %v2989
      %v2991 = vpop.xlane.xlu0 %2990
      %v2992 = vmul.f32 %v2988, %v358
      %v2993 = vmul.f32 %v2991, %v358
      %v2994 = vadd.f32 %v2992, 1e-12
      %v2995 = vadd.f32 %v2993, 1e-12
      %v2996 = vrsqrt.pop %v2994
      %v2997 = vrsqrt.pop %v2995
      %v2998 = vmul.f32 %v2982, %v2996
      %v2999 = vmul.f32 %v2983, %v2997
      %v3000 = vlaneseq
      %v3001 = vshrl.u32 %v3000, 7
      %v3002 = vsub.s32 4, %v3001
      %v3003 = vrot.slane %v1812, %v3002
      %v3004 = vmul.f32 %v2998, %v3003
      %v3005 = vmul.f32 %v2999, %v3003
      %v3006 = vlaneseq
      %v3007 = vshrl.u32 %v3006, 7
      %v3008 = vsub.s32 5, %v3007
      %v3009 = vrot.slane %v1812, %v3008
      %v3010 = vadd.f32 %v3004, %v3009
      %v3011 = vadd.f32 %v3005, %v3009
      %v3012 = vpack.c.bf16 %v3011, %v3010
      %v3013 = vlaneseq
      %v3014 = vshrl.u32 %v3013, 7
      %v3015 = vsub.s32 2, %v3014
      %v3016 = vrot.slane %v1812, %v3015
      %v3021 = vunpack.c.l.b16 %v1804
      %v3022 = vunpack.c.l.b16 %v1806
      %v3023 = vunpack.c.l.b16 %v1808
      %v3024 = vunpack.c.l.b16 %v1810
      %v3025 = vpack.c.b16 %v3022, %v3021
      %v3026 = vpack.c.b16 %v3024, %v3023
      %v3030 = vsel %vm351, %v3012, 0
      %3032 = vmatprep.subr.bf16.mxu0 0
      %3033 = vmatpush1.bf16.msra.mxu0 0
      %3034 = vmatprep.subr.bf16.mxu0 0
      %3035 = vmatpush1.bf16.msra.mxu0 0
      %3036 = vmatprep.subr.bf16.mxu0 0
      %3037 = vmatpush1.bf16.msra.mxu0 0
      %3038 = vmatprep.subr.bf16.mxu0 0
      %3039 = vmatpush1.bf16.msra.mxu0 0
      %3040 = vmatprep.subr.bf16.mxu0 0
      %3041 = vmatpush1.bf16.msra.mxu0 0
      %3042 = vmatprep.subr.bf16.mxu0 0
      %3043 = vmatpush1.bf16.msra.mxu0 0
      %3044 = vmatprep.subr.bf16.mxu0 0
      %3045 = vmatpush1.bf16.msra.mxu0 %v3026
      %3046 = vmatprep.subr.bf16.mxu0 0
      %3047 = vmatpush1.bf16.msra.mxu0 %v3025
      %3048 = vmatprep.subr.bf16.mxu0 0
      %3049 = vmatpush2.bf16.msra.mxu0 0
      %3050 = vmatprep.subr.bf16.mxu0 0
      %3051 = vmatpush2.bf16.msra.mxu0 0
      %3052 = vmatprep.subr.bf16.mxu0 0
      %3053 = vmatpush2.bf16.msra.mxu0 0
      %3054 = vmatprep.subr.bf16.mxu0 0
      %3055 = vmatpush2.bf16.msra.mxu0 0
      %3056 = vmatprep.subr.bf16.mxu0 0
      %3057 = vmatpush2.bf16.msra.mxu0 0
      %3058 = vmatprep.subr.bf16.mxu0 0
      %3059 = vmatpush2.bf16.msra.mxu0 0
      %3060 = vmatprep.subr.bf16.mxu0 0
      %3061 = vmatpush2.bf16.msra.mxu0 0
      %3062 = vmatprep.subr.bf16.mxu0 0
      %3063 = vmatpush2.bf16.msra.mxu0 0
      %3064 = vmatprep.mubr.bf16.mxu0 0
      %3065 = vmatmul.mubr.bf16.gmra.mxu0 %v3030
      %v3066 = vpop.f32.mrf.mxu0
      %v3067 = vadd.f32 %v3016, %v3066
      %v3068 = vpop.f32.mrf.mxu0
      %v3069 = vpop.f32.mrf.mxu0
      %v3070 = vadd.f32 %v3016, %v3069
      %v3071 = vpop.f32.mrf.mxu0
      %3072 = vdwg.mxu0
      %v3073 = vmul.f32 %v3067, 0.5
      %v3074 = vmul.f32 %v3070, 0.5
      %v3075 = vmul.f32 %v3067, 0.044715
      %v3076 = vmul.f32 %v3070, 0.044715
      %v3077 = vmul.f32 %v3075, %v3067
      %v3078 = vmul.f32 %v3076, %v3070
      %v3079 = vmul.f32 %v3077, %v3067
      %v3080 = vmul.f32 %v3078, %v3070
      %v3081 = vadd.f32 %v3067, %v3079
      %v3082 = vadd.f32 %v3070, %v3080
      %v3083 = vmul.f32 %v3081, 0.7978846
      %v3084 = vmul.f32 %v3082, 0.7978846
      %v3085 = vtanh.pop %v3083
      %v3086 = vtanh.pop %v3084
      %v3087 = vadd.f32 %v3085, 1.0
      %v3088 = vadd.f32 %v3086, 1.0
      %v3089 = vmul.f32 %v3073, %v3087
      %v3090 = vmul.f32 %v3074, %v3088
      %v3091 = vpack.c.bf16 %v3090, %v3089
      %s3092 = scalar_lea.vmem %s328, 32
      %v3093 = vld [vmem:[%s3092] sm:$0xf]
      %v3094 = vld [vmem:[%s3092 + $0x4] sm:$0xf]
      %v3095 = vld [vmem:[%s3092 + $0x8] sm:$0xf]
      %v3096 = vld [vmem:[%s3092 + $0xc] sm:$0xf]
      %v3097 = vld [vmem:[%s3092 + $0x10] sm:$0xf]
      %v3098 = vld [vmem:[%s3092 + $0x14] sm:$0xf]
      %v3099 = vld [vmem:[%s3092 + $0x18] sm:$0xf]
      %v3100 = vld [vmem:[%s3092 + $0x1c] sm:$0xf]
      %v3101 = vlaneseq
      %v3102 = vshrl.u32 %v3101, 7
      %v3103 = vsub.s32 3, %v3102
      %v3104 = vrot.slane %v1812, %v3103
      %v3113 = vunpack.c.l.b16 %v3093
      %v3114 = vunpack.c.l.b16 %v3094
      %v3115 = vunpack.c.l.b16 %v3095
      %v3116 = vunpack.c.l.b16 %v3096
      %v3117 = vunpack.c.l.b16 %v3097
      %v3118 = vunpack.c.l.b16 %v3098
      %v3119 = vunpack.c.l.b16 %v3099
      %v3120 = vunpack.c.l.b16 %v3100
      %v3121 = vpack.c.b16 %v3114, %v3113
      %v3122 = vpack.c.b16 %v3116, %v3115
      %v3123 = vpack.c.b16 %v3118, %v3117
      %v3124 = vpack.c.b16 %v3120, %v3119
      %v3130 = vsel %vm1717, %v3091, 0
      %3132 = vmatprep.subr.bf16.mxu0 0
      %3133 = vmatpush1.bf16.msra.mxu0 0
      %3134 = vmatprep.subr.bf16.mxu0 0
      %3135 = vmatpush1.bf16.msra.mxu0 0
      %3136 = vmatprep.subr.bf16.mxu0 0
      %3137 = vmatpush1.bf16.msra.mxu0 0
      %3138 = vmatprep.subr.bf16.mxu0 0
      %3139 = vmatpush1.bf16.msra.mxu0 0
      %3140 = vmatprep.subr.bf16.mxu0 0
      %3141 = vmatpush1.bf16.msra.mxu0 %v3124
      %3142 = vmatprep.subr.bf16.mxu0 0
      %3143 = vmatpush1.bf16.msra.mxu0 %v3123
      %3144 = vmatprep.subr.bf16.mxu0 0
      %3145 = vmatpush1.bf16.msra.mxu0 %v3122
      %3146 = vmatprep.subr.bf16.mxu0 0
      %3147 = vmatpush1.bf16.msra.mxu0 %v3121
      %3148 = vmatprep.subr.bf16.mxu0 0
      %3149 = vmatpush2.bf16.msra.mxu0 0
      %3150 = vmatprep.subr.bf16.mxu0 0
      %3151 = vmatpush2.bf16.msra.mxu0 0
      %3152 = vmatprep.subr.bf16.mxu0 0
      %3153 = vmatpush2.bf16.msra.mxu0 0
      %3154 = vmatprep.subr.bf16.mxu0 0
      %3155 = vmatpush2.bf16.msra.mxu0 0
      %3156 = vmatprep.subr.bf16.mxu0 0
      %3157 = vmatpush2.bf16.msra.mxu0 0
      %3158 = vmatprep.subr.bf16.mxu0 0
      %3159 = vmatpush2.bf16.msra.mxu0 0
      %3160 = vmatprep.subr.bf16.mxu0 0
      %3161 = vmatpush2.bf16.msra.mxu0 0
      %3162 = vmatprep.subr.bf16.mxu0 0
      %3163 = vmatpush2.bf16.msra.mxu0 0
      %3164 = vmatprep.mubr.bf16.mxu0 0
      %3165 = vmatmul.mubr.bf16.gmra.mxu0 %v3130
      %v3166 = vpop.f32.mrf.mxu0
      %v3167 = vadd.f32 %v3104, %v3166
      %v3168 = vpop.f32.mrf.mxu0
      %v3169 = vpop.f32.mrf.mxu0
      %v3170 = vadd.f32 %v3104, %v3169
      %v3171 = vpop.f32.mrf.mxu0
      %3172 = vdwg.mxu0
      %v3173 = vadd.f32 %v3010, %v3167
      %v3174 = vadd.f32 %v3011, %v3170
      %v3175 = vsel %vm351, %v3173, 0.0
      %3176 = vadd.xlane.f32.xlu0 %v3175
      %v3177 = vpop.xlane.xlu0 %3176
      %v3178 = vsel %vm351, %v3174, 0.0
      %3179 = vadd.xlane.f32.xlu0 %v3178
      %v3180 = vpop.xlane.xlu0 %3179
      %v3181 = vmul.f32 %v3177, %v358
      %v3182 = vmul.f32 %v3180, %v358
      %v3183 = vsub.f32 %v3173, %v3181
      %v3184 = vsub.f32 %v3174, %v3182
      %v3185 = vmul.f32 %v3183, %v3183
      %v3186 = vmul.f32 %v3184, %v3184
      %v3187 = vsel %vm351, %v3185, 0.0
      %3188 = vadd.xlane.f32.xlu0 %v3187
      %v3189 = vpop.xlane.xlu0 %3188
      %v3190 = vsel %vm351, %v3186, 0.0
      %3191 = vadd.xlane.f32.xlu0 %v3190
      %v3192 = vpop.xlane.xlu0 %3191
      %v3193 = vmul.f32 %v3189, %v358
      %v3194 = vmul.f32 %v3192, %v358
      %v3195 = vadd.f32 %v3193, 1e-12
      %v3196 = vadd.f32 %v3194, 1e-12
      %v3197 = vrsqrt.pop %v3195
      %v3198 = vrsqrt.pop %v3196
      %v3199 = vmul.f32 %v3183, %v3197
      %v3200 = vmul.f32 %v3184, %v3198
      %v3201 = vlaneseq
      %v3202 = vshrl.u32 %v3201, 7
      %v3203 = vsub.s32 6, %v3202
      %v3204 = vrot.slane %v1812, %v3203
      %v3205 = vmul.f32 %v3199, %v3204
      %v3206 = vmul.f32 %v3200, %v3204
      %v3207 = vlaneseq
      %v3208 = vshrl.u32 %v3207, 7
      %v3209 = vsub.s32 7, %v3208
      %v3210 = vrot.slane %v1812, %v3209
      %v3211 = vadd.f32 %v3205, %v3210
      %v3212 = vadd.f32 %v3206, %v3210
      %v3214 = vrot.slane %v3212, 7
      %vm3216 = vcmask 1040384
      %v3217 = vsel %vm3216, %v3211, %v3214
      %vm3218 = vcmask 1041408
      %v3219 = vsel %vm3218, %v3217, 0.0
      %v3220 = vpack.c.bf16 %v3219, %v3219
      %v3221 = vld [vmem:[%s333] sm:$0xf]
      %v3222 = vld [vmem:[%s333 + $0x4] sm:$0xf]
      %v3223 = vld [vmem:[%s333 + $0x8] sm:$0xf]
      %v3224 = vld [vmem:[%s333 + $0xc] sm:$0xf]
      %v3225 = vlaneseq
      %v3226 = vshrl.u32 %v3225, 7
      %v3227 = vsub.s32 2, %v3226
      %v3228 = vrot.slane %v348, %v3227
      %v3233 = vunpack.c.l.b16 %v3221
      %v3234 = vunpack.c.l.b16 %v3222
      %v3235 = vunpack.c.l.b16 %v3223
      %v3236 = vunpack.c.l.b16 %v3224
      %v3237 = vpack.c.b16 %v3234, %v3233
      %v3238 = vpack.c.b16 %v3236, %v3235
      %v3242 = vsel %vm351, %v3220, 0
      %3244 = vmatprep.subr.bf16.mxu0 0
      %3245 = vmatpush1.bf16.msra.mxu0 0
      %3246 = vmatprep.subr.bf16.mxu0 0
      %3247 = vmatpush1.bf16.msra.mxu0 0
      %3248 = vmatprep.subr.bf16.mxu0 0
      %3249 = vmatpush1.bf16.msra.mxu0 0
      %3250 = vmatprep.subr.bf16.mxu0 0
      %3251 = vmatpush1.bf16.msra.mxu0 0
      %3252 = vmatprep.subr.bf16.mxu0 0
      %3253 = vmatpush1.bf16.msra.mxu0 0
      %3254 = vmatprep.subr.bf16.mxu0 0
      %3255 = vmatpush1.bf16.msra.mxu0 0
      %3256 = vmatprep.subr.bf16.mxu0 0
      %3257 = vmatpush1.bf16.msra.mxu0 %v3238
      %3258 = vmatprep.subr.bf16.mxu0 0
      %3259 = vmatpush1.bf16.msra.mxu0 %v3237
      %3260 = vmatprep.subr.bf16.mxu0 0
      %3261 = vmatpush2.bf16.msra.mxu0 0
      %3262 = vmatprep.subr.bf16.mxu0 0
      %3263 = vmatpush2.bf16.msra.mxu0 0
      %3264 = vmatprep.subr.bf16.mxu0 0
      %3265 = vmatpush2.bf16.msra.mxu0 0
      %3266 = vmatprep.subr.bf16.mxu0 0
      %3267 = vmatpush2.bf16.msra.mxu0 0
      %3268 = vmatprep.subr.bf16.mxu0 0
      %3269 = vmatpush2.bf16.msra.mxu0 0
      %3270 = vmatprep.subr.bf16.mxu0 0
      %3271 = vmatpush2.bf16.msra.mxu0 0
      %3272 = vmatprep.subr.bf16.mxu0 0
      %3273 = vmatpush2.bf16.msra.mxu0 0
      %3274 = vmatprep.subr.bf16.mxu0 0
      %3275 = vmatpush2.bf16.msra.mxu0 0
      %3276 = vmatprep.mubr.bf16.mxu0 0
      %3277 = vmatmul.mubr.bf16.gmra.mxu0 %v3242
      %v3278 = vpop.f32.mrf.mxu0
      %v3279 = vadd.f32 %v3228, %v3278
      %v3280 = vpop.f32.mrf.mxu0
      %v3281 = vpop.f32.mrf.mxu0
      %v3282 = vpop.f32.mrf.mxu0
      %3283 = vdwg.mxu0
      %3284 = vst [vmem:[%s346] sm:$0xff] %v3279
      %p3285 = scmp.lt.s32.totalorder %s17, 1
      %s3286 = scalar_select %p3285, %s17, 1
      %s3287 = smul.addr %s3286, 8
      %s3288 = scalar_lea.vmem %s6, %s3287
      // Predicated region
      $region45: #{semges_dis_forward.1} parent=43 // pred_check
        %p3289 = pneg %p191
      $region46: #{semges_dis_forward.1} parent=43 // pred_check_branch
        %3291 = sbr.rel (%p3289) target = $region48
      $region47: #{semges_dis_forward.1} parent=43 // pred_region
        _
      $region48: #{semges_dis_forward.1} parent=43 // pred_fallthru
        _
    $region44: #{semges_dis_forward.1} parent=5 // pred_fallthru
      _
    %p3292 = scmp.le.s32.totalorder 2, %s12
    // Predicated region
    $region49: #{semges_dis_forward.1} parent=5 // pred_check
      %p3293 = pneg %p3292
    $region50: #{semges_dis_forward.1} parent=5 // pred_check_branch
      %3295 = sbr.rel (%p3293) target = $region52
    $region51: #{semges_dis_forward.1} parent=5 // pred_region
      %s3296 = ssub.s32 %s12, 2
      // Predicated region
      $region53: #{semges_dis_forward.1} parent=51 // pred_check
        %p3297 = pneg %p197
      $region54: #{semges_dis_forward.1} parent=51 // pred_check_branch
        %3299 = sbr.rel (%p3297) target = $region56
      $region55: #{semges_dis_forward.1} parent=51 // pred_region
        %p3300 = scmp.lt.s32.totalorder %s18, 1
        %s3301 = scalar_select %p3300, %s18, 1
        %s3302 = smul.addr %s3301, 8
        %s3303 = scalar_lea.vmem %s6, %s3302
      $region56: #{semges_dis_forward.1} parent=51 // pred_fallthru
        _
    $region52: #{semges_dis_forward.1} parent=5 // pred_fallthru
      _
  $region6: #{semges_dis_forward.1} parent=0 // loop_footer
    %s16 = sadd.s32 1, %s12
  $region7: #{semges_dis_forward.1} parent=0 // loop_footer_branch
    %11 = sbr.rel target = $region3
  $region8: #{semges_dis_forward.1} parent=0 // loop_exit
    _

</llo_original>
